<compile_context>
chip_gen: v5e
topology: v5e:2x2
jax: 0.10.0
libtpu: 0.0.40
codegen_flags: <defaults>
</compile_context>

<pallas_src>
import jax
import jax.numpy as jnp
from jax.experimental import pallas as pl
from jax.experimental.pallas import tpu as pltpu


# ----------------------------------------------------------------------------
# Kernels
# ----------------------------------------------------------------------------
def _gcn_layer_kernel(a_ref, h_ref, w_ref, b_ref, o_ref, acc_ref):
    """One GCN layer tile: acc += A_tile @ H_tile; epilogue = relu(acc@W + b)."""
    k = pl.program_id(1)

    @pl.when(k == 0)
    def _init():
        acc_ref[...] = jnp.zeros_like(acc_ref)

    # Aggregation (dominant term): bf16 operands, f32 accumulation on the MXU.
    acc_ref[...] += jnp.dot(a_ref[...], h_ref[...],
                            preferred_element_type=jnp.float32)

    @pl.when(k == pl.num_programs(1) - 1)
    def _epilogue():
        z = jnp.dot(acc_ref[...].astype(jnp.bfloat16), w_ref[...],
                    preferred_element_type=jnp.float32) + b_ref[...]
        o_ref[...] = jnp.maximum(z, 0.0).astype(o_ref.dtype)


def _gcn_layer_head_kernel(a_ref, h_ref, w_ref, b_ref, wl_ref, bl_ref,
                           o_ref, acc_ref):
    """Last GCN layer with the linear prediction head fused into the epilogue."""
    k = pl.program_id(1)

    @pl.when(k == 0)
    def _init():
        acc_ref[...] = jnp.zeros_like(acc_ref)

    acc_ref[...] += jnp.dot(a_ref[...], h_ref[...],
                            preferred_element_type=jnp.float32)

    @pl.when(k == pl.num_programs(1) - 1)
    def _epilogue():
        z = jnp.dot(acc_ref[...].astype(jnp.bfloat16), w_ref[...],
                    preferred_element_type=jnp.float32) + b_ref[...]
        z = jnp.maximum(z, 0.0)                       # ReLU in f32
        o_ref[...] = (jnp.dot(z.astype(jnp.bfloat16), wl_ref[...],
                              preferred_element_type=jnp.float32)
                      + bl_ref[...]).astype(o_ref.dtype)


# ----------------------------------------------------------------------------
# Wrappers
# ----------------------------------------------------------------------------
def _round_up(x, m):
    return (x + m - 1) // m * m


def _pad2(v, rows, cols):
    return jnp.pad(v, ((0, rows - v.shape[0]), (0, cols - v.shape[1])))


def _pick_tile(n_p):
    """Largest row/col tile that keeps at least 2 grid steps (n_p % 128 == 0)."""
    for t in (512, 256, 128):
        if n_p % t == 0 and n_p // t >= 2:
            return t
    return min(n_p, 128)


def _gcn_layer(a16, h16, w16, b_f32, wl16=None, bl_f32=None,
               *, tile, out_dtype):
    n_p = a16.shape[0]
    f_p = h16.shape[1]
    g_p = w16.shape[1]
    fused_head = wl16 is not None
    o_p = wl16.shape[1] if fused_head else g_p
    grid = (n_p // tile, n_p // tile)          # (row tiles, reduction tiles)

    in_specs = [
        pl.BlockSpec((tile, tile), lambda i, k: (i, k)),   # A_hat tile
        pl.BlockSpec((tile, f_p), lambda i, k: (k, 0)),    # H rows for step k
        pl.BlockSpec((f_p, g_p), lambda i, k: (0, 0)),     # W      (resident)
        pl.BlockSpec((1, g_p), lambda i, k: (0, 0)),       # bias   (resident)
    ]
    operands = [a16, h16, w16, b_f32]
    if fused_head:
        in_specs += [
            pl.BlockSpec((g_p, o_p), lambda i, k: (0, 0)), # W_lin  (resident)
            pl.BlockSpec((1, o_p), lambda i, k: (0, 0)),   # b_lin  (resident)
        ]
        operands += [wl16, bl_f32]
        kernel = _gcn_layer_head_kernel
    else:
        kernel = _gcn_layer_kernel

    out_bytes = 2 if out_dtype == jnp.bfloat16 else 4
    flops = 2 * n_p * n_p * f_p + 2 * n_p * f_p * g_p
    bytes_accessed = (a16.size * 2 + (n_p // tile) * h16.size * 2
                      + w16.size * 2 + b_f32.size * 4 + n_p * o_p * out_bytes)
    if fused_head:
        flops += 2 * n_p * g_p * o_p
        bytes_accessed += wl16.size * 2 + bl_f32.size * 4

    return pl.pallas_call(
        kernel,
        out_shape=jax.ShapeDtypeStruct((n_p, o_p), out_dtype),
        grid_spec=pltpu.PrefetchScalarGridSpec(
            num_scalar_prefetch=0,
            grid=grid,
            in_specs=in_specs,
            out_specs=pl.BlockSpec((tile, o_p), lambda i, k: (i, 0)),
            scratch_shapes=[pltpu.VMEM((tile, f_p), jnp.float32)],
        ),
        compiler_params=pltpu.CompilerParams(
            dimension_semantics=("parallel", "arbitrary"),
            vmem_limit_bytes=32 * 1024 * 1024,
        ),
        cost_estimate=pl.CostEstimate(
            flops=int(flops), transcendentals=0,
            bytes_accessed=int(bytes_accessed)),
    )(*operands)


def gnn_forward(a_hat, x, w1, b1, w2, b2, wl, bl):
    """Fused 2-layer GCN + linear head.  All matmuls run in Pallas."""
    n = x.shape[0]
    out_dim = wl.shape[1]
    lane = 128

    n_p = _round_up(n, lane)
    fin_p = _round_up(x.shape[1], lane)
    hid_p = _round_up(w1.shape[1], lane)
    out_p = _round_up(out_dim, lane)

    # Pad to lane-dense shapes; MXU operands in bf16, biases stay f32.
    a_p = _pad2(a_hat, n_p, n_p).astype(jnp.bfloat16)
    x_p = _pad2(x, n_p, fin_p).astype(jnp.bfloat16)
    w1_p = _pad2(w1, fin_p, hid_p).astype(jnp.bfloat16)
    b1_p = _pad2(b1, 1, hid_p).astype(jnp.float32)
    w2_p = _pad2(w2, hid_p, hid_p).astype(jnp.bfloat16)
    b2_p = _pad2(b2, 1, hid_p).astype(jnp.float32)
    wl_p = _pad2(wl, hid_p, out_p).astype(jnp.bfloat16)
    bl_p = _pad2(bl, 1, out_p).astype(jnp.float32)

    tile = _pick_tile(n_p)

    # Layer 1: relu((A_hat @ X) @ W1 + b1), stored bf16 (halves HBM traffic).
    h1 = _gcn_layer(a_p, x_p, w1_p, b1_p, tile=tile, out_dtype=jnp.bfloat16)
    # Layer 2 + fused prediction head, f32 lane-dense output slab.
    out = _gcn_layer(a_p, h1, w2_p, b2_p, wl16=wl_p, bl_f32=bl_p,
                     tile=tile, out_dtype=jnp.float32)
    # normalize == 'none' -> no BatchNorm; dropout p == 0.0 -> identity.
    return out[:n, :out_dim]


# ----------------------------------------------------------------------------
# Glue (plain JAX) + reference
# ----------------------------------------------------------------------------
def gcn_norm_dense(edge_index, num_nodes):
    """Dense D^{-1/2} (A + I) D^{-1/2}  (scatter glue, plain JAX)."""
    src, dst = edge_index[0], edge_index[1]
    adj = jnp.zeros((num_nodes, num_nodes), jnp.float32)
    adj = adj.at[dst, src].set(1.0)                       # message src -> dst
    adj = adj + jnp.eye(num_nodes, dtype=jnp.float32)     # self loops
    deg = adj.sum(axis=1)
    dinv = jnp.where(deg > 0, 1.0 / jnp.sqrt(deg), 0.0)
    return dinv[:, None] * adj * dinv[None, :]


def reference_forward(a_hat, x, w1, b1, w2, b2, wl, bl):
    """Mirrors the kernel's bf16-operand / f32-accumulate precision choices."""
    q = lambda v: v.astype(jnp.bfloat16).astype(jnp.float32)
    a_q = q(a_hat)
    agg1 = a_q @ q(x)
    h1 = jnp.maximum(q(agg1) @ q(w1) + b1, 0.0)
    agg2 = a_q @ q(h1)
    z2 = jnp.maximum(q(agg2) @ q(w2) + b2, 0.0)
    return q(z2) @ q(wl) + bl


# ----------------------------------------------------------------------------
# Driver
# ----------------------------------------------------------------------------
if __name__ == "__main__":
    # Small shapes consistent with the module: N nodes, input -> hidden -> out.
    N, INPUT_DIM, HIDDEN_DIM, OUTPUT_DIM, NUM_LAYERS = 500, 16, 32, 4, 2
    assert NUM_LAYERS == 2  # kernel chain is fused for 2 GCN layers + head

    key = jax.random.PRNGKey(0)
    kx, ke, k1, k2, k3, k4, k5, k6 = jax.random.split(key, 8)

    # node features
    x = jax.random.normal(kx, (N, INPUT_DIM), jnp.float32)

    # deterministic ring + random edges
    ring_src = jnp.arange(N)
    ring_dst = (jnp.arange(N) + 1) % N
    rand_src = jax.random.randint(ke, (2 * N,), 0, N)
    rand_dst = (rand_src + 7) % N
    edge_index = jnp.stack(
        [jnp.concatenate([ring_src, rand_src]),
         jnp.concatenate([ring_dst, rand_dst])], axis=0)

    a_hat = gcn_norm_dense(edge_index, N)

    # deterministic synthetic parameters (shapes follow the module __init__)
    w1 = jax.random.normal(k1, (INPUT_DIM, HIDDEN_DIM), jnp.float32) * 0.1
    b1 = jax.random.normal(k2, (1, HIDDEN_DIM), jnp.float32) * 0.01
    w2 = jax.random.normal(k3, (HIDDEN_DIM, HIDDEN_DIM), jnp.float32) * 0.1
    b2 = jax.random.normal(k4, (1, HIDDEN_DIM), jnp.float32) * 0.01
    wl = jax.random.normal(k5, (HIDDEN_DIM, OUTPUT_DIM), jnp.float32) * 0.1
    bl = jax.random.normal(k6, (1, OUTPUT_DIM), jnp.float32) * 0.01

    fwd = jax.jit(gnn_forward)
    out = jax.block_until_ready(fwd(a_hat, x, w1, b1, w2, b2, wl, bl))

    ref = reference_forward(a_hat, x, w1, b1, w2, b2, wl, bl)
    assert out.shape == (N, OUTPUT_DIM)
    assert jnp.allclose(out, ref, atol=2e-3, rtol=2e-3), (
        float(jnp.max(jnp.abs(out - ref))))

    print("KERNEL_OK")
</pallas_src>

<mosaic_0001>
module attributes {stable_mosaic.version = 11 : i64} {
  func.func @_gcn_layer_kernel(%arg0: i32, %arg1: i32, %arg2: memref<256x256xbf16, #tpu.memory_space<vmem>>, %arg3: memref<256x128xbf16, #tpu.memory_space<vmem>>, %arg4: memref<128x128xbf16, #tpu.memory_space<vmem>>, %arg5: memref<1x128xf32, #tpu.memory_space<vmem>>, %arg6: memref<256x128xbf16, #tpu.memory_space<vmem>>, %arg7: memref<256x128xf32, #tpu.memory_space<vmem>>) attributes {dimension_semantics = [#tpu.dimension_semantics<parallel>, #tpu.dimension_semantics<arbitrary>], iteration_bounds = array<i64: 2, 2>, scalar_prefetch = 0 : i64, scratch_operands = 1 : i64, tpu.core_type = #tpu.core_type<tc>, window_params = [{transform_indices = @transform_0, window_bounds = array<i64: 256, 256>}, {transform_indices = @transform_1, window_bounds = array<i64: 256, 128>}, {pipeline_mode = #tpu.pipeline_mode<synchronous>, transform_indices = @transform_2, window_bounds = array<i64: 128, 128>}, {pipeline_mode = #tpu.pipeline_mode<synchronous>, transform_indices = @transform_3, window_bounds = array<i64: 1, 128>}, {transform_indices = @transform_4, window_bounds = array<i64: 256, 128>}]} {
    %c0_i32 = arith.constant 0 : i32
    %0 = arith.cmpi eq, %arg1, %c0_i32 : i32
    %1 = arith.extui %0 : i1 to i32
    %c0_i32_0 = arith.constant 0 : i32
    %2 = arith.cmpi ne, %1, %c0_i32_0 : i32
    scf.if %2 {
      %cst_9 = arith.constant 0.000000e+00 : f32
      %12 = vector.broadcast %cst_9 : f32 to vector<256x128xf32>
      %c0_10 = arith.constant 0 : index
      %c0_11 = arith.constant 0 : index
      %13 = vector.load %arg7[%c0_10, %c0_11] : memref<256x128xf32, #tpu.memory_space<vmem>>, vector<256x128xf32>
      tpu.vector_store %arg7[%c0_10, %c0_11], %12 {strides = array<i32>} : memref<256x128xf32, #tpu.memory_space<vmem>>, vector<256x128xf32>,
    } else {
    }
    %c0 = arith.constant 0 : index
    %c0_1 = arith.constant 0 : index
    %3 = vector.load %arg7[%c0, %c0_1] : memref<256x128xf32, #tpu.memory_space<vmem>>, vector<256x128xf32>
    %c0_2 = arith.constant 0 : index
    %c0_3 = arith.constant 0 : index
    %4 = vector.load %arg2[%c0_2, %c0_3] : memref<256x256xbf16, #tpu.memory_space<vmem>>, vector<256x256xbf16>
    %c0_4 = arith.constant 0 : index
    %c0_5 = arith.constant 0 : index
    %5 = vector.load %arg3[%c0_4, %c0_5] : memref<256x128xbf16, #tpu.memory_space<vmem>>, vector<256x128xbf16>
    %cst = arith.constant dense<0.000000e+00> : vector<256x128xf32>
    %6 = tpu.matmul %4, %5, %cst {dimension_numbers = #tpu.dot_dimension_numbers<[1], [0], [0], [1], [0, 0, 1, 1], [], []>} : vector<256x256xbf16>, vector<256x128xbf16>, vector<256x128xf32> -> vector<256x128xf32>
    %7 = arith.addf %3, %6 : vector<256x128xf32>
    %c0_6 = arith.constant 0 : index
    %c0_7 = arith.constant 0 : index
    %8 = vector.load %arg7[%c0_6, %c0_7] : memref<256x128xf32, #tpu.memory_space<vmem>>, vector<256x128xf32>
    tpu.vector_store %arg7[%c0_6, %c0_7], %7 {strides = array<i32>} : memref<256x128xf32, #tpu.memory_space<vmem>>, vector<256x128xf32>,
    %c1_i32 = arith.constant 1 : i32
    %9 = arith.cmpi eq, %arg1, %c1_i32 : i32
    %10 = arith.extui %9 : i1 to i32
    %c0_i32_8 = arith.constant 0 : i32
    %11 = arith.cmpi ne, %10, %c0_i32_8 : i32
    scf.if %11 {
      %c0_9 = arith.constant 0 : index
      %c0_10 = arith.constant 0 : index
      %12 = vector.load %arg7[%c0_9, %c0_10] : memref<256x128xf32, #tpu.memory_space<vmem>>, vector<256x128xf32>
      %13 = arith.truncf %12 : vector<256x128xf32> to vector<256x128xbf16>
      %c0_11 = arith.constant 0 : index
      %c0_12 = arith.constant 0 : index
      %14 = vector.load %arg4[%c0_11, %c0_12] : memref<128x128xbf16, #tpu.memory_space<vmem>>, vector<128x128xbf16>
      %cst_13 = arith.constant dense<0.000000e+00> : vector<256x128xf32>
      %15 = tpu.matmul %13, %14, %cst_13 {dimension_numbers = #tpu.dot_dimension_numbers<[1], [0], [0], [1], [0, 0, 1, 1], [], []>} : vector<256x128xbf16>, vector<128x128xbf16>, vector<256x128xf32> -> vector<256x128xf32>
      %c0_14 = arith.constant 0 : index
      %c0_15 = arith.constant 0 : index
      %16 = vector.load %arg5[%c0_14, %c0_15] : memref<1x128xf32, #tpu.memory_space<vmem>>, vector<1x128xf32>
      %17 = vector.broadcast %16 : vector<1x128xf32> to vector<256x128xf32>
      %18 = arith.addf %15, %17 : vector<256x128xf32>
      %cst_16 = arith.constant 0.000000e+00 : f32
      %19 = vector.broadcast %cst_16 : f32 to vector<256x128xf32>
      %20 = arith.maximumf %18, %19 : vector<256x128xf32>
      %21 = arith.truncf %20 : vector<256x128xf32> to vector<256x128xbf16>
      %c0_17 = arith.constant 0 : index
      %c0_18 = arith.constant 0 : index
      %22 = vector.load %arg6[%c0_17, %c0_18] : memref<256x128xbf16, #tpu.memory_space<vmem>>, vector<256x128xbf16>
      tpu.vector_store %arg6[%c0_17, %c0_18], %21 {strides = array<i32>} : memref<256x128xbf16, #tpu.memory_space<vmem>>, vector<256x128xbf16>,
    } else {
    }
    return
  }
  func.func @transform_0(%arg0: i32, %arg1: i32) -> (i32, i32) {
    %c0_i32 = arith.constant 0 : i32
    return %arg0, %arg1 : i32, i32
  }
  func.func @transform_1(%arg0: i32, %arg1: i32) -> (i32, i32) {
    %c0_i32 = arith.constant 0 : i32
    %c0_i32_0 = arith.constant 0 : i32
    return %arg1, %c0_i32 : i32, i32
  }
  func.func @transform_2(%arg0: i32, %arg1: i32) -> (i32, i32) {
    %c0_i32 = arith.constant 0 : i32
    %c0_i32_0 = arith.constant 0 : i32
    %c0_i32_1 = arith.constant 0 : i32
    return %c0_i32, %c0_i32_0 : i32, i32
  }
  func.func @transform_3(%arg0: i32, %arg1: i32) -> (i32, i32) {
    %c0_i32 = arith.constant 0 : i32
    %c0_i32_0 = arith.constant 0 : i32
    %c0_i32_1 = arith.constant 0 : i32
    return %c0_i32, %c0_i32_0 : i32, i32
  }
  func.func @transform_4(%arg0: i32, %arg1: i32) -> (i32, i32) {
    %c0_i32 = arith.constant 0 : i32
    %c0_i32_0 = arith.constant 0 : i32
    return %arg0, %c0_i32 : i32, i32
  }
}

module attributes {stable_mosaic.version = 11 : i64} {
  func.func @_gcn_layer_head_kernel(%arg0: i32, %arg1: i32, %arg2: memref<256x256xbf16, #tpu.memory_space<vmem>>, %arg3: memref<256x128xbf16, #tpu.memory_space<vmem>>, %arg4: memref<128x128xbf16, #tpu.memory_space<vmem>>, %arg5: memref<1x128xf32, #tpu.memory_space<vmem>>, %arg6: memref<128x128xbf16, #tpu.memory_space<vmem>>, %arg7: memref<1x128xf32, #tpu.memory_space<vmem>>, %arg8: memref<256x128xf32, #tpu.memory_space<vmem>>, %arg9: memref<256x128xf32, #tpu.memory_space<vmem>>) attributes {dimension_semantics = [#tpu.dimension_semantics<parallel>, #tpu.dimension_semantics<arbitrary>], iteration_bounds = array<i64: 2, 2>, scalar_prefetch = 0 : i64, scratch_operands = 1 : i64, tpu.core_type = #tpu.core_type<tc>, window_params = [{transform_indices = @transform_0, window_bounds = array<i64: 256, 256>}, {transform_indices = @transform_1, window_bounds = array<i64: 256, 128>}, {pipeline_mode = #tpu.pipeline_mode<synchronous>, transform_indices = @transform_2, window_bounds = array<i64: 128, 128>}, {pipeline_mode = #tpu.pipeline_mode<synchronous>, transform_indices = @transform_3, window_bounds = array<i64: 1, 128>}, {pipeline_mode = #tpu.pipeline_mode<synchronous>, transform_indices = @transform_4, window_bounds = array<i64: 128, 128>}, {pipeline_mode = #tpu.pipeline_mode<synchronous>, transform_indices = @transform_5, window_bounds = array<i64: 1, 128>}, {transform_indices = @transform_6, window_bounds = array<i64: 256, 128>}]} {
    %c0_i32 = arith.constant 0 : i32
    %0 = arith.cmpi eq, %arg1, %c0_i32 : i32
    %1 = arith.extui %0 : i1 to i32
    %c0_i32_0 = arith.constant 0 : i32
    %2 = arith.cmpi ne, %1, %c0_i32_0 : i32
    scf.if %2 {
      %cst_9 = arith.constant 0.000000e+00 : f32
      %12 = vector.broadcast %cst_9 : f32 to vector<256x128xf32>
      %c0_10 = arith.constant 0 : index
      %c0_11 = arith.constant 0 : index
      %13 = vector.load %arg9[%c0_10, %c0_11] : memref<256x128xf32, #tpu.memory_space<vmem>>, vector<256x128xf32>
      tpu.vector_store %arg9[%c0_10, %c0_11], %12 {strides = array<i32>} : memref<256x128xf32, #tpu.memory_space<vmem>>, vector<256x128xf32>,
    } else {
    }
    %c0 = arith.constant 0 : index
    %c0_1 = arith.constant 0 : index
    %3 = vector.load %arg9[%c0, %c0_1] : memref<256x128xf32, #tpu.memory_space<vmem>>, vector<256x128xf32>
    %c0_2 = arith.constant 0 : index
    %c0_3 = arith.constant 0 : index
    %4 = vector.load %arg2[%c0_2, %c0_3] : memref<256x256xbf16, #tpu.memory_space<vmem>>, vector<256x256xbf16>
    %c0_4 = arith.constant 0 : index
    %c0_5 = arith.constant 0 : index
    %5 = vector.load %arg3[%c0_4, %c0_5] : memref<256x128xbf16, #tpu.memory_space<vmem>>, vector<256x128xbf16>
    %cst = arith.constant dense<0.000000e+00> : vector<256x128xf32>
    %6 = tpu.matmul %4, %5, %cst {dimension_numbers = #tpu.dot_dimension_numbers<[1], [0], [0], [1], [0, 0, 1, 1], [], []>} : vector<256x256xbf16>, vector<256x128xbf16>, vector<256x128xf32> -> vector<256x128xf32>
    %7 = arith.addf %3, %6 : vector<256x128xf32>
    %c0_6 = arith.constant 0 : index
    %c0_7 = arith.constant 0 : index
    %8 = vector.load %arg9[%c0_6, %c0_7] : memref<256x128xf32, #tpu.memory_space<vmem>>, vector<256x128xf32>
    tpu.vector_store %arg9[%c0_6, %c0_7], %7 {strides = array<i32>} : memref<256x128xf32, #tpu.memory_space<vmem>>, vector<256x128xf32>,
    %c1_i32 = arith.constant 1 : i32
    %9 = arith.cmpi eq, %arg1, %c1_i32 : i32
    %10 = arith.extui %9 : i1 to i32
    %c0_i32_8 = arith.constant 0 : i32
    %11 = arith.cmpi ne, %10, %c0_i32_8 : i32
    scf.if %11 {
      %c0_9 = arith.constant 0 : index
      %c0_10 = arith.constant 0 : index
      %12 = vector.load %arg9[%c0_9, %c0_10] : memref<256x128xf32, #tpu.memory_space<vmem>>, vector<256x128xf32>
      %13 = arith.truncf %12 : vector<256x128xf32> to vector<256x128xbf16>
      %c0_11 = arith.constant 0 : index
      %c0_12 = arith.constant 0 : index
      %14 = vector.load %arg4[%c0_11, %c0_12] : memref<128x128xbf16, #tpu.memory_space<vmem>>, vector<128x128xbf16>
      %cst_13 = arith.constant dense<0.000000e+00> : vector<256x128xf32>
      %15 = tpu.matmul %13, %14, %cst_13 {dimension_numbers = #tpu.dot_dimension_numbers<[1], [0], [0], [1], [0, 0, 1, 1], [], []>} : vector<256x128xbf16>, vector<128x128xbf16>, vector<256x128xf32> -> vector<256x128xf32>
      %c0_14 = arith.constant 0 : index
      %c0_15 = arith.constant 0 : index
      %16 = vector.load %arg5[%c0_14, %c0_15] : memref<1x128xf32, #tpu.memory_space<vmem>>, vector<1x128xf32>
      %17 = vector.broadcast %16 : vector<1x128xf32> to vector<256x128xf32>
      %18 = arith.addf %15, %17 : vector<256x128xf32>
      %cst_16 = arith.constant 0.000000e+00 : f32
      %19 = vector.broadcast %cst_16 : f32 to vector<256x128xf32>
      %20 = arith.maximumf %18, %19 : vector<256x128xf32>
      %21 = arith.truncf %20 : vector<256x128xf32> to vector<256x128xbf16>
      %c0_17 = arith.constant 0 : index
      %c0_18 = arith.constant 0 : index
      %22 = vector.load %arg6[%c0_17, %c0_18] : memref<128x128xbf16, #tpu.memory_space<vmem>>, vector<128x128xbf16>
      %cst_19 = arith.constant dense<0.000000e+00> : vector<256x128xf32>
      %23 = tpu.matmul %21, %22, %cst_19 {dimension_numbers = #tpu.dot_dimension_numbers<[1], [0], [0], [1], [0, 0, 1, 1], [], []>} : vector<256x128xbf16>, vector<128x128xbf16>, vector<256x128xf32> -> vector<256x128xf32>
      %c0_20 = arith.constant 0 : index
      %c0_21 = arith.constant 0 : index
      %24 = vector.load %arg7[%c0_20, %c0_21] : memref<1x128xf32, #tpu.memory_space<vmem>>, vector<1x128xf32>
      %25 = vector.broadcast %24 : vector<1x128xf32> to vector<256x128xf32>
      %26 = arith.addf %23, %25 : vector<256x128xf32>
      %c0_22 = arith.constant 0 : index
      %c0_23 = arith.constant 0 : index
      %27 = vector.load %arg8[%c0_22, %c0_23] : memref<256x128xf32, #tpu.memory_space<vmem>>, vector<256x128xf32>
      tpu.vector_store %arg8[%c0_22, %c0_23], %26 {strides = array<i32>} : memref<256x128xf32, #tpu.memory_space<vmem>>, vector<256x128xf32>,
    } else {
    }
    return
  }
  func.func @transform_0(%arg0: i32, %arg1: i32) -> (i32, i32) {
    %c0_i32 = arith.constant 0 : i32
    return %arg0, %arg1 : i32, i32
  }
  func.func @transform_1(%arg0: i32, %arg1: i32) -> (i32, i32) {
    %c0_i32 = arith.constant 0 : i32
    %c0_i32_0 = arith.constant 0 : i32
    return %arg1, %c0_i32 : i32, i32
  }
  func.func @transform_2(%arg0: i32, %arg1: i32) -> (i32, i32) {
    %c0_i32 = arith.constant 0 : i32
    %c0_i32_0 = arith.constant 0 : i32
    %c0_i32_1 = arith.constant 0 : i32
    return %c0_i32, %c0_i32_0 : i32, i32
  }
  func.func @transform_3(%arg0: i32, %arg1: i32) -> (i32, i32) {
    %c0_i32 = arith.constant 0 : i32
    %c0_i32_0 = arith.constant 0 : i32
    %c0_i32_1 = arith.constant 0 : i32
    return %c0_i32, %c0_i32_0 : i32, i32
  }
  func.func @transform_4(%arg0: i32, %arg1: i32) -> (i32, i32) {
    %c0_i32 = arith.constant 0 : i32
    %c0_i32_0 = arith.constant 0 : i32
    %c0_i32_1 = arith.constant 0 : i32
    return %c0_i32, %c0_i32_0 : i32, i32
  }
  func.func @transform_5(%arg0: i32, %arg1: i32) -> (i32, i32) {
    %c0_i32 = arith.constant 0 : i32
    %c0_i32_0 = arith.constant 0 : i32
    %c0_i32_1 = arith.constant 0 : i32
    return %c0_i32, %c0_i32_0 : i32, i32
  }
  func.func @transform_6(%arg0: i32, %arg1: i32) -> (i32, i32) {
    %c0_i32 = arith.constant 0 : i32
    %c0_i32_0 = arith.constant 0 : i32
    return %arg0, %c0_i32 : i32, i32
  }
}

</mosaic_0001>

<llo_original>
// kernel: gnn_forward.2
$region0: #{gnn_forward.2}
  #allocation0 [shape = 'u32[]', space=smem, size = 0x4, offset = 0x4, fixed_abs, tag = 'smem constant byte address 0x4 - core index']
  #allocation1 [shape = 'u32[72,128]{1,0:T(1,128)}', space=vmem, size = 0x9000, scoped, tag = 'internal scratch']
  #allocation2 [shape = 'f32[256,128]{1,0:T(8,128)}', space=vmem, size = 0x20000, scoped, tag = 'scratch operand']
  %s0 = inlined_call_operand.vmem [shape: bf16[512,512], index: 0, kind: input, shape index: {}]
  %s1 = inlined_call_operand.vmem [shape: bf16[512,128], index: 1, kind: input, shape index: {}]
  %s2 = inlined_call_operand.vmem [shape: bf16[128,128], index: 2, kind: input, shape index: {}]
  %s3 = inlined_call_operand.vmem [shape: f32[1,128], index: 3, kind: input, shape index: {}]
  %s4 = inlined_call_operand.vmem [shape: bf16[512,128], index: 4, kind: output, shape index: {}]
  %s5 = sld [smem:[#allocation0]]
  $region95: #{gnn_forward.2} parent=0
    _
  %s7 = ssub.s32 1, %s5
  %s8 = scalar_select 0, %s7, %s5
  $region1: #{gnn_forward.2} parent=0
    #allocation3 [shape = 'u8[262144]{0}', space=vmem, size = 0x40000, scoped, tag = 'input window, operand 0']
    loop: start=0, step=1, limit=6
    $region2: #{gnn_forward.2} parent=1 // loop_pre_header
      _
    $region3: #{gnn_forward.2} parent=1 // loop_header
      %s10 = sphi 0, %s14
      %p11 = scmp.ge.s32.totalorder %s10, 6
      %s17 = sphi 0, %s29
      %s18 = sphi 0, %s25
      %s19 = sphi 0, %s17
      %s20 = sphi 0, %s18
      %s21 = sphi 0, %s19
      %s22 = sphi 0, %s20
      %s34 = sphi 0, %s36
      %s37 = sphi 0, %s34
      %s38 = sphi 0, %s37
      %s54 = sphi 0, %s38
      %s60 = sphi 0, %s62
      %s63 = sphi 0, %s60
      %s64 = sphi 0, %s63
      %s80 = sphi 0, %s64
      %s84 = sphi 0, %s84
      %s86 = sphi 0, %s84
      %s87 = sphi 0, %s86
      %s101 = sphi 0, %s87
      %s105 = sphi 0, %s105
      %s107 = sphi 0, %s105
      %s108 = sphi 0, %s107
      %s122 = sphi 0, %s108
      %s128 = sphi 0, %s130
      %s131 = sphi 0, %s128
      %s132 = sphi 0, %s131
      %s148 = sphi 0, %s132
    $region4: #{gnn_forward.2} parent=1 // loop_header_branch
      %13 = sbr.rel (%p11) target = $region8
    $region5: #{gnn_forward.2} parent=1 // loop_body
      %s15 = ssub.s32 %s10, 1
      %s16 = ssub.s32 %s10, 2
      %s23 = sadd.s32 1, %s18
      %p24 = scmp.ge.s32.totalorder %s23, 2
      %s25 = scalar_select %p24, 0, %s23
      %s26 = sadd.s32 1, %s17
      %s27 = scalar_select %p24, %s26, %s17
      %p28 = scmp.ge.s32.totalorder %s27, 2
      %s29 = scalar_select %p28, 0, %s27
      %s30 = ssub.s32 %s17, %s29
      %s31 = ssub.s32 %s18, %s25
      %s32 = sor.u32 %s30, %s31
      %p33 = scmp.eq.s32.totalorder %s32, 0
      %s35 = sadd.s32 %s34, 1
      %s36 = scalar_select %p33, %s34, %s35
      %p39 = pneg %p33
      %p40 = scmp.eq.s32.totalorder %s10, 3
      %p41 = por %p39, %p40
      %p42 = scmp.ne.s32.totalorder %s34, %s37
      %p43 = scmp.eq.s32.totalorder %s10, 0
      %p44 = por %p42, %p43
      %p45 = scmp.ne.s32.totalorder %s34, %s37
      %p46 = scmp.eq.s32.totalorder %s15, 3
      %p47 = por %p45, %p46
      %p48 = scmp.ne.s32.totalorder %s37, %s38
      %p49 = scmp.eq.s32.totalorder %s15, 0
      %p50 = por %p48, %p49
      %p51 = scmp.ne.s32.totalorder %s37, %s38
      %p52 = scmp.eq.s32.totalorder %s16, 3
      %p53 = por %p51, %p52
      %p55 = scmp.ne.s32.totalorder %s38, %s54
      %p56 = scmp.eq.s32.totalorder %s16, 0
      %p57 = por %p55, %p56
      %s58 = ssub.s32 %s18, %s25
      %p59 = scmp.eq.s32.totalorder %s58, 0
      %s61 = sadd.s32 %s60, 1
      %s62 = scalar_select %p59, %s60, %s61
      %p65 = pneg %p59
      %p66 = scmp.eq.s32.totalorder %s10, 3
      %p67 = por %p65, %p66
      %p68 = scmp.ne.s32.totalorder %s60, %s63
      %p69 = scmp.eq.s32.totalorder %s10, 0
      %p70 = por %p68, %p69
      %p71 = scmp.ne.s32.totalorder %s60, %s63
      %p72 = scmp.eq.s32.totalorder %s15, 3
      %p73 = por %p71, %p72
      %p74 = scmp.ne.s32.totalorder %s63, %s64
      %p75 = scmp.eq.s32.totalorder %s15, 0
      %p76 = por %p74, %p75
      %p77 = scmp.ne.s32.totalorder %s63, %s64
      %p78 = scmp.eq.s32.totalorder %s16, 3
      %p79 = por %p77, %p78
      %p81 = scmp.ne.s32.totalorder %s64, %s80
      %p82 = scmp.eq.s32.totalorder %s16, 0
      %p83 = por %p81, %p82
      %s85 = sadd.s32 %s84, 1
      %p88 = scmp.eq.s32.totalorder %s10, 3
      %p89 = scmp.ne.s32.totalorder %s84, %s86
      %p90 = scmp.eq.s32.totalorder %s10, 0
      %p91 = por %p89, %p90
      %p92 = scmp.ne.s32.totalorder %s84, %s86
      %p93 = scmp.eq.s32.totalorder %s15, 3
      %p94 = por %p92, %p93
      %p95 = scmp.ne.s32.totalorder %s86, %s87
      %p96 = scmp.eq.s32.totalorder %s15, 0
      %p97 = por %p95, %p96
      %p98 = scmp.ne.s32.totalorder %s86, %s87
      %p99 = scmp.eq.s32.totalorder %s16, 3
      %p100 = por %p98, %p99
      %p102 = scmp.ne.s32.totalorder %s87, %s101
      %p103 = scmp.eq.s32.totalorder %s16, 0
      %p104 = por %p102, %p103
      %s106 = sadd.s32 %s105, 1
      %p109 = scmp.eq.s32.totalorder %s10, 3
      %p110 = scmp.ne.s32.totalorder %s105, %s107
      %p111 = scmp.eq.s32.totalorder %s10, 0
      %p112 = por %p110, %p111
      %p113 = scmp.ne.s32.totalorder %s105, %s107
      %p114 = scmp.eq.s32.totalorder %s15, 3
      %p115 = por %p113, %p114
      %p116 = scmp.ne.s32.totalorder %s107, %s108
      %p117 = scmp.eq.s32.totalorder %s15, 0
      %p118 = por %p116, %p117
      %p119 = scmp.ne.s32.totalorder %s107, %s108
      %p120 = scmp.eq.s32.totalorder %s16, 3
      %p121 = por %p119, %p120
      %p123 = scmp.ne.s32.totalorder %s108, %s122
      %p124 = scmp.eq.s32.totalorder %s16, 0
      %p125 = por %p123, %p124
      %s126 = ssub.s32 %s17, %s29
      %p127 = scmp.eq.s32.totalorder %s126, 0
      %s129 = sadd.s32 %s128, 1
      %s130 = scalar_select %p127, %s128, %s129
      %p133 = pneg %p127
      %p134 = scmp.eq.s32.totalorder %s10, 3
      %p135 = por %p133, %p134
      %p136 = scmp.ne.s32.totalorder %s128, %s131
      %p137 = scmp.eq.s32.totalorder %s10, 0
      %p138 = por %p136, %p137
      %p139 = scmp.ne.s32.totalorder %s128, %s131
      %p140 = scmp.eq.s32.totalorder %s15, 3
      %p141 = por %p139, %p140
      %p142 = scmp.ne.s32.totalorder %s131, %s132
      %p143 = scmp.eq.s32.totalorder %s15, 0
      %p144 = por %p142, %p143
      %p145 = scmp.ne.s32.totalorder %s131, %s132
      %p146 = scmp.eq.s32.totalorder %s16, 3
      %p147 = por %p145, %p146
      %p149 = scmp.ne.s32.totalorder %s132, %s148
      %p150 = scmp.eq.s32.totalorder %s16, 0
      %p151 = por %p149, %p150
      %p152 = scmp.le.s32.totalorder 1, %s10
      %p153 = scmp.lt.s32.totalorder %s10, 5
      %p154 = pnand %p152, %p153
      %p155 = pneg %p154
      // Predicated region
      $region9: #{gnn_forward.2} parent=5 // pred_check
        _
      $region10: #{gnn_forward.2} parent=5 // pred_check_branch
        %157 = sbr.rel (%p154) target = $region12
      $region11: #{gnn_forward.2} parent=5 // pred_region
        %s158 = ssub.s32 %s10, 1
        // Predicated region
        $region13: #{gnn_forward.2} parent=11 // pred_check
          %p159 = pneg %p97
        $region14: #{gnn_forward.2} parent=11 // pred_check_branch
          %161 = sbr.rel (%p159) target = $region16
        $region15: #{gnn_forward.2} parent=11 // pred_region
          _
        $region16: #{gnn_forward.2} parent=11 // pred_fallthru
          _
        // Predicated region
        $region17: #{gnn_forward.2} parent=11 // pred_check
          %p162 = pneg %p118
        $region18: #{gnn_forward.2} parent=11 // pred_check_branch
          %164 = sbr.rel (%p162) target = $region20
        $region19: #{gnn_forward.2} parent=11 // pred_region
          _
        $region20: #{gnn_forward.2} parent=11 // pred_fallthru
          _
      $region12: #{gnn_forward.2} parent=5 // pred_fallthru
        _
      %p165 = scmp.lt.s32.totalorder %s10, 4
      // Predicated region
      $region21: #{gnn_forward.2} parent=5 // pred_check
        %p166 = pneg %p165
      $region22: #{gnn_forward.2} parent=5 // pred_check_branch
        %168 = sbr.rel (%p166) target = $region24
      $region23: #{gnn_forward.2} parent=5 // pred_region
        // Predicated region
        $region25: #{gnn_forward.2} parent=23 // pred_check
          %p169 = pneg %p44
        $region26: #{gnn_forward.2} parent=23 // pred_check_branch
          %171 = sbr.rel (%p169) target = $region28
        $region27: #{gnn_forward.2} parent=23 // pred_region
          %s172 = sand.u32 %s34, 1
          %s173 = sand.u32 %s34, 1
          %s174 = smul.addr %s173, 256
          %s175 = scalar_lea.vmem [#allocation3], %s174
          %s176 = smul.u32 32, %s17
          %s177 = smul.u32 2, %s18
          %s178 = smul.addr %s176, 4
          %s179 = sadd.s32 %s177, %s178
          %s180 = smul.addr %s179, 4
          %s181 = scalar_lea.vmem %s0, %s180
          // Predicated region
          $region29: #{gnn_forward.2} parent=27 // pred_check
            _
          $region30: #{gnn_forward.2} parent=27 // pred_check_branch
            %183 = sbr.rel (0) target = $region32
          $region31: #{gnn_forward.2} parent=27 // pred_region
            // Predicated region
            $region33: #{gnn_forward.2} parent=31 // pred_check
              _
            $region34: #{gnn_forward.2} parent=31 // pred_check_branch
              %185 = sbr.rel (0) target = $region36
            $region35: #{gnn_forward.2} parent=31 // pred_region
              // Predicated region
              $region48: #{gnn_forward.2} parent=35 // pred_check
                _
              $region49: #{gnn_forward.2} parent=35 // pred_check_branch
                %263 = sbr.rel (0) target = $region51
              $region50: #{gnn_forward.2} parent=35 // pred_region
                loop: start=0, step=1, limit=1
                $region52: #{gnn_forward.2} parent=50 // loop_pre_header
                  _
                $region53: #{gnn_forward.2} parent=50 // loop_header
                  %s265 = sphi 0, %s269
                  %p266 = scmp.ge.s32.totalorder %s265, 1
                  %s270 = sphi %s181, %s181
                  %s271 = sphi %s175, %s175
                $region54: #{gnn_forward.2} parent=50 // loop_header_branch
                  %268 = sbr.rel (%p266) target = $region58
                $region55: #{gnn_forward.2} parent=50 // loop_body
                  %v272 = vld [vmem:[%s270] sm:$0xff]
                  %273 = vst [vmem:[%s271] sm:$0xff] %v272
                  %v274 = vld [vmem:[%s270 + $0x10] sm:$0xff]
                  %275 = vst [vmem:[%s271 + $0x8] sm:$0xff] %v274
                  %v276 = vld [vmem:[%s270 + $0x20] sm:$0xff]
                  %277 = vst [vmem:[%s271 + $0x10] sm:$0xff] %v276
                  %v278 = vld [vmem:[%s270 + $0x30] sm:$0xff]
                  %279 = vst [vmem:[%s271 + $0x18] sm:$0xff] %v278
                  %v280 = vld [vmem:[%s270 + $0x40] sm:$0xff]
                  %281 = vst [vmem:[%s271 + $0x20] sm:$0xff] %v280
                  %v282 = vld [vmem:[%s270 + $0x50] sm:$0xff]
                  %283 = vst [vmem:[%s271 + $0x28] sm:$0xff] %v282
                  %v284 = vld [vmem:[%s270 + $0x60] sm:$0xff]
                  %285 = vst [vmem:[%s271 + $0x30] sm:$0xff] %v284
                  %v286 = vld [vmem:[%s270 + $0x70] sm:$0xff]
                  %287 = vst [vmem:[%s271 + $0x38] sm:$0xff] %v286
                  %v288 = vld [vmem:[%s270 + $0x80] sm:$0xff]
                  %289 = vst [vmem:[%s271 + $0x40] sm:$0xff] %v288
                  %v290 = vld [vmem:[%s270 + $0x90] sm:$0xff]
                  %291 = vst [vmem:[%s271 + $0x48] sm:$0xff] %v290
                  %v292 = vld [vmem:[%s270 + $0xa0] sm:$0xff]
                  %293 = vst [vmem:[%s271 + $0x50] sm:$0xff] %v292
                  %v294 = vld [vmem:[%s270 + $0xb0] sm:$0xff]
                  %295 = vst [vmem:[%s271 + $0x58] sm:$0xff] %v294
                  %v296 = vld [vmem:[%s270 + $0xc0] sm:$0xff]
                  %297 = vst [vmem:[%s271 + $0x60] sm:$0xff] %v296
                  %v298 = vld [vmem:[%s270 + $0xd0] sm:$0xff]
                  %299 = vst [vmem:[%s271 + $0x68] sm:$0xff] %v298
                  %v300 = vld [vmem:[%s270 + $0xe0] sm:$0xff]
                  %301 = vst [vmem:[%s271 + $0x70] sm:$0xff] %v300
                  %v302 = vld [vmem:[%s270 + $0xf0] sm:$0xff]
                  %303 = vst [vmem:[%s271 + $0x78] sm:$0xff] %v302
                  %v304 = vld [vmem:[%s270 + $0x100] sm:$0xff]
                  %305 = vst [vmem:[%s271 + $0x80] sm:$0xff] %v304
                  %v306 = vld [vmem:[%s270 + $0x110] sm:$0xff]
                  %307 = vst [vmem:[%s271 + $0x88] sm:$0xff] %v306
                  %v308 = vld [vmem:[%s270 + $0x120] sm:$0xff]
                  %309 = vst [vmem:[%s271 + $0x90] sm:$0xff] %v308
                  %v310 = vld [vmem:[%s270 + $0x130] sm:$0xff]
                  %311 = vst [vmem:[%s271 + $0x98] sm:$0xff] %v310
                  %v312 = vld [vmem:[%s270 + $0x140] sm:$0xff]
                  %313 = vst [vmem:[%s271 + $0xa0] sm:$0xff] %v312
                  %v314 = vld [vmem:[%s270 + $0x150] sm:$0xff]
                  %315 = vst [vmem:[%s271 + $0xa8] sm:$0xff] %v314
                  %v316 = vld [vmem:[%s270 + $0x160] sm:$0xff]
                  %317 = vst [vmem:[%s271 + $0xb0] sm:$0xff] %v316
                  %v318 = vld [vmem:[%s270 + $0x170] sm:$0xff]
                  %319 = vst [vmem:[%s271 + $0xb8] sm:$0xff] %v318
                  %v320 = vld [vmem:[%s270 + $0x180] sm:$0xff]
                  %321 = vst [vmem:[%s271 + $0xc0] sm:$0xff] %v320
                  %v322 = vld [vmem:[%s270 + $0x190] sm:$0xff]
                  %323 = vst [vmem:[%s271 + $0xc8] sm:$0xff] %v322
                  %v324 = vld [vmem:[%s270 + $0x1a0] sm:$0xff]
                  %325 = vst [vmem:[%s271 + $0xd0] sm:$0xff] %v324
                  %v326 = vld [vmem:[%s270 + $0x1b0] sm:$0xff]
                  %327 = vst [vmem:[%s271 + $0xd8] sm:$0xff] %v326
                  %v328 = vld [vmem:[%s270 + $0x1c0] sm:$0xff]
                  %329 = vst [vmem:[%s271 + $0xe0] sm:$0xff] %v328
                  %v330 = vld [vmem:[%s270 + $0x1d0] sm:$0xff]
                  %331 = vst [vmem:[%s271 + $0xe8] sm:$0xff] %v330
                  %v332 = vld [vmem:[%s270 + $0x1e0] sm:$0xff]
                  %333 = vst [vmem:[%s271 + $0xf0] sm:$0xff] %v332
                  %v334 = vld [vmem:[%s270 + $0x1f0] sm:$0xff]
                  %335 = vst [vmem:[%s271 + $0xf8] sm:$0xff] %v334
                $region56: #{gnn_forward.2} parent=50 // loop_footer
                  %s269 = sadd.s32 1, %s265
                $region57: #{gnn_forward.2} parent=50 // loop_footer_branch
                  %264 = sbr.rel target = $region53
                $region58: #{gnn_forward.2} parent=50 // loop_exit
                  _
              $region51: #{gnn_forward.2} parent=35 // pred_fallthru
                _
              // Predicated region
              $region59: #{gnn_forward.2} parent=35 // pred_check
                _
              $region60: #{gnn_forward.2} parent=35 // pred_check_branch
                %337 = sbr.rel target = $region62
              $region61: #{gnn_forward.2} parent=35 // pred_region
                _
              $region62: #{gnn_forward.2} parent=35 // pred_fallthru
                _
            $region36: #{gnn_forward.2} parent=31 // pred_fallthru
              _
            // Predicated region
            $region37: #{gnn_forward.2} parent=31 // pred_check
              _
            $region38: #{gnn_forward.2} parent=31 // pred_check_branch
              %187 = sbr.rel target = $region40
            $region39: #{gnn_forward.2} parent=31 // pred_region
              %s189 = ssub.s32 256, 1
              loop: start=0, step=1, limit=1
              $region41: #{gnn_forward.2} parent=39 // loop_pre_header
                _
              $region42: #{gnn_forward.2} parent=39 // loop_header
                %s191 = sphi 0, %s195
                %p192 = scmp.ge.s32.totalorder %s191, 1
                %s196 = sphi %s181, %s181
                %s197 = sphi %s175, %s175
              $region43: #{gnn_forward.2} parent=39 // loop_header_branch
                %194 = sbr.rel (%p192) target = $region47
              $region44: #{gnn_forward.2} parent=39 // loop_body
                %v198 = vld [vmem:[%s196] sm:%s189]
                %199 = vst [vmem:[%s197] sm:%s189] %v198
                %v200 = vld [vmem:[%s196 + $0x10] sm:%s189]
                %201 = vst [vmem:[%s197 + $0x8] sm:%s189] %v200
                %v202 = vld [vmem:[%s196 + $0x20] sm:%s189]
                %203 = vst [vmem:[%s197 + $0x10] sm:%s189] %v202
                %v204 = vld [vmem:[%s196 + $0x30] sm:%s189]
                %205 = vst [vmem:[%s197 + $0x18] sm:%s189] %v204
                %v206 = vld [vmem:[%s196 + $0x40] sm:%s189]
                %207 = vst [vmem:[%s197 + $0x20] sm:%s189] %v206
                %v208 = vld [vmem:[%s196 + $0x50] sm:%s189]
                %209 = vst [vmem:[%s197 + $0x28] sm:%s189] %v208
                %v210 = vld [vmem:[%s196 + $0x60] sm:%s189]
                %211 = vst [vmem:[%s197 + $0x30] sm:%s189] %v210
                %v212 = vld [vmem:[%s196 + $0x70] sm:%s189]
                %213 = vst [vmem:[%s197 + $0x38] sm:%s189] %v212
                %v214 = vld [vmem:[%s196 + $0x80] sm:%s189]
                %215 = vst [vmem:[%s197 + $0x40] sm:%s189] %v214
                %v216 = vld [vmem:[%s196 + $0x90] sm:%s189]
                %217 = vst [vmem:[%s197 + $0x48] sm:%s189] %v216
                %v218 = vld [vmem:[%s196 + $0xa0] sm:%s189]
                %219 = vst [vmem:[%s197 + $0x50] sm:%s189] %v218
                %v220 = vld [vmem:[%s196 + $0xb0] sm:%s189]
                %221 = vst [vmem:[%s197 + $0x58] sm:%s189] %v220
                %v222 = vld [vmem:[%s196 + $0xc0] sm:%s189]
                %223 = vst [vmem:[%s197 + $0x60] sm:%s189] %v222
                %v224 = vld [vmem:[%s196 + $0xd0] sm:%s189]
                %225 = vst [vmem:[%s197 + $0x68] sm:%s189] %v224
                %v226 = vld [vmem:[%s196 + $0xe0] sm:%s189]
                %227 = vst [vmem:[%s197 + $0x70] sm:%s189] %v226
                %v228 = vld [vmem:[%s196 + $0xf0] sm:%s189]
                %229 = vst [vmem:[%s197 + $0x78] sm:%s189] %v228
                %v230 = vld [vmem:[%s196 + $0x100] sm:%s189]
                %231 = vst [vmem:[%s197 + $0x80] sm:%s189] %v230
                %v232 = vld [vmem:[%s196 + $0x110] sm:%s189]
                %233 = vst [vmem:[%s197 + $0x88] sm:%s189] %v232
                %v234 = vld [vmem:[%s196 + $0x120] sm:%s189]
                %235 = vst [vmem:[%s197 + $0x90] sm:%s189] %v234
                %v236 = vld [vmem:[%s196 + $0x130] sm:%s189]
                %237 = vst [vmem:[%s197 + $0x98] sm:%s189] %v236
                %v238 = vld [vmem:[%s196 + $0x140] sm:%s189]
                %239 = vst [vmem:[%s197 + $0xa0] sm:%s189] %v238
                %v240 = vld [vmem:[%s196 + $0x150] sm:%s189]
                %241 = vst [vmem:[%s197 + $0xa8] sm:%s189] %v240
                %v242 = vld [vmem:[%s196 + $0x160] sm:%s189]
                %243 = vst [vmem:[%s197 + $0xb0] sm:%s189] %v242
                %v244 = vld [vmem:[%s196 + $0x170] sm:%s189]
                %245 = vst [vmem:[%s197 + $0xb8] sm:%s189] %v244
                %v246 = vld [vmem:[%s196 + $0x180] sm:%s189]
                %247 = vst [vmem:[%s197 + $0xc0] sm:%s189] %v246
                %v248 = vld [vmem:[%s196 + $0x190] sm:%s189]
                %249 = vst [vmem:[%s197 + $0xc8] sm:%s189] %v248
                %v250 = vld [vmem:[%s196 + $0x1a0] sm:%s189]
                %251 = vst [vmem:[%s197 + $0xd0] sm:%s189] %v250
                %v252 = vld [vmem:[%s196 + $0x1b0] sm:%s189]
                %253 = vst [vmem:[%s197 + $0xd8] sm:%s189] %v252
                %v254 = vld [vmem:[%s196 + $0x1c0] sm:%s189]
                %255 = vst [vmem:[%s197 + $0xe0] sm:%s189] %v254
                %v256 = vld [vmem:[%s196 + $0x1d0] sm:%s189]
                %257 = vst [vmem:[%s197 + $0xe8] sm:%s189] %v256
                %v258 = vld [vmem:[%s196 + $0x1e0] sm:%s189]
                %259 = vst [vmem:[%s197 + $0xf0] sm:%s189] %v258
                %v260 = vld [vmem:[%s196 + $0x1f0] sm:%s189]
                %261 = vst [vmem:[%s197 + $0xf8] sm:%s189] %v260
              $region45: #{gnn_forward.2} parent=39 // loop_footer
                %s195 = sadd.s32 1, %s191
              $region46: #{gnn_forward.2} parent=39 // loop_footer_branch
                %190 = sbr.rel target = $region42
              $region47: #{gnn_forward.2} parent=39 // loop_exit
                _
            $region40: #{gnn_forward.2} parent=31 // pred_fallthru
              _
          $region32: #{gnn_forward.2} parent=27 // pred_fallthru
            _
          %338 = vnop
        $region28: #{gnn_forward.2} parent=23 // pred_fallthru
          _
        // Predicated region
        $region63: #{gnn_forward.2} parent=23 // pred_check
          %p339 = pneg %p70
        $region64: #{gnn_forward.2} parent=23 // pred_check_branch
          %341 = sbr.rel (%p339) target = $region66
        $region65: #{gnn_forward.2} parent=23 // pred_region
          %s342 = smul.u32 32, %s18
          %p343 = scmp.lt.s32.totalorder %s342, 63
          %s344 = scalar_select %p343, %s342, 63
          %s345 = smul.addr %s344, 4
          %s346 = scalar_lea.vmem %s1, %s345
          %s347 = smul.u32 32, %s18
        $region66: #{gnn_forward.2} parent=23 // pred_fallthru
          _
      $region24: #{gnn_forward.2} parent=5 // pred_fallthru
        _
      %p348 = scmp.le.s32.totalorder 1, %s10
      %p349 = scmp.lt.s32.totalorder %s10, 5
      %p350 = pnand %p348, %p349
      %p351 = pneg %p350
      // Predicated region
      $region67: #{gnn_forward.2} parent=5 // pred_check
        _
      $region68: #{gnn_forward.2} parent=5 // pred_check_branch
        %353 = sbr.rel (%p350) target = $region70
      $region69: #{gnn_forward.2} parent=5 // pred_region
        %s354 = ssub.s32 %s10, 1
        %s355 = sand.u32 %s37, 1
        %s356 = sand.u32 %s37, 1
        %s357 = smul.addr %s356, 256
        %s358 = scalar_lea.vmem [#allocation3], %s357
        // Predicated region
        $region71: #{gnn_forward.2} parent=69 // pred_check
          %p359 = pneg %p50
        $region72: #{gnn_forward.2} parent=69 // pred_check_branch
          %361 = sbr.rel (%p359) target = $region74
        $region73: #{gnn_forward.2} parent=69 // pred_region
          _
        $region74: #{gnn_forward.2} parent=69 // pred_fallthru
          _
        %s362 = sand.u32 %s37, 1
        %s363 = sand.u32 %s37, 1
        %s364 = smul.addr %s363, 256
        %s365 = scalar_lea.vmem [#allocation3], %s364
        %p366 = pneg %p50
        %p367 = pneg %p47
        %s368 = smul.u32 32, %s20
        %p369 = scmp.lt.s32.totalorder %s368, 63
        %s370 = scalar_select %p369, %s368, 63
        %s371 = smul.addr %s370, 4
        %s372 = scalar_lea.vmem %s1, %s371
        %p373 = pneg %p76
        %p374 = pneg %p73
        %p375 = pneg %p97
        %p376 = pneg %p94
        %p377 = pneg %p118
        %p378 = pneg %p115
        %p379 = pneg %p144
        %p380 = pneg %p141
        %s381 = smul.u32 32, %s19
        %p382 = scmp.lt.s32.totalorder %s381, 63
        %s383 = scalar_select %p382, %s381, 63
        %s384 = smul.addr %s383, 4
        %s385 = scalar_lea.vmem %s4, %s384
        %s386 = smul.u32 32, %s19
        %s387 = smul.u32 2, %s20
        %s388 = smul.u32 32, %s20
        %p389 = scmp.lt.s32.totalorder %s388, 63
        %s390 = scalar_select %p389, %s388, 63
        %s391 = smul.addr %s390, 4
        %s392 = scalar_lea.vmem %s1, %s391
        %s393 = smul.u32 32, %s20
        %s394 = smul.u32 32, %s19
        %p395 = scmp.lt.s32.totalorder %s394, 63
        %s396 = scalar_select %p395, %s394, 63
        %s397 = smul.addr %s396, 4
        %s398 = scalar_lea.vmem %s4, %s397
        %s399 = smul.u32 32, %s19
        %p400 = scmp.eq.s32.totalorder %s20, 0
        // Predicated region
        $region75: #{gnn_forward.2} parent=69 // pred_check
          %p401 = pneg %p400
        $region76: #{gnn_forward.2} parent=69 // pred_check_branch
          %403 = sbr.rel (%p401) target = $region78
        $region77: #{gnn_forward.2} parent=69 // pred_region
          %404 = vst [vmem:[#allocation2] sm:$0xff] 0.0
          %405 = vst [vmem:[#allocation2 + $0x8] sm:$0xff] 0.0
          %406 = vst [vmem:[#allocation2 + $0x10] sm:$0xff] 0.0
          %407 = vst [vmem:[#allocation2 + $0x18] sm:$0xff] 0.0
          %408 = vst [vmem:[#allocation2 + $0x20] sm:$0xff] 0.0
          %409 = vst [vmem:[#allocation2 + $0x28] sm:$0xff] 0.0
          %410 = vst [vmem:[#allocation2 + $0x30] sm:$0xff] 0.0
          %411 = vst [vmem:[#allocation2 + $0x38] sm:$0xff] 0.0
          %412 = vst [vmem:[#allocation2 + $0x40] sm:$0xff] 0.0
          %413 = vst [vmem:[#allocation2 + $0x48] sm:$0xff] 0.0
          %414 = vst [vmem:[#allocation2 + $0x50] sm:$0xff] 0.0
          %415 = vst [vmem:[#allocation2 + $0x58] sm:$0xff] 0.0
          %416 = vst [vmem:[#allocation2 + $0x60] sm:$0xff] 0.0
          %417 = vst [vmem:[#allocation2 + $0x68] sm:$0xff] 0.0
          %418 = vst [vmem:[#allocation2 + $0x70] sm:$0xff] 0.0
          %419 = vst [vmem:[#allocation2 + $0x78] sm:$0xff] 0.0
          %420 = vst [vmem:[#allocation2 + $0x80] sm:$0xff] 0.0
          %421 = vst [vmem:[#allocation2 + $0x88] sm:$0xff] 0.0
          %422 = vst [vmem:[#allocation2 + $0x90] sm:$0xff] 0.0
          %423 = vst [vmem:[#allocation2 + $0x98] sm:$0xff] 0.0
          %424 = vst [vmem:[#allocation2 + $0xa0] sm:$0xff] 0.0
          %425 = vst [vmem:[#allocation2 + $0xa8] sm:$0xff] 0.0
          %426 = vst [vmem:[#allocation2 + $0xb0] sm:$0xff] 0.0
          %427 = vst [vmem:[#allocation2 + $0xb8] sm:$0xff] 0.0
          %428 = vst [vmem:[#allocation2 + $0xc0] sm:$0xff] 0.0
          %429 = vst [vmem:[#allocation2 + $0xc8] sm:$0xff] 0.0
          %430 = vst [vmem:[#allocation2 + $0xd0] sm:$0xff] 0.0
          %431 = vst [vmem:[#allocation2 + $0xd8] sm:$0xff] 0.0
          %432 = vst [vmem:[#allocation2 + $0xe0] sm:$0xff] 0.0
          %433 = vst [vmem:[#allocation2 + $0xe8] sm:$0xff] 0.0
          %434 = vst [vmem:[#allocation2 + $0xf0] sm:$0xff] 0.0
          %435 = vst [vmem:[#allocation2 + $0xf8] sm:$0xff] 0.0
        $region78: #{gnn_forward.2} parent=69 // pred_fallthru
          _
        %v436 = vld [vmem:[#allocation2] sm:$0xff]
        %v437 = vld [vmem:[#allocation2 + $0x8] sm:$0xff]
        %v438 = vld [vmem:[#allocation2 + $0x10] sm:$0xff]
        %v439 = vld [vmem:[#allocation2 + $0x18] sm:$0xff]
        %v440 = vld [vmem:[#allocation2 + $0x20] sm:$0xff]
        %v441 = vld [vmem:[#allocation2 + $0x28] sm:$0xff]
        %v442 = vld [vmem:[#allocation2 + $0x30] sm:$0xff]
        %v443 = vld [vmem:[#allocation2 + $0x38] sm:$0xff]
        %v444 = vld [vmem:[#allocation2 + $0x40] sm:$0xff]
        %v445 = vld [vmem:[#allocation2 + $0x48] sm:$0xff]
        %v446 = vld [vmem:[#allocation2 + $0x50] sm:$0xff]
        %v447 = vld [vmem:[#allocation2 + $0x58] sm:$0xff]
        %v448 = vld [vmem:[#allocation2 + $0x60] sm:$0xff]
        %v449 = vld [vmem:[#allocation2 + $0x68] sm:$0xff]
        %v450 = vld [vmem:[#allocation2 + $0x70] sm:$0xff]
        %v451 = vld [vmem:[#allocation2 + $0x78] sm:$0xff]
        %v452 = vld [vmem:[#allocation2 + $0x80] sm:$0xff]
        %v453 = vld [vmem:[#allocation2 + $0x88] sm:$0xff]
        %v454 = vld [vmem:[#allocation2 + $0x90] sm:$0xff]
        %v455 = vld [vmem:[#allocation2 + $0x98] sm:$0xff]
        %v456 = vld [vmem:[#allocation2 + $0xa0] sm:$0xff]
        %v457 = vld [vmem:[#allocation2 + $0xa8] sm:$0xff]
        %v458 = vld [vmem:[#allocation2 + $0xb0] sm:$0xff]
        %v459 = vld [vmem:[#allocation2 + $0xb8] sm:$0xff]
        %v460 = vld [vmem:[#allocation2 + $0xc0] sm:$0xff]
        %v461 = vld [vmem:[#allocation2 + $0xc8] sm:$0xff]
        %v462 = vld [vmem:[#allocation2 + $0xd0] sm:$0xff]
        %v463 = vld [vmem:[#allocation2 + $0xd8] sm:$0xff]
        %v464 = vld [vmem:[#allocation2 + $0xe0] sm:$0xff]
        %v465 = vld [vmem:[#allocation2 + $0xe8] sm:$0xff]
        %v466 = vld [vmem:[#allocation2 + $0xf0] sm:$0xff]
        %v467 = vld [vmem:[#allocation2 + $0xf8] sm:$0xff]
        %v468 = vld [vmem:[%s358] sm:$0xff]
        %v469 = vld [vmem:[%s358 + $0x8] sm:$0xff]
        %v470 = vld [vmem:[%s358 + $0x10] sm:$0xff]
        %v471 = vld [vmem:[%s358 + $0x18] sm:$0xff]
        %v472 = vld [vmem:[%s358 + $0x20] sm:$0xff]
        %v473 = vld [vmem:[%s358 + $0x28] sm:$0xff]
        %v474 = vld [vmem:[%s358 + $0x30] sm:$0xff]
        %v475 = vld [vmem:[%s358 + $0x38] sm:$0xff]
        %v476 = vld [vmem:[%s358 + $0x40] sm:$0xff]
        %v477 = vld [vmem:[%s358 + $0x48] sm:$0xff]
        %v478 = vld [vmem:[%s358 + $0x50] sm:$0xff]
        %v479 = vld [vmem:[%s358 + $0x58] sm:$0xff]
        %v480 = vld [vmem:[%s358 + $0x60] sm:$0xff]
        %v481 = vld [vmem:[%s358 + $0x68] sm:$0xff]
        %v482 = vld [vmem:[%s358 + $0x70] sm:$0xff]
        %v483 = vld [vmem:[%s358 + $0x78] sm:$0xff]
        %v484 = vld [vmem:[%s358 + $0x80] sm:$0xff]
        %v485 = vld [vmem:[%s358 + $0x88] sm:$0xff]
        %v486 = vld [vmem:[%s358 + $0x90] sm:$0xff]
        %v487 = vld [vmem:[%s358 + $0x98] sm:$0xff]
        %v488 = vld [vmem:[%s358 + $0xa0] sm:$0xff]
        %v489 = vld [vmem:[%s358 + $0xa8] sm:$0xff]
        %v490 = vld [vmem:[%s358 + $0xb0] sm:$0xff]
        %v491 = vld [vmem:[%s358 + $0xb8] sm:$0xff]
        %v492 = vld [vmem:[%s358 + $0xc0] sm:$0xff]
        %v493 = vld [vmem:[%s358 + $0xc8] sm:$0xff]
        %v494 = vld [vmem:[%s358 + $0xd0] sm:$0xff]
        %v495 = vld [vmem:[%s358 + $0xd8] sm:$0xff]
        %v496 = vld [vmem:[%s358 + $0xe0] sm:$0xff]
        %v497 = vld [vmem:[%s358 + $0xe8] sm:$0xff]
        %v498 = vld [vmem:[%s358 + $0xf0] sm:$0xff]
        %v499 = vld [vmem:[%s358 + $0xf8] sm:$0xff]
        %v500 = vld [vmem:[%s392] sm:$0xf]
        %v501 = vld [vmem:[%s392 + $0x4] sm:$0xf]
        %v502 = vld [vmem:[%s392 + $0x8] sm:$0xf]
        %v503 = vld [vmem:[%s392 + $0xc] sm:$0xf]
        %v504 = vld [vmem:[%s392 + $0x10] sm:$0xf]
        %v505 = vld [vmem:[%s392 + $0x14] sm:$0xf]
        %v506 = vld [vmem:[%s392 + $0x18] sm:$0xf]
        %v507 = vld [vmem:[%s392 + $0x1c] sm:$0xf]
        %v508 = vld [vmem:[%s392 + $0x20] sm:$0xf]
        %v509 = vld [vmem:[%s392 + $0x24] sm:$0xf]
        %v510 = vld [vmem:[%s392 + $0x28] sm:$0xf]
        %v511 = vld [vmem:[%s392 + $0x2c] sm:$0xf]
        %v512 = vld [vmem:[%s392 + $0x30] sm:$0xf]
        %v513 = vld [vmem:[%s392 + $0x34] sm:$0xf]
        %v514 = vld [vmem:[%s392 + $0x38] sm:$0xf]
        %v515 = vld [vmem:[%s392 + $0x3c] sm:$0xf]
        %v516 = vld [vmem:[%s392 + $0x40] sm:$0xf]
        %v517 = vld [vmem:[%s392 + $0x44] sm:$0xf]
        %v518 = vld [vmem:[%s392 + $0x48] sm:$0xf]
        %v519 = vld [vmem:[%s392 + $0x4c] sm:$0xf]
        %v520 = vld [vmem:[%s392 + $0x50] sm:$0xf]
        %v521 = vld [vmem:[%s392 + $0x54] sm:$0xf]
        %v522 = vld [vmem:[%s392 + $0x58] sm:$0xf]
        %v523 = vld [vmem:[%s392 + $0x5c] sm:$0xf]
        %v524 = vld [vmem:[%s392 + $0x60] sm:$0xf]
        %v525 = vld [vmem:[%s392 + $0x64] sm:$0xf]
        %v526 = vld [vmem:[%s392 + $0x68] sm:$0xf]
        %v527 = vld [vmem:[%s392 + $0x6c] sm:$0xf]
        %v528 = vld [vmem:[%s392 + $0x70] sm:$0xf]
        %v529 = vld [vmem:[%s392 + $0x74] sm:$0xf]
        %v530 = vld [vmem:[%s392 + $0x78] sm:$0xf]
        %v531 = vld [vmem:[%s392 + $0x7c] sm:$0xf]
        %v564 = vunpack.c.l.b16 %v468
        %v565 = vunpack.c.h.b16 %v468
        %v566 = vunpack.c.l.b16 %v469
        %v567 = vunpack.c.h.b16 %v469
        %v568 = vunpack.c.l.b16 %v470
        %v569 = vunpack.c.h.b16 %v470
        %v570 = vunpack.c.l.b16 %v471
        %v571 = vunpack.c.h.b16 %v471
        %v572 = vunpack.c.l.b16 %v472
        %v573 = vunpack.c.h.b16 %v472
        %v574 = vunpack.c.l.b16 %v473
        %v575 = vunpack.c.h.b16 %v473
        %v576 = vunpack.c.l.b16 %v474
        %v577 = vunpack.c.h.b16 %v474
        %v578 = vunpack.c.l.b16 %v475
        %v579 = vunpack.c.h.b16 %v475
        %v580 = vunpack.c.l.b16 %v476
        %v581 = vunpack.c.h.b16 %v476
        %v582 = vunpack.c.l.b16 %v477
        %v583 = vunpack.c.h.b16 %v477
        %v584 = vunpack.c.l.b16 %v478
        %v585 = vunpack.c.h.b16 %v478
        %v586 = vunpack.c.l.b16 %v479
        %v587 = vunpack.c.h.b16 %v479
        %v588 = vunpack.c.l.b16 %v480
        %v589 = vunpack.c.h.b16 %v480
        %v590 = vunpack.c.l.b16 %v481
        %v591 = vunpack.c.h.b16 %v481
        %v592 = vunpack.c.l.b16 %v482
        %v593 = vunpack.c.h.b16 %v482
        %v594 = vunpack.c.l.b16 %v483
        %v595 = vunpack.c.h.b16 %v483
        %v596 = vunpack.c.l.b16 %v484
        %v597 = vunpack.c.h.b16 %v484
        %v598 = vunpack.c.l.b16 %v485
        %v599 = vunpack.c.h.b16 %v485
        %v600 = vunpack.c.l.b16 %v486
        %v601 = vunpack.c.h.b16 %v486
        %v602 = vunpack.c.l.b16 %v487
        %v603 = vunpack.c.h.b16 %v487
        %v604 = vunpack.c.l.b16 %v488
        %v605 = vunpack.c.h.b16 %v488
        %v606 = vunpack.c.l.b16 %v489
        %v607 = vunpack.c.h.b16 %v489
        %v608 = vunpack.c.l.b16 %v490
        %v609 = vunpack.c.h.b16 %v490
        %v610 = vunpack.c.l.b16 %v491
        %v611 = vunpack.c.h.b16 %v491
        %v612 = vunpack.c.l.b16 %v492
        %v613 = vunpack.c.h.b16 %v492
        %v614 = vunpack.c.l.b16 %v493
        %v615 = vunpack.c.h.b16 %v493
        %v616 = vunpack.c.l.b16 %v494
        %v617 = vunpack.c.h.b16 %v494
        %v618 = vunpack.c.l.b16 %v495
        %v619 = vunpack.c.h.b16 %v495
        %v620 = vunpack.c.l.b16 %v496
        %v621 = vunpack.c.h.b16 %v496
        %v622 = vunpack.c.l.b16 %v497
        %v623 = vunpack.c.h.b16 %v497
        %v624 = vunpack.c.l.b16 %v498
        %v625 = vunpack.c.h.b16 %v498
        %v626 = vunpack.c.l.b16 %v499
        %v627 = vunpack.c.h.b16 %v499
        %v628 = vpack.c.b16 %v566, %v564
        %v629 = vpack.c.b16 %v567, %v565
        %v630 = vpack.c.b16 %v570, %v568
        %v631 = vpack.c.b16 %v571, %v569
        %v632 = vpack.c.b16 %v574, %v572
        %v633 = vpack.c.b16 %v575, %v573
        %v634 = vpack.c.b16 %v578, %v576
        %v635 = vpack.c.b16 %v579, %v577
        %v636 = vpack.c.b16 %v582, %v580
        %v637 = vpack.c.b16 %v583, %v581
        %v638 = vpack.c.b16 %v586, %v584
        %v639 = vpack.c.b16 %v587, %v585
        %v640 = vpack.c.b16 %v590, %v588
        %v641 = vpack.c.b16 %v591, %v589
        %v642 = vpack.c.b16 %v594, %v592
        %v643 = vpack.c.b16 %v595, %v593
        %v644 = vpack.c.b16 %v598, %v596
        %v645 = vpack.c.b16 %v599, %v597
        %v646 = vpack.c.b16 %v602, %v600
        %v647 = vpack.c.b16 %v603, %v601
        %v648 = vpack.c.b16 %v606, %v604
        %v649 = vpack.c.b16 %v607, %v605
        %v650 = vpack.c.b16 %v610, %v608
        %v651 = vpack.c.b16 %v611, %v609
        %v652 = vpack.c.b16 %v614, %v612
        %v653 = vpack.c.b16 %v615, %v613
        %v654 = vpack.c.b16 %v618, %v616
        %v655 = vpack.c.b16 %v619, %v617
        %v656 = vpack.c.b16 %v622, %v620
        %v657 = vpack.c.b16 %v623, %v621
        %v658 = vpack.c.b16 %v626, %v624
        %v659 = vpack.c.b16 %v627, %v625
        %v724 = vunpack.c.l.b16 %v500
        %v725 = vunpack.c.l.b16 %v501
        %v726 = vunpack.c.l.b16 %v502
        %v727 = vunpack.c.l.b16 %v503
        %v728 = vunpack.c.l.b16 %v504
        %v729 = vunpack.c.l.b16 %v505
        %v730 = vunpack.c.l.b16 %v506
        %v731 = vunpack.c.l.b16 %v507
        %v732 = vunpack.c.l.b16 %v508
        %v733 = vunpack.c.l.b16 %v509
        %v734 = vunpack.c.l.b16 %v510
        %v735 = vunpack.c.l.b16 %v511
        %v736 = vunpack.c.l.b16 %v512
        %v737 = vunpack.c.l.b16 %v513
        %v738 = vunpack.c.l.b16 %v514
        %v739 = vunpack.c.l.b16 %v515
        %v740 = vunpack.c.l.b16 %v516
        %v741 = vunpack.c.l.b16 %v517
        %v742 = vunpack.c.l.b16 %v518
        %v743 = vunpack.c.l.b16 %v519
        %v744 = vunpack.c.l.b16 %v520
        %v745 = vunpack.c.l.b16 %v521
        %v746 = vunpack.c.l.b16 %v522
        %v747 = vunpack.c.l.b16 %v523
        %v748 = vunpack.c.l.b16 %v524
        %v749 = vunpack.c.l.b16 %v525
        %v750 = vunpack.c.l.b16 %v526
        %v751 = vunpack.c.l.b16 %v527
        %v752 = vunpack.c.l.b16 %v528
        %v753 = vunpack.c.l.b16 %v529
        %v754 = vunpack.c.l.b16 %v530
        %v755 = vunpack.c.l.b16 %v531
        %v756 = vpack.c.b16 %v725, %v724
        %v757 = vpack.c.b16 %v727, %v726
        %v758 = vpack.c.b16 %v729, %v728
        %v759 = vpack.c.b16 %v731, %v730
        %v760 = vpack.c.b16 %v733, %v732
        %v761 = vpack.c.b16 %v735, %v734
        %v762 = vpack.c.b16 %v737, %v736
        %v763 = vpack.c.b16 %v739, %v738
        %v764 = vpack.c.b16 %v741, %v740
        %v765 = vpack.c.b16 %v743, %v742
        %v766 = vpack.c.b16 %v745, %v744
        %v767 = vpack.c.b16 %v747, %v746
        %v768 = vpack.c.b16 %v749, %v748
        %v769 = vpack.c.b16 %v751, %v750
        %v770 = vpack.c.b16 %v753, %v752
        %v771 = vpack.c.b16 %v755, %v754
        %788 = vmatpush.bf16.msra.mxu0 %v763
        %789 = vmatpush.bf16.msra.mxu0 %v762
        %790 = vmatpush.bf16.msra.mxu0 %v761
        %791 = vmatpush.bf16.msra.mxu0 %v760
        %792 = vmatpush.bf16.msra.mxu0 %v759
        %793 = vmatpush.bf16.msra.mxu0 %v758
        %794 = vmatpush.bf16.msra.mxu0 %v757
        %795 = vmatpush.bf16.msra.mxu0 %v756
        %796 = vmatmul.bf16.gmra.mxu0 %v628
        %v797 = vpop.f32.mrf.mxu0
        %v798 = vadd.f32 0.0, %v797
        %v799 = vpop.f32.mrf.mxu0
        %v800 = vadd.f32 0.0, %v799
        %801 = vmatmul.bf16.gmra.mxu0 %v630
        %v802 = vpop.f32.mrf.mxu0
        %v803 = vadd.f32 0.0, %v802
        %v804 = vpop.f32.mrf.mxu0
        %v805 = vadd.f32 0.0, %v804
        %806 = vmatmul.bf16.gmra.mxu0 %v632
        %v807 = vpop.f32.mrf.mxu0
        %v808 = vadd.f32 0.0, %v807
        %v809 = vpop.f32.mrf.mxu0
        %v810 = vadd.f32 0.0, %v809
        %811 = vmatmul.bf16.gmra.mxu0 %v634
        %v812 = vpop.f32.mrf.mxu0
        %v813 = vadd.f32 0.0, %v812
        %v814 = vpop.f32.mrf.mxu0
        %v815 = vadd.f32 0.0, %v814
        %816 = vmatmul.bf16.gmra.mxu0 %v636
        %v817 = vpop.f32.mrf.mxu0
        %v818 = vadd.f32 0.0, %v817
        %v819 = vpop.f32.mrf.mxu0
        %v820 = vadd.f32 0.0, %v819
        %821 = vmatmul.bf16.gmra.mxu0 %v638
        %v822 = vpop.f32.mrf.mxu0
        %v823 = vadd.f32 0.0, %v822
        %v824 = vpop.f32.mrf.mxu0
        %v825 = vadd.f32 0.0, %v824
        %826 = vmatmul.bf16.gmra.mxu0 %v640
        %v827 = vpop.f32.mrf.mxu0
        %v828 = vadd.f32 0.0, %v827
        %v829 = vpop.f32.mrf.mxu0
        %v830 = vadd.f32 0.0, %v829
        %831 = vmatmul.bf16.gmra.mxu0 %v642
        %v832 = vpop.f32.mrf.mxu0
        %v833 = vadd.f32 0.0, %v832
        %v834 = vpop.f32.mrf.mxu0
        %v835 = vadd.f32 0.0, %v834
        %836 = vmatmul.bf16.gmra.mxu0 %v644
        %v837 = vpop.f32.mrf.mxu0
        %v838 = vadd.f32 0.0, %v837
        %v839 = vpop.f32.mrf.mxu0
        %v840 = vadd.f32 0.0, %v839
        %841 = vmatmul.bf16.gmra.mxu0 %v646
        %v842 = vpop.f32.mrf.mxu0
        %v843 = vadd.f32 0.0, %v842
        %v844 = vpop.f32.mrf.mxu0
        %v845 = vadd.f32 0.0, %v844
        %846 = vmatmul.bf16.gmra.mxu0 %v648
        %v847 = vpop.f32.mrf.mxu0
        %v848 = vadd.f32 0.0, %v847
        %v849 = vpop.f32.mrf.mxu0
        %v850 = vadd.f32 0.0, %v849
        %851 = vmatmul.bf16.gmra.mxu0 %v650
        %v852 = vpop.f32.mrf.mxu0
        %v853 = vadd.f32 0.0, %v852
        %v854 = vpop.f32.mrf.mxu0
        %v855 = vadd.f32 0.0, %v854
        %856 = vmatmul.bf16.gmra.mxu0 %v652
        %v857 = vpop.f32.mrf.mxu0
        %v858 = vadd.f32 0.0, %v857
        %v859 = vpop.f32.mrf.mxu0
        %v860 = vadd.f32 0.0, %v859
        %861 = vmatmul.bf16.gmra.mxu0 %v654
        %v862 = vpop.f32.mrf.mxu0
        %v863 = vadd.f32 0.0, %v862
        %v864 = vpop.f32.mrf.mxu0
        %v865 = vadd.f32 0.0, %v864
        %866 = vmatmul.bf16.gmra.mxu0 %v656
        %v867 = vpop.f32.mrf.mxu0
        %v868 = vadd.f32 0.0, %v867
        %v869 = vpop.f32.mrf.mxu0
        %v870 = vadd.f32 0.0, %v869
        %871 = vmatmul.bf16.gmra.mxu0 %v658
        %v872 = vpop.f32.mrf.mxu0
        %v873 = vadd.f32 0.0, %v872
        %v874 = vpop.f32.mrf.mxu0
        %v875 = vadd.f32 0.0, %v874
        %876 = vdwg.mxu0
        %877 = vmatpush.bf16.msra.mxu0 %v771
        %878 = vmatpush.bf16.msra.mxu0 %v770
        %879 = vmatpush.bf16.msra.mxu0 %v769
        %880 = vmatpush.bf16.msra.mxu0 %v768
        %881 = vmatpush.bf16.msra.mxu0 %v767
        %882 = vmatpush.bf16.msra.mxu0 %v766
        %883 = vmatpush.bf16.msra.mxu0 %v765
        %884 = vmatpush.bf16.msra.mxu0 %v764
        %885 = vmatmul.bf16.gmra.mxu0 %v629
        %v886 = vpop.f32.mrf.mxu0
        %v887 = vadd.f32 %v798, %v886
        %v888 = vpop.f32.mrf.mxu0
        %v889 = vadd.f32 %v800, %v888
        %890 = vmatmul.bf16.gmra.mxu0 %v631
        %v891 = vpop.f32.mrf.mxu0
        %v892 = vadd.f32 %v803, %v891
        %v893 = vpop.f32.mrf.mxu0
        %v894 = vadd.f32 %v805, %v893
        %895 = vmatmul.bf16.gmra.mxu0 %v633
        %v896 = vpop.f32.mrf.mxu0
        %v897 = vadd.f32 %v808, %v896
        %v898 = vpop.f32.mrf.mxu0
        %v899 = vadd.f32 %v810, %v898
        %900 = vmatmul.bf16.gmra.mxu0 %v635
        %v901 = vpop.f32.mrf.mxu0
        %v902 = vadd.f32 %v813, %v901
        %v903 = vpop.f32.mrf.mxu0
        %v904 = vadd.f32 %v815, %v903
        %905 = vmatmul.bf16.gmra.mxu0 %v637
        %v906 = vpop.f32.mrf.mxu0
        %v907 = vadd.f32 %v818, %v906
        %v908 = vpop.f32.mrf.mxu0
        %v909 = vadd.f32 %v820, %v908
        %910 = vmatmul.bf16.gmra.mxu0 %v639
        %v911 = vpop.f32.mrf.mxu0
        %v912 = vadd.f32 %v823, %v911
        %v913 = vpop.f32.mrf.mxu0
        %v914 = vadd.f32 %v825, %v913
        %915 = vmatmul.bf16.gmra.mxu0 %v641
        %v916 = vpop.f32.mrf.mxu0
        %v917 = vadd.f32 %v828, %v916
        %v918 = vpop.f32.mrf.mxu0
        %v919 = vadd.f32 %v830, %v918
        %920 = vmatmul.bf16.gmra.mxu0 %v643
        %v921 = vpop.f32.mrf.mxu0
        %v922 = vadd.f32 %v833, %v921
        %v923 = vpop.f32.mrf.mxu0
        %v924 = vadd.f32 %v835, %v923
        %925 = vmatmul.bf16.gmra.mxu0 %v645
        %v926 = vpop.f32.mrf.mxu0
        %v927 = vadd.f32 %v838, %v926
        %v928 = vpop.f32.mrf.mxu0
        %v929 = vadd.f32 %v840, %v928
        %930 = vmatmul.bf16.gmra.mxu0 %v647
        %v931 = vpop.f32.mrf.mxu0
        %v932 = vadd.f32 %v843, %v931
        %v933 = vpop.f32.mrf.mxu0
        %v934 = vadd.f32 %v845, %v933
        %935 = vmatmul.bf16.gmra.mxu0 %v649
        %v936 = vpop.f32.mrf.mxu0
        %v937 = vadd.f32 %v848, %v936
        %v938 = vpop.f32.mrf.mxu0
        %v939 = vadd.f32 %v850, %v938
        %940 = vmatmul.bf16.gmra.mxu0 %v651
        %v941 = vpop.f32.mrf.mxu0
        %v942 = vadd.f32 %v853, %v941
        %v943 = vpop.f32.mrf.mxu0
        %v944 = vadd.f32 %v855, %v943
        %945 = vmatmul.bf16.gmra.mxu0 %v653
        %v946 = vpop.f32.mrf.mxu0
        %v947 = vadd.f32 %v858, %v946
        %v948 = vpop.f32.mrf.mxu0
        %v949 = vadd.f32 %v860, %v948
        %950 = vmatmul.bf16.gmra.mxu0 %v655
        %v951 = vpop.f32.mrf.mxu0
        %v952 = vadd.f32 %v863, %v951
        %v953 = vpop.f32.mrf.mxu0
        %v954 = vadd.f32 %v865, %v953
        %955 = vmatmul.bf16.gmra.mxu0 %v657
        %v956 = vpop.f32.mrf.mxu0
        %v957 = vadd.f32 %v868, %v956
        %v958 = vpop.f32.mrf.mxu0
        %v959 = vadd.f32 %v870, %v958
        %960 = vmatmul.bf16.gmra.mxu0 %v659
        %v961 = vpop.f32.mrf.mxu0
        %v962 = vadd.f32 %v873, %v961
        %v963 = vpop.f32.mrf.mxu0
        %v964 = vadd.f32 %v875, %v963
        %965 = vdwg.mxu0
        %v966 = vadd.f32 %v436, %v887
        %v967 = vadd.f32 %v437, %v889
        %v968 = vadd.f32 %v438, %v892
        %v969 = vadd.f32 %v439, %v894
        %v970 = vadd.f32 %v440, %v897
        %v971 = vadd.f32 %v441, %v899
        %v972 = vadd.f32 %v442, %v902
        %v973 = vadd.f32 %v443, %v904
        %v974 = vadd.f32 %v444, %v907
        %v975 = vadd.f32 %v445, %v909
        %v976 = vadd.f32 %v446, %v912
        %v977 = vadd.f32 %v447, %v914
        %v978 = vadd.f32 %v448, %v917
        %v979 = vadd.f32 %v449, %v919
        %v980 = vadd.f32 %v450, %v922
        %v981 = vadd.f32 %v451, %v924
        %v982 = vadd.f32 %v452, %v927
        %v983 = vadd.f32 %v453, %v929
        %v984 = vadd.f32 %v454, %v932
        %v985 = vadd.f32 %v455, %v934
        %v986 = vadd.f32 %v456, %v937
        %v987 = vadd.f32 %v457, %v939
        %v988 = vadd.f32 %v458, %v942
        %v989 = vadd.f32 %v459, %v944
        %v990 = vadd.f32 %v460, %v947
        %v991 = vadd.f32 %v461, %v949
        %v992 = vadd.f32 %v462, %v952
        %v993 = vadd.f32 %v463, %v954
        %v994 = vadd.f32 %v464, %v957
        %v995 = vadd.f32 %v465, %v959
        %v996 = vadd.f32 %v466, %v962
        %v997 = vadd.f32 %v467, %v964
        %998 = vst [vmem:[#allocation2] sm:$0xff] %v966
        %999 = vst [vmem:[#allocation2 + $0x8] sm:$0xff] %v967
        %1000 = vst [vmem:[#allocation2 + $0x10] sm:$0xff] %v968
        %1001 = vst [vmem:[#allocation2 + $0x18] sm:$0xff] %v969
        %1002 = vst [vmem:[#allocation2 + $0x20] sm:$0xff] %v970
        %1003 = vst [vmem:[#allocation2 + $0x28] sm:$0xff] %v971
        %1004 = vst [vmem:[#allocation2 + $0x30] sm:$0xff] %v972
        %1005 = vst [vmem:[#allocation2 + $0x38] sm:$0xff] %v973
        %1006 = vst [vmem:[#allocation2 + $0x40] sm:$0xff] %v974
        %1007 = vst [vmem:[#allocation2 + $0x48] sm:$0xff] %v975
        %1008 = vst [vmem:[#allocation2 + $0x50] sm:$0xff] %v976
        %1009 = vst [vmem:[#allocation2 + $0x58] sm:$0xff] %v977
        %1010 = vst [vmem:[#allocation2 + $0x60] sm:$0xff] %v978
        %1011 = vst [vmem:[#allocation2 + $0x68] sm:$0xff] %v979
        %1012 = vst [vmem:[#allocation2 + $0x70] sm:$0xff] %v980
        %1013 = vst [vmem:[#allocation2 + $0x78] sm:$0xff] %v981
        %1014 = vst [vmem:[#allocation2 + $0x80] sm:$0xff] %v982
        %1015 = vst [vmem:[#allocation2 + $0x88] sm:$0xff] %v983
        %1016 = vst [vmem:[#allocation2 + $0x90] sm:$0xff] %v984
        %1017 = vst [vmem:[#allocation2 + $0x98] sm:$0xff] %v985
        %1018 = vst [vmem:[#allocation2 + $0xa0] sm:$0xff] %v986
        %1019 = vst [vmem:[#allocation2 + $0xa8] sm:$0xff] %v987
        %1020 = vst [vmem:[#allocation2 + $0xb0] sm:$0xff] %v988
        %1021 = vst [vmem:[#allocation2 + $0xb8] sm:$0xff] %v989
        %1022 = vst [vmem:[#allocation2 + $0xc0] sm:$0xff] %v990
        %1023 = vst [vmem:[#allocation2 + $0xc8] sm:$0xff] %v991
        %1024 = vst [vmem:[#allocation2 + $0xd0] sm:$0xff] %v992
        %1025 = vst [vmem:[#allocation2 + $0xd8] sm:$0xff] %v993
        %1026 = vst [vmem:[#allocation2 + $0xe0] sm:$0xff] %v994
        %1027 = vst [vmem:[#allocation2 + $0xe8] sm:$0xff] %v995
        %1028 = vst [vmem:[#allocation2 + $0xf0] sm:$0xff] %v996
        %1029 = vst [vmem:[#allocation2 + $0xf8] sm:$0xff] %v997
        %p1030 = scmp.eq.s32.totalorder %s20, 1
        // Predicated region
        $region79: #{gnn_forward.2} parent=69 // pred_check
          %p1031 = pneg %p1030
        $region80: #{gnn_forward.2} parent=69 // pred_check_branch
          %1033 = sbr.rel (%p1031) target = $region82
        $region81: #{gnn_forward.2} parent=69 // pred_region
          %v1034 = vld [vmem:[#allocation2] sm:$0xff]
          %v1035 = vld [vmem:[#allocation2 + $0x8] sm:$0xff]
          %v1036 = vld [vmem:[#allocation2 + $0x10] sm:$0xff]
          %v1037 = vld [vmem:[#allocation2 + $0x18] sm:$0xff]
          %v1038 = vld [vmem:[#allocation2 + $0x20] sm:$0xff]
          %v1039 = vld [vmem:[#allocation2 + $0x28] sm:$0xff]
          %v1040 = vld [vmem:[#allocation2 + $0x30] sm:$0xff]
          %v1041 = vld [vmem:[#allocation2 + $0x38] sm:$0xff]
          %v1042 = vld [vmem:[#allocation2 + $0x40] sm:$0xff]
          %v1043 = vld [vmem:[#allocation2 + $0x48] sm:$0xff]
          %v1044 = vld [vmem:[#allocation2 + $0x50] sm:$0xff]
          %v1045 = vld [vmem:[#allocation2 + $0x58] sm:$0xff]
          %v1046 = vld [vmem:[#allocation2 + $0x60] sm:$0xff]
          %v1047 = vld [vmem:[#allocation2 + $0x68] sm:$0xff]
          %v1048 = vld [vmem:[#allocation2 + $0x70] sm:$0xff]
          %v1049 = vld [vmem:[#allocation2 + $0x78] sm:$0xff]
          %v1050 = vld [vmem:[#allocation2 + $0x80] sm:$0xff]
          %v1051 = vld [vmem:[#allocation2 + $0x88] sm:$0xff]
          %v1052 = vld [vmem:[#allocation2 + $0x90] sm:$0xff]
          %v1053 = vld [vmem:[#allocation2 + $0x98] sm:$0xff]
          %v1054 = vld [vmem:[#allocation2 + $0xa0] sm:$0xff]
          %v1055 = vld [vmem:[#allocation2 + $0xa8] sm:$0xff]
          %v1056 = vld [vmem:[#allocation2 + $0xb0] sm:$0xff]
          %v1057 = vld [vmem:[#allocation2 + $0xb8] sm:$0xff]
          %v1058 = vld [vmem:[#allocation2 + $0xc0] sm:$0xff]
          %v1059 = vld [vmem:[#allocation2 + $0xc8] sm:$0xff]
          %v1060 = vld [vmem:[#allocation2 + $0xd0] sm:$0xff]
          %v1061 = vld [vmem:[#allocation2 + $0xd8] sm:$0xff]
          %v1062 = vld [vmem:[#allocation2 + $0xe0] sm:$0xff]
          %v1063 = vld [vmem:[#allocation2 + $0xe8] sm:$0xff]
          %v1064 = vld [vmem:[#allocation2 + $0xf0] sm:$0xff]
          %v1065 = vld [vmem:[#allocation2 + $0xf8] sm:$0xff]
          %v1066 = vpack.c.bf16 %v1035, %v1034
          %v1067 = vpack.c.bf16 %v1037, %v1036
          %v1068 = vpack.c.bf16 %v1039, %v1038
          %v1069 = vpack.c.bf16 %v1041, %v1040
          %v1070 = vpack.c.bf16 %v1043, %v1042
          %v1071 = vpack.c.bf16 %v1045, %v1044
          %v1072 = vpack.c.bf16 %v1047, %v1046
          %v1073 = vpack.c.bf16 %v1049, %v1048
          %v1074 = vpack.c.bf16 %v1051, %v1050
          %v1075 = vpack.c.bf16 %v1053, %v1052
          %v1076 = vpack.c.bf16 %v1055, %v1054
          %v1077 = vpack.c.bf16 %v1057, %v1056
          %v1078 = vpack.c.bf16 %v1059, %v1058
          %v1079 = vpack.c.bf16 %v1061, %v1060
          %v1080 = vpack.c.bf16 %v1063, %v1062
          %v1081 = vpack.c.bf16 %v1065, %v1064
          %v1082 = vld [vmem:[%s2] sm:$0xf]
          %v1083 = vld [vmem:[%s2 + $0x4] sm:$0xf]
          %v1084 = vld [vmem:[%s2 + $0x8] sm:$0xf]
          %v1085 = vld [vmem:[%s2 + $0xc] sm:$0xf]
          %v1086 = vld [vmem:[%s2 + $0x10] sm:$0xf]
          %v1087 = vld [vmem:[%s2 + $0x14] sm:$0xf]
          %v1088 = vld [vmem:[%s2 + $0x18] sm:$0xf]
          %v1089 = vld [vmem:[%s2 + $0x1c] sm:$0xf]
          %v1090 = vld [vmem:[%s2 + $0x20] sm:$0xf]
          %v1091 = vld [vmem:[%s2 + $0x24] sm:$0xf]
          %v1092 = vld [vmem:[%s2 + $0x28] sm:$0xf]
          %v1093 = vld [vmem:[%s2 + $0x2c] sm:$0xf]
          %v1094 = vld [vmem:[%s2 + $0x30] sm:$0xf]
          %v1095 = vld [vmem:[%s2 + $0x34] sm:$0xf]
          %v1096 = vld [vmem:[%s2 + $0x38] sm:$0xf]
          %v1097 = vld [vmem:[%s2 + $0x3c] sm:$0xf]
          %v1098 = vld [vmem:[%s3] sm:$0x1]
          %v1100 = vperm.slane %v1098, 0
          %v1118 = vunpack.c.l.b16 %v1082
          %v1119 = vunpack.c.l.b16 %v1083
          %v1120 = vunpack.c.l.b16 %v1084
          %v1121 = vunpack.c.l.b16 %v1085
          %v1122 = vunpack.c.l.b16 %v1086
          %v1123 = vunpack.c.l.b16 %v1087
          %v1124 = vunpack.c.l.b16 %v1088
          %v1125 = vunpack.c.l.b16 %v1089
          %v1126 = vunpack.c.l.b16 %v1090
          %v1127 = vunpack.c.l.b16 %v1091
          %v1128 = vunpack.c.l.b16 %v1092
          %v1129 = vunpack.c.l.b16 %v1093
          %v1130 = vunpack.c.l.b16 %v1094
          %v1131 = vunpack.c.l.b16 %v1095
          %v1132 = vunpack.c.l.b16 %v1096
          %v1133 = vunpack.c.l.b16 %v1097
          %v1134 = vpack.c.b16 %v1119, %v1118
          %v1135 = vpack.c.b16 %v1121, %v1120
          %v1136 = vpack.c.b16 %v1123, %v1122
          %v1137 = vpack.c.b16 %v1125, %v1124
          %v1138 = vpack.c.b16 %v1127, %v1126
          %v1139 = vpack.c.b16 %v1129, %v1128
          %v1140 = vpack.c.b16 %v1131, %v1130
          %v1141 = vpack.c.b16 %v1133, %v1132
          %1150 = vmatpush.bf16.msra.mxu0 %v1141
          %1151 = vmatpush.bf16.msra.mxu0 %v1140
          %1152 = vmatpush.bf16.msra.mxu0 %v1139
          %1153 = vmatpush.bf16.msra.mxu0 %v1138
          %1154 = vmatpush.bf16.msra.mxu0 %v1137
          %1155 = vmatpush.bf16.msra.mxu0 %v1136
          %1156 = vmatpush.bf16.msra.mxu0 %v1135
          %1157 = vmatpush.bf16.msra.mxu0 %v1134
          %1158 = vmatmul.bf16.gmra.mxu0 %v1066
          %v1159 = vpop.f32.mrf.mxu0
          %v1160 = vadd.f32 %v1100, %v1159
          %v1161 = vpop.f32.mrf.mxu0
          %v1162 = vadd.f32 %v1100, %v1161
          %1163 = vmatmul.bf16.gmra.mxu0 %v1067
          %v1164 = vpop.f32.mrf.mxu0
          %v1165 = vadd.f32 %v1100, %v1164
          %v1166 = vpop.f32.mrf.mxu0
          %v1167 = vadd.f32 %v1100, %v1166
          %1168 = vmatmul.bf16.gmra.mxu0 %v1068
          %v1169 = vpop.f32.mrf.mxu0
          %v1170 = vadd.f32 %v1100, %v1169
          %v1171 = vpop.f32.mrf.mxu0
          %v1172 = vadd.f32 %v1100, %v1171
          %1173 = vmatmul.bf16.gmra.mxu0 %v1069
          %v1174 = vpop.f32.mrf.mxu0
          %v1175 = vadd.f32 %v1100, %v1174
          %v1176 = vpop.f32.mrf.mxu0
          %v1177 = vadd.f32 %v1100, %v1176
          %1178 = vmatmul.bf16.gmra.mxu0 %v1070
          %v1179 = vpop.f32.mrf.mxu0
          %v1180 = vadd.f32 %v1100, %v1179
          %v1181 = vpop.f32.mrf.mxu0
          %v1182 = vadd.f32 %v1100, %v1181
          %1183 = vmatmul.bf16.gmra.mxu0 %v1071
          %v1184 = vpop.f32.mrf.mxu0
          %v1185 = vadd.f32 %v1100, %v1184
          %v1186 = vpop.f32.mrf.mxu0
          %v1187 = vadd.f32 %v1100, %v1186
          %1188 = vmatmul.bf16.gmra.mxu0 %v1072
          %v1189 = vpop.f32.mrf.mxu0
          %v1190 = vadd.f32 %v1100, %v1189
          %v1191 = vpop.f32.mrf.mxu0
          %v1192 = vadd.f32 %v1100, %v1191
          %1193 = vmatmul.bf16.gmra.mxu0 %v1073
          %v1194 = vpop.f32.mrf.mxu0
          %v1195 = vadd.f32 %v1100, %v1194
          %v1196 = vpop.f32.mrf.mxu0
          %v1197 = vadd.f32 %v1100, %v1196
          %1198 = vmatmul.bf16.gmra.mxu0 %v1074
          %v1199 = vpop.f32.mrf.mxu0
          %v1200 = vadd.f32 %v1100, %v1199
          %v1201 = vpop.f32.mrf.mxu0
          %v1202 = vadd.f32 %v1100, %v1201
          %1203 = vmatmul.bf16.gmra.mxu0 %v1075
          %v1204 = vpop.f32.mrf.mxu0
          %v1205 = vadd.f32 %v1100, %v1204
          %v1206 = vpop.f32.mrf.mxu0
          %v1207 = vadd.f32 %v1100, %v1206
          %1208 = vmatmul.bf16.gmra.mxu0 %v1076
          %v1209 = vpop.f32.mrf.mxu0
          %v1210 = vadd.f32 %v1100, %v1209
          %v1211 = vpop.f32.mrf.mxu0
          %v1212 = vadd.f32 %v1100, %v1211
          %1213 = vmatmul.bf16.gmra.mxu0 %v1077
          %v1214 = vpop.f32.mrf.mxu0
          %v1215 = vadd.f32 %v1100, %v1214
          %v1216 = vpop.f32.mrf.mxu0
          %v1217 = vadd.f32 %v1100, %v1216
          %1218 = vmatmul.bf16.gmra.mxu0 %v1078
          %v1219 = vpop.f32.mrf.mxu0
          %v1220 = vadd.f32 %v1100, %v1219
          %v1221 = vpop.f32.mrf.mxu0
          %v1222 = vadd.f32 %v1100, %v1221
          %1223 = vmatmul.bf16.gmra.mxu0 %v1079
          %v1224 = vpop.f32.mrf.mxu0
          %v1225 = vadd.f32 %v1100, %v1224
          %v1226 = vpop.f32.mrf.mxu0
          %v1227 = vadd.f32 %v1100, %v1226
          %1228 = vmatmul.bf16.gmra.mxu0 %v1080
          %v1229 = vpop.f32.mrf.mxu0
          %v1230 = vadd.f32 %v1100, %v1229
          %v1231 = vpop.f32.mrf.mxu0
          %v1232 = vadd.f32 %v1100, %v1231
          %1233 = vmatmul.bf16.gmra.mxu0 %v1081
          %v1234 = vpop.f32.mrf.mxu0
          %v1235 = vadd.f32 %v1100, %v1234
          %v1236 = vpop.f32.mrf.mxu0
          %v1237 = vadd.f32 %v1100, %v1236
          %1238 = vdwg.mxu0
          %v1239 = vmax.f32 %v1160, 0.0
          %v1240 = vmax.f32 %v1162, 0.0
          %v1241 = vmax.f32 %v1165, 0.0
          %v1242 = vmax.f32 %v1167, 0.0
          %v1243 = vmax.f32 %v1170, 0.0
          %v1244 = vmax.f32 %v1172, 0.0
          %v1245 = vmax.f32 %v1175, 0.0
          %v1246 = vmax.f32 %v1177, 0.0
          %v1247 = vmax.f32 %v1180, 0.0
          %v1248 = vmax.f32 %v1182, 0.0
          %v1249 = vmax.f32 %v1185, 0.0
          %v1250 = vmax.f32 %v1187, 0.0
          %v1251 = vmax.f32 %v1190, 0.0
          %v1252 = vmax.f32 %v1192, 0.0
          %v1253 = vmax.f32 %v1195, 0.0
          %v1254 = vmax.f32 %v1197, 0.0
          %v1255 = vmax.f32 %v1200, 0.0
          %v1256 = vmax.f32 %v1202, 0.0
          %v1257 = vmax.f32 %v1205, 0.0
          %v1258 = vmax.f32 %v1207, 0.0
          %v1259 = vmax.f32 %v1210, 0.0
          %v1260 = vmax.f32 %v1212, 0.0
          %v1261 = vmax.f32 %v1215, 0.0
          %v1262 = vmax.f32 %v1217, 0.0
          %v1263 = vmax.f32 %v1220, 0.0
          %v1264 = vmax.f32 %v1222, 0.0
          %v1265 = vmax.f32 %v1225, 0.0
          %v1266 = vmax.f32 %v1227, 0.0
          %v1267 = vmax.f32 %v1230, 0.0
          %v1268 = vmax.f32 %v1232, 0.0
          %v1269 = vmax.f32 %v1235, 0.0
          %v1270 = vmax.f32 %v1237, 0.0
          %v1271 = vpack.c.bf16 %v1239, %v1239
          %v1272 = vpack.c.bf16 %v1240, %v1240
          %v1273 = vpack.c.bf16 %v1241, %v1241
          %v1274 = vpack.c.bf16 %v1242, %v1242
          %v1275 = vpack.c.bf16 %v1243, %v1243
          %v1276 = vpack.c.bf16 %v1244, %v1244
          %v1277 = vpack.c.bf16 %v1245, %v1245
          %v1278 = vpack.c.bf16 %v1246, %v1246
          %v1279 = vpack.c.bf16 %v1247, %v1247
          %v1280 = vpack.c.bf16 %v1248, %v1248
          %v1281 = vpack.c.bf16 %v1249, %v1249
          %v1282 = vpack.c.bf16 %v1250, %v1250
          %v1283 = vpack.c.bf16 %v1251, %v1251
          %v1284 = vpack.c.bf16 %v1252, %v1252
          %v1285 = vpack.c.bf16 %v1253, %v1253
          %v1286 = vpack.c.bf16 %v1254, %v1254
          %v1287 = vpack.c.bf16 %v1255, %v1255
          %v1288 = vpack.c.bf16 %v1256, %v1256
          %v1289 = vpack.c.bf16 %v1257, %v1257
          %v1290 = vpack.c.bf16 %v1258, %v1258
          %v1291 = vpack.c.bf16 %v1259, %v1259
          %v1292 = vpack.c.bf16 %v1260, %v1260
          %v1293 = vpack.c.bf16 %v1261, %v1261
          %v1294 = vpack.c.bf16 %v1262, %v1262
          %v1295 = vpack.c.bf16 %v1263, %v1263
          %v1296 = vpack.c.bf16 %v1264, %v1264
          %v1297 = vpack.c.bf16 %v1265, %v1265
          %v1298 = vpack.c.bf16 %v1266, %v1266
          %v1299 = vpack.c.bf16 %v1267, %v1267
          %v1300 = vpack.c.bf16 %v1268, %v1268
          %v1301 = vpack.c.bf16 %v1269, %v1269
          %v1302 = vpack.c.bf16 %v1270, %v1270
          %1303 = vst [vmem:[%s398] sm:$0xf] %v1271
          %1304 = vst [vmem:[%s398 + $0x4] sm:$0xf] %v1272
          %1305 = vst [vmem:[%s398 + $0x8] sm:$0xf] %v1273
          %1306 = vst [vmem:[%s398 + $0xc] sm:$0xf] %v1274
          %1307 = vst [vmem:[%s398 + $0x10] sm:$0xf] %v1275
          %1308 = vst [vmem:[%s398 + $0x14] sm:$0xf] %v1276
          %1309 = vst [vmem:[%s398 + $0x18] sm:$0xf] %v1277
          %1310 = vst [vmem:[%s398 + $0x1c] sm:$0xf] %v1278
          %1311 = vst [vmem:[%s398 + $0x20] sm:$0xf] %v1279
          %1312 = vst [vmem:[%s398 + $0x24] sm:$0xf] %v1280
          %1313 = vst [vmem:[%s398 + $0x28] sm:$0xf] %v1281
          %1314 = vst [vmem:[%s398 + $0x2c] sm:$0xf] %v1282
          %1315 = vst [vmem:[%s398 + $0x30] sm:$0xf] %v1283
          %1316 = vst [vmem:[%s398 + $0x34] sm:$0xf] %v1284
          %1317 = vst [vmem:[%s398 + $0x38] sm:$0xf] %v1285
          %1318 = vst [vmem:[%s398 + $0x3c] sm:$0xf] %v1286
          %1319 = vst [vmem:[%s398 + $0x40] sm:$0xf] %v1287
          %1320 = vst [vmem:[%s398 + $0x44] sm:$0xf] %v1288
          %1321 = vst [vmem:[%s398 + $0x48] sm:$0xf] %v1289
          %1322 = vst [vmem:[%s398 + $0x4c] sm:$0xf] %v1290
          %1323 = vst [vmem:[%s398 + $0x50] sm:$0xf] %v1291
          %1324 = vst [vmem:[%s398 + $0x54] sm:$0xf] %v1292
          %1325 = vst [vmem:[%s398 + $0x58] sm:$0xf] %v1293
          %1326 = vst [vmem:[%s398 + $0x5c] sm:$0xf] %v1294
          %1327 = vst [vmem:[%s398 + $0x60] sm:$0xf] %v1295
          %1328 = vst [vmem:[%s398 + $0x64] sm:$0xf] %v1296
          %1329 = vst [vmem:[%s398 + $0x68] sm:$0xf] %v1297
          %1330 = vst [vmem:[%s398 + $0x6c] sm:$0xf] %v1298
          %1331 = vst [vmem:[%s398 + $0x70] sm:$0xf] %v1299
          %1332 = vst [vmem:[%s398 + $0x74] sm:$0xf] %v1300
          %1333 = vst [vmem:[%s398 + $0x78] sm:$0xf] %v1301
          %1334 = vst [vmem:[%s398 + $0x7c] sm:$0xf] %v1302
        $region82: #{gnn_forward.2} parent=69 // pred_fallthru
          _
        %s1335 = smul.u32 32, %s19
        %p1336 = scmp.lt.s32.totalorder %s1335, 63
        %s1337 = scalar_select %p1336, %s1335, 63
        %s1338 = smul.addr %s1337, 4
        %s1339 = scalar_lea.vmem %s4, %s1338
        // Predicated region
        $region83: #{gnn_forward.2} parent=69 // pred_check
          %p1340 = pneg %p141
        $region84: #{gnn_forward.2} parent=69 // pred_check_branch
          %1342 = sbr.rel (%p1340) target = $region86
        $region85: #{gnn_forward.2} parent=69 // pred_region
          %s1343 = smul.u32 32, %s19
        $region86: #{gnn_forward.2} parent=69 // pred_fallthru
          _
      $region70: #{gnn_forward.2} parent=5 // pred_fallthru
        _
      %p1344 = scmp.le.s32.totalorder 2, %s10
      // Predicated region
      $region87: #{gnn_forward.2} parent=5 // pred_check
        %p1345 = pneg %p1344
      $region88: #{gnn_forward.2} parent=5 // pred_check_branch
        %1347 = sbr.rel (%p1345) target = $region90
      $region89: #{gnn_forward.2} parent=5 // pred_region
        %s1348 = ssub.s32 %s10, 2
        // Predicated region
        $region91: #{gnn_forward.2} parent=89 // pred_check
          %p1349 = pneg %p147
        $region92: #{gnn_forward.2} parent=89 // pred_check_branch
          %1351 = sbr.rel (%p1349) target = $region94
        $region93: #{gnn_forward.2} parent=89 // pred_region
          %s1352 = smul.u32 32, %s21
          %p1353 = scmp.lt.s32.totalorder %s1352, 63
          %s1354 = scalar_select %p1353, %s1352, 63
          %s1355 = smul.addr %s1354, 4
          %s1356 = scalar_lea.vmem %s4, %s1355
        $region94: #{gnn_forward.2} parent=89 // pred_fallthru
          _
      $region90: #{gnn_forward.2} parent=5 // pred_fallthru
        _
    $region6: #{gnn_forward.2} parent=1 // loop_footer
      %s14 = sadd.s32 1, %s10
    $region7: #{gnn_forward.2} parent=1 // loop_footer_branch
      %9 = sbr.rel target = $region3
    $region8: #{gnn_forward.2} parent=1 // loop_exit
      _

// kernel: gnn_forward.3
$region0: #{gnn_forward.3}
  #allocation0 [shape = 'u32[]', space=smem, size = 0x4, offset = 0x4, fixed_abs, tag = 'smem constant byte address 0x4 - core index']
  #allocation1 [shape = 'u32[72,128]{1,0:T(1,128)}', space=vmem, size = 0x9000, scoped, tag = 'internal scratch']
  #allocation2 [shape = 'f32[256,128]{1,0:T(8,128)}', space=vmem, size = 0x20000, scoped, tag = 'scratch operand']
  %s0 = inlined_call_operand.vmem [shape: bf16[512,512], index: 0, kind: input, shape index: {}]
  %s1 = inlined_call_operand.vmem [shape: bf16[512,128], index: 1, kind: input, shape index: {}]
  %s2 = inlined_call_operand.vmem [shape: bf16[128,128], index: 2, kind: input, shape index: {}]
  %s3 = inlined_call_operand.vmem [shape: f32[1,128], index: 3, kind: input, shape index: {}]
  %s4 = inlined_call_operand.vmem [shape: bf16[128,128], index: 4, kind: input, shape index: {}]
  %s5 = inlined_call_operand.vmem [shape: f32[1,128], index: 5, kind: input, shape index: {}]
  %s6 = inlined_call_operand.vmem [shape: f32[512,128], index: 6, kind: output, shape index: {}]
  %s7 = sld [smem:[#allocation0]]
  $region103: #{gnn_forward.3} parent=0
    _
  %s9 = ssub.s32 1, %s7
  %s10 = scalar_select 0, %s9, %s7
  $region1: #{gnn_forward.3} parent=0
    #allocation3 [shape = 'u8[262144]{0}', space=vmem, size = 0x40000, scoped, tag = 'input window, operand 0']
    loop: start=0, step=1, limit=6
    $region2: #{gnn_forward.3} parent=1 // loop_pre_header
      _
    $region3: #{gnn_forward.3} parent=1 // loop_header
      %s12 = sphi 0, %s16
      %p13 = scmp.ge.s32.totalorder %s12, 6
      %s19 = sphi 0, %s31
      %s20 = sphi 0, %s27
      %s21 = sphi 0, %s19
      %s22 = sphi 0, %s20
      %s23 = sphi 0, %s21
      %s24 = sphi 0, %s22
      %s36 = sphi 0, %s38
      %s39 = sphi 0, %s36
      %s40 = sphi 0, %s39
      %s56 = sphi 0, %s40
      %s62 = sphi 0, %s64
      %s65 = sphi 0, %s62
      %s66 = sphi 0, %s65
      %s82 = sphi 0, %s66
      %s86 = sphi 0, %s86
      %s88 = sphi 0, %s86
      %s89 = sphi 0, %s88
      %s103 = sphi 0, %s89
      %s107 = sphi 0, %s107
      %s109 = sphi 0, %s107
      %s110 = sphi 0, %s109
      %s124 = sphi 0, %s110
      %s128 = sphi 0, %s128
      %s130 = sphi 0, %s128
      %s131 = sphi 0, %s130
      %s145 = sphi 0, %s131
      %s149 = sphi 0, %s149
      %s151 = sphi 0, %s149
      %s152 = sphi 0, %s151
      %s166 = sphi 0, %s152
      %s172 = sphi 0, %s174
      %s175 = sphi 0, %s172
      %s176 = sphi 0, %s175
      %s192 = sphi 0, %s176
    $region4: #{gnn_forward.3} parent=1 // loop_header_branch
      %15 = sbr.rel (%p13) target = $region8
    $region5: #{gnn_forward.3} parent=1 // loop_body
      %s17 = ssub.s32 %s12, 1
      %s18 = ssub.s32 %s12, 2
      %s25 = sadd.s32 1, %s20
      %p26 = scmp.ge.s32.totalorder %s25, 2
      %s27 = scalar_select %p26, 0, %s25
      %s28 = sadd.s32 1, %s19
      %s29 = scalar_select %p26, %s28, %s19
      %p30 = scmp.ge.s32.totalorder %s29, 2
      %s31 = scalar_select %p30, 0, %s29
      %s32 = ssub.s32 %s19, %s31
      %s33 = ssub.s32 %s20, %s27
      %s34 = sor.u32 %s32, %s33
      %p35 = scmp.eq.s32.totalorder %s34, 0
      %s37 = sadd.s32 %s36, 1
      %s38 = scalar_select %p35, %s36, %s37
      %p41 = pneg %p35
      %p42 = scmp.eq.s32.totalorder %s12, 3
      %p43 = por %p41, %p42
      %p44 = scmp.ne.s32.totalorder %s36, %s39
      %p45 = scmp.eq.s32.totalorder %s12, 0
      %p46 = por %p44, %p45
      %p47 = scmp.ne.s32.totalorder %s36, %s39
      %p48 = scmp.eq.s32.totalorder %s17, 3
      %p49 = por %p47, %p48
      %p50 = scmp.ne.s32.totalorder %s39, %s40
      %p51 = scmp.eq.s32.totalorder %s17, 0
      %p52 = por %p50, %p51
      %p53 = scmp.ne.s32.totalorder %s39, %s40
      %p54 = scmp.eq.s32.totalorder %s18, 3
      %p55 = por %p53, %p54
      %p57 = scmp.ne.s32.totalorder %s40, %s56
      %p58 = scmp.eq.s32.totalorder %s18, 0
      %p59 = por %p57, %p58
      %s60 = ssub.s32 %s20, %s27
      %p61 = scmp.eq.s32.totalorder %s60, 0
      %s63 = sadd.s32 %s62, 1
      %s64 = scalar_select %p61, %s62, %s63
      %p67 = pneg %p61
      %p68 = scmp.eq.s32.totalorder %s12, 3
      %p69 = por %p67, %p68
      %p70 = scmp.ne.s32.totalorder %s62, %s65
      %p71 = scmp.eq.s32.totalorder %s12, 0
      %p72 = por %p70, %p71
      %p73 = scmp.ne.s32.totalorder %s62, %s65
      %p74 = scmp.eq.s32.totalorder %s17, 3
      %p75 = por %p73, %p74
      %p76 = scmp.ne.s32.totalorder %s65, %s66
      %p77 = scmp.eq.s32.totalorder %s17, 0
      %p78 = por %p76, %p77
      %p79 = scmp.ne.s32.totalorder %s65, %s66
      %p80 = scmp.eq.s32.totalorder %s18, 3
      %p81 = por %p79, %p80
      %p83 = scmp.ne.s32.totalorder %s66, %s82
      %p84 = scmp.eq.s32.totalorder %s18, 0
      %p85 = por %p83, %p84
      %s87 = sadd.s32 %s86, 1
      %p90 = scmp.eq.s32.totalorder %s12, 3
      %p91 = scmp.ne.s32.totalorder %s86, %s88
      %p92 = scmp.eq.s32.totalorder %s12, 0
      %p93 = por %p91, %p92
      %p94 = scmp.ne.s32.totalorder %s86, %s88
      %p95 = scmp.eq.s32.totalorder %s17, 3
      %p96 = por %p94, %p95
      %p97 = scmp.ne.s32.totalorder %s88, %s89
      %p98 = scmp.eq.s32.totalorder %s17, 0
      %p99 = por %p97, %p98
      %p100 = scmp.ne.s32.totalorder %s88, %s89
      %p101 = scmp.eq.s32.totalorder %s18, 3
      %p102 = por %p100, %p101
      %p104 = scmp.ne.s32.totalorder %s89, %s103
      %p105 = scmp.eq.s32.totalorder %s18, 0
      %p106 = por %p104, %p105
      %s108 = sadd.s32 %s107, 1
      %p111 = scmp.eq.s32.totalorder %s12, 3
      %p112 = scmp.ne.s32.totalorder %s107, %s109
      %p113 = scmp.eq.s32.totalorder %s12, 0
      %p114 = por %p112, %p113
      %p115 = scmp.ne.s32.totalorder %s107, %s109
      %p116 = scmp.eq.s32.totalorder %s17, 3
      %p117 = por %p115, %p116
      %p118 = scmp.ne.s32.totalorder %s109, %s110
      %p119 = scmp.eq.s32.totalorder %s17, 0
      %p120 = por %p118, %p119
      %p121 = scmp.ne.s32.totalorder %s109, %s110
      %p122 = scmp.eq.s32.totalorder %s18, 3
      %p123 = por %p121, %p122
      %p125 = scmp.ne.s32.totalorder %s110, %s124
      %p126 = scmp.eq.s32.totalorder %s18, 0
      %p127 = por %p125, %p126
      %s129 = sadd.s32 %s128, 1
      %p132 = scmp.eq.s32.totalorder %s12, 3
      %p133 = scmp.ne.s32.totalorder %s128, %s130
      %p134 = scmp.eq.s32.totalorder %s12, 0
      %p135 = por %p133, %p134
      %p136 = scmp.ne.s32.totalorder %s128, %s130
      %p137 = scmp.eq.s32.totalorder %s17, 3
      %p138 = por %p136, %p137
      %p139 = scmp.ne.s32.totalorder %s130, %s131
      %p140 = scmp.eq.s32.totalorder %s17, 0
      %p141 = por %p139, %p140
      %p142 = scmp.ne.s32.totalorder %s130, %s131
      %p143 = scmp.eq.s32.totalorder %s18, 3
      %p144 = por %p142, %p143
      %p146 = scmp.ne.s32.totalorder %s131, %s145
      %p147 = scmp.eq.s32.totalorder %s18, 0
      %p148 = por %p146, %p147
      %s150 = sadd.s32 %s149, 1
      %p153 = scmp.eq.s32.totalorder %s12, 3
      %p154 = scmp.ne.s32.totalorder %s149, %s151
      %p155 = scmp.eq.s32.totalorder %s12, 0
      %p156 = por %p154, %p155
      %p157 = scmp.ne.s32.totalorder %s149, %s151
      %p158 = scmp.eq.s32.totalorder %s17, 3
      %p159 = por %p157, %p158
      %p160 = scmp.ne.s32.totalorder %s151, %s152
      %p161 = scmp.eq.s32.totalorder %s17, 0
      %p162 = por %p160, %p161
      %p163 = scmp.ne.s32.totalorder %s151, %s152
      %p164 = scmp.eq.s32.totalorder %s18, 3
      %p165 = por %p163, %p164
      %p167 = scmp.ne.s32.totalorder %s152, %s166
      %p168 = scmp.eq.s32.totalorder %s18, 0
      %p169 = por %p167, %p168
      %s170 = ssub.s32 %s19, %s31
      %p171 = scmp.eq.s32.totalorder %s170, 0
      %s173 = sadd.s32 %s172, 1
      %s174 = scalar_select %p171, %s172, %s173
      %p177 = pneg %p171
      %p178 = scmp.eq.s32.totalorder %s12, 3
      %p179 = por %p177, %p178
      %p180 = scmp.ne.s32.totalorder %s172, %s175
      %p181 = scmp.eq.s32.totalorder %s12, 0
      %p182 = por %p180, %p181
      %p183 = scmp.ne.s32.totalorder %s172, %s175
      %p184 = scmp.eq.s32.totalorder %s17, 3
      %p185 = por %p183, %p184
      %p186 = scmp.ne.s32.totalorder %s175, %s176
      %p187 = scmp.eq.s32.totalorder %s17, 0
      %p188 = por %p186, %p187
      %p189 = scmp.ne.s32.totalorder %s175, %s176
      %p190 = scmp.eq.s32.totalorder %s18, 3
      %p191 = por %p189, %p190
      %p193 = scmp.ne.s32.totalorder %s176, %s192
      %p194 = scmp.eq.s32.totalorder %s18, 0
      %p195 = por %p193, %p194
      %p196 = scmp.le.s32.totalorder 1, %s12
      %p197 = scmp.lt.s32.totalorder %s12, 5
      %p198 = pnand %p196, %p197
      %p199 = pneg %p198
      // Predicated region
      $region9: #{gnn_forward.3} parent=5 // pred_check
        _
      $region10: #{gnn_forward.3} parent=5 // pred_check_branch
        %201 = sbr.rel (%p198) target = $region12
      $region11: #{gnn_forward.3} parent=5 // pred_region
        %s202 = ssub.s32 %s12, 1
        // Predicated region
        $region13: #{gnn_forward.3} parent=11 // pred_check
          %p203 = pneg %p99
        $region14: #{gnn_forward.3} parent=11 // pred_check_branch
          %205 = sbr.rel (%p203) target = $region16
        $region15: #{gnn_forward.3} parent=11 // pred_region
          _
        $region16: #{gnn_forward.3} parent=11 // pred_fallthru
          _
        // Predicated region
        $region17: #{gnn_forward.3} parent=11 // pred_check
          %p206 = pneg %p120
        $region18: #{gnn_forward.3} parent=11 // pred_check_branch
          %208 = sbr.rel (%p206) target = $region20
        $region19: #{gnn_forward.3} parent=11 // pred_region
          _
        $region20: #{gnn_forward.3} parent=11 // pred_fallthru
          _
        // Predicated region
        $region21: #{gnn_forward.3} parent=11 // pred_check
          %p209 = pneg %p141
        $region22: #{gnn_forward.3} parent=11 // pred_check_branch
          %211 = sbr.rel (%p209) target = $region24
        $region23: #{gnn_forward.3} parent=11 // pred_region
          _
        $region24: #{gnn_forward.3} parent=11 // pred_fallthru
          _
        // Predicated region
        $region25: #{gnn_forward.3} parent=11 // pred_check
          %p212 = pneg %p162
        $region26: #{gnn_forward.3} parent=11 // pred_check_branch
          %214 = sbr.rel (%p212) target = $region28
        $region27: #{gnn_forward.3} parent=11 // pred_region
          _
        $region28: #{gnn_forward.3} parent=11 // pred_fallthru
          _
      $region12: #{gnn_forward.3} parent=5 // pred_fallthru
        _
      %p215 = scmp.lt.s32.totalorder %s12, 4
      // Predicated region
      $region29: #{gnn_forward.3} parent=5 // pred_check
        %p216 = pneg %p215
      $region30: #{gnn_forward.3} parent=5 // pred_check_branch
        %218 = sbr.rel (%p216) target = $region32
      $region31: #{gnn_forward.3} parent=5 // pred_region
        // Predicated region
        $region33: #{gnn_forward.3} parent=31 // pred_check
          %p219 = pneg %p46
        $region34: #{gnn_forward.3} parent=31 // pred_check_branch
          %221 = sbr.rel (%p219) target = $region36
        $region35: #{gnn_forward.3} parent=31 // pred_region
          %s222 = sand.u32 %s36, 1
          %s223 = sand.u32 %s36, 1
          %s224 = smul.addr %s223, 256
          %s225 = scalar_lea.vmem [#allocation3], %s224
          %s226 = smul.u32 32, %s19
          %s227 = smul.u32 2, %s20
          %s228 = smul.addr %s226, 4
          %s229 = sadd.s32 %s227, %s228
          %s230 = smul.addr %s229, 4
          %s231 = scalar_lea.vmem %s0, %s230
          // Predicated region
          $region37: #{gnn_forward.3} parent=35 // pred_check
            _
          $region38: #{gnn_forward.3} parent=35 // pred_check_branch
            %233 = sbr.rel (0) target = $region40
          $region39: #{gnn_forward.3} parent=35 // pred_region
            // Predicated region
            $region41: #{gnn_forward.3} parent=39 // pred_check
              _
            $region42: #{gnn_forward.3} parent=39 // pred_check_branch
              %235 = sbr.rel (0) target = $region44
            $region43: #{gnn_forward.3} parent=39 // pred_region
              // Predicated region
              $region56: #{gnn_forward.3} parent=43 // pred_check
                _
              $region57: #{gnn_forward.3} parent=43 // pred_check_branch
                %313 = sbr.rel (0) target = $region59
              $region58: #{gnn_forward.3} parent=43 // pred_region
                loop: start=0, step=1, limit=1
                $region60: #{gnn_forward.3} parent=58 // loop_pre_header
                  _
                $region61: #{gnn_forward.3} parent=58 // loop_header
                  %s315 = sphi 0, %s319
                  %p316 = scmp.ge.s32.totalorder %s315, 1
                  %s320 = sphi %s231, %s231
                  %s321 = sphi %s225, %s225
                $region62: #{gnn_forward.3} parent=58 // loop_header_branch
                  %318 = sbr.rel (%p316) target = $region66
                $region63: #{gnn_forward.3} parent=58 // loop_body
                  %v322 = vld [vmem:[%s320] sm:$0xff]
                  %323 = vst [vmem:[%s321] sm:$0xff] %v322
                  %v324 = vld [vmem:[%s320 + $0x10] sm:$0xff]
                  %325 = vst [vmem:[%s321 + $0x8] sm:$0xff] %v324
                  %v326 = vld [vmem:[%s320 + $0x20] sm:$0xff]
                  %327 = vst [vmem:[%s321 + $0x10] sm:$0xff] %v326
                  %v328 = vld [vmem:[%s320 + $0x30] sm:$0xff]
                  %329 = vst [vmem:[%s321 + $0x18] sm:$0xff] %v328
                  %v330 = vld [vmem:[%s320 + $0x40] sm:$0xff]
                  %331 = vst [vmem:[%s321 + $0x20] sm:$0xff] %v330
                  %v332 = vld [vmem:[%s320 + $0x50] sm:$0xff]
                  %333 = vst [vmem:[%s321 + $0x28] sm:$0xff] %v332
                  %v334 = vld [vmem:[%s320 + $0x60] sm:$0xff]
                  %335 = vst [vmem:[%s321 + $0x30] sm:$0xff] %v334
                  %v336 = vld [vmem:[%s320 + $0x70] sm:$0xff]
                  %337 = vst [vmem:[%s321 + $0x38] sm:$0xff] %v336
                  %v338 = vld [vmem:[%s320 + $0x80] sm:$0xff]
                  %339 = vst [vmem:[%s321 + $0x40] sm:$0xff] %v338
                  %v340 = vld [vmem:[%s320 + $0x90] sm:$0xff]
                  %341 = vst [vmem:[%s321 + $0x48] sm:$0xff] %v340
                  %v342 = vld [vmem:[%s320 + $0xa0] sm:$0xff]
                  %343 = vst [vmem:[%s321 + $0x50] sm:$0xff] %v342
                  %v344 = vld [vmem:[%s320 + $0xb0] sm:$0xff]
                  %345 = vst [vmem:[%s321 + $0x58] sm:$0xff] %v344
                  %v346 = vld [vmem:[%s320 + $0xc0] sm:$0xff]
                  %347 = vst [vmem:[%s321 + $0x60] sm:$0xff] %v346
                  %v348 = vld [vmem:[%s320 + $0xd0] sm:$0xff]
                  %349 = vst [vmem:[%s321 + $0x68] sm:$0xff] %v348
                  %v350 = vld [vmem:[%s320 + $0xe0] sm:$0xff]
                  %351 = vst [vmem:[%s321 + $0x70] sm:$0xff] %v350
                  %v352 = vld [vmem:[%s320 + $0xf0] sm:$0xff]
                  %353 = vst [vmem:[%s321 + $0x78] sm:$0xff] %v352
                  %v354 = vld [vmem:[%s320 + $0x100] sm:$0xff]
                  %355 = vst [vmem:[%s321 + $0x80] sm:$0xff] %v354
                  %v356 = vld [vmem:[%s320 + $0x110] sm:$0xff]
                  %357 = vst [vmem:[%s321 + $0x88] sm:$0xff] %v356
                  %v358 = vld [vmem:[%s320 + $0x120] sm:$0xff]
                  %359 = vst [vmem:[%s321 + $0x90] sm:$0xff] %v358
                  %v360 = vld [vmem:[%s320 + $0x130] sm:$0xff]
                  %361 = vst [vmem:[%s321 + $0x98] sm:$0xff] %v360
                  %v362 = vld [vmem:[%s320 + $0x140] sm:$0xff]
                  %363 = vst [vmem:[%s321 + $0xa0] sm:$0xff] %v362
                  %v364 = vld [vmem:[%s320 + $0x150] sm:$0xff]
                  %365 = vst [vmem:[%s321 + $0xa8] sm:$0xff] %v364
                  %v366 = vld [vmem:[%s320 + $0x160] sm:$0xff]
                  %367 = vst [vmem:[%s321 + $0xb0] sm:$0xff] %v366
                  %v368 = vld [vmem:[%s320 + $0x170] sm:$0xff]
                  %369 = vst [vmem:[%s321 + $0xb8] sm:$0xff] %v368
                  %v370 = vld [vmem:[%s320 + $0x180] sm:$0xff]
                  %371 = vst [vmem:[%s321 + $0xc0] sm:$0xff] %v370
                  %v372 = vld [vmem:[%s320 + $0x190] sm:$0xff]
                  %373 = vst [vmem:[%s321 + $0xc8] sm:$0xff] %v372
                  %v374 = vld [vmem:[%s320 + $0x1a0] sm:$0xff]
                  %375 = vst [vmem:[%s321 + $0xd0] sm:$0xff] %v374
                  %v376 = vld [vmem:[%s320 + $0x1b0] sm:$0xff]
                  %377 = vst [vmem:[%s321 + $0xd8] sm:$0xff] %v376
                  %v378 = vld [vmem:[%s320 + $0x1c0] sm:$0xff]
                  %379 = vst [vmem:[%s321 + $0xe0] sm:$0xff] %v378
                  %v380 = vld [vmem:[%s320 + $0x1d0] sm:$0xff]
                  %381 = vst [vmem:[%s321 + $0xe8] sm:$0xff] %v380
                  %v382 = vld [vmem:[%s320 + $0x1e0] sm:$0xff]
                  %383 = vst [vmem:[%s321 + $0xf0] sm:$0xff] %v382
                  %v384 = vld [vmem:[%s320 + $0x1f0] sm:$0xff]
                  %385 = vst [vmem:[%s321 + $0xf8] sm:$0xff] %v384
                $region64: #{gnn_forward.3} parent=58 // loop_footer
                  %s319 = sadd.s32 1, %s315
                $region65: #{gnn_forward.3} parent=58 // loop_footer_branch
                  %314 = sbr.rel target = $region61
                $region66: #{gnn_forward.3} parent=58 // loop_exit
                  _
              $region59: #{gnn_forward.3} parent=43 // pred_fallthru
                _
              // Predicated region
              $region67: #{gnn_forward.3} parent=43 // pred_check
                _
              $region68: #{gnn_forward.3} parent=43 // pred_check_branch
                %387 = sbr.rel target = $region70
              $region69: #{gnn_forward.3} parent=43 // pred_region
                _
              $region70: #{gnn_forward.3} parent=43 // pred_fallthru
                _
            $region44: #{gnn_forward.3} parent=39 // pred_fallthru
              _
            // Predicated region
            $region45: #{gnn_forward.3} parent=39 // pred_check
              _
            $region46: #{gnn_forward.3} parent=39 // pred_check_branch
              %237 = sbr.rel target = $region48
            $region47: #{gnn_forward.3} parent=39 // pred_region
              %s239 = ssub.s32 256, 1
              loop: start=0, step=1, limit=1
              $region49: #{gnn_forward.3} parent=47 // loop_pre_header
                _
              $region50: #{gnn_forward.3} parent=47 // loop_header
                %s241 = sphi 0, %s245
                %p242 = scmp.ge.s32.totalorder %s241, 1
                %s246 = sphi %s231, %s231
                %s247 = sphi %s225, %s225
              $region51: #{gnn_forward.3} parent=47 // loop_header_branch
                %244 = sbr.rel (%p242) target = $region55
              $region52: #{gnn_forward.3} parent=47 // loop_body
                %v248 = vld [vmem:[%s246] sm:%s239]
                %249 = vst [vmem:[%s247] sm:%s239] %v248
                %v250 = vld [vmem:[%s246 + $0x10] sm:%s239]
                %251 = vst [vmem:[%s247 + $0x8] sm:%s239] %v250
                %v252 = vld [vmem:[%s246 + $0x20] sm:%s239]
                %253 = vst [vmem:[%s247 + $0x10] sm:%s239] %v252
                %v254 = vld [vmem:[%s246 + $0x30] sm:%s239]
                %255 = vst [vmem:[%s247 + $0x18] sm:%s239] %v254
                %v256 = vld [vmem:[%s246 + $0x40] sm:%s239]
                %257 = vst [vmem:[%s247 + $0x20] sm:%s239] %v256
                %v258 = vld [vmem:[%s246 + $0x50] sm:%s239]
                %259 = vst [vmem:[%s247 + $0x28] sm:%s239] %v258
                %v260 = vld [vmem:[%s246 + $0x60] sm:%s239]
                %261 = vst [vmem:[%s247 + $0x30] sm:%s239] %v260
                %v262 = vld [vmem:[%s246 + $0x70] sm:%s239]
                %263 = vst [vmem:[%s247 + $0x38] sm:%s239] %v262
                %v264 = vld [vmem:[%s246 + $0x80] sm:%s239]
                %265 = vst [vmem:[%s247 + $0x40] sm:%s239] %v264
                %v266 = vld [vmem:[%s246 + $0x90] sm:%s239]
                %267 = vst [vmem:[%s247 + $0x48] sm:%s239] %v266
                %v268 = vld [vmem:[%s246 + $0xa0] sm:%s239]
                %269 = vst [vmem:[%s247 + $0x50] sm:%s239] %v268
                %v270 = vld [vmem:[%s246 + $0xb0] sm:%s239]
                %271 = vst [vmem:[%s247 + $0x58] sm:%s239] %v270
                %v272 = vld [vmem:[%s246 + $0xc0] sm:%s239]
                %273 = vst [vmem:[%s247 + $0x60] sm:%s239] %v272
                %v274 = vld [vmem:[%s246 + $0xd0] sm:%s239]
                %275 = vst [vmem:[%s247 + $0x68] sm:%s239] %v274
                %v276 = vld [vmem:[%s246 + $0xe0] sm:%s239]
                %277 = vst [vmem:[%s247 + $0x70] sm:%s239] %v276
                %v278 = vld [vmem:[%s246 + $0xf0] sm:%s239]
                %279 = vst [vmem:[%s247 + $0x78] sm:%s239] %v278
                %v280 = vld [vmem:[%s246 + $0x100] sm:%s239]
                %281 = vst [vmem:[%s247 + $0x80] sm:%s239] %v280
                %v282 = vld [vmem:[%s246 + $0x110] sm:%s239]
                %283 = vst [vmem:[%s247 + $0x88] sm:%s239] %v282
                %v284 = vld [vmem:[%s246 + $0x120] sm:%s239]
                %285 = vst [vmem:[%s247 + $0x90] sm:%s239] %v284
                %v286 = vld [vmem:[%s246 + $0x130] sm:%s239]
                %287 = vst [vmem:[%s247 + $0x98] sm:%s239] %v286
                %v288 = vld [vmem:[%s246 + $0x140] sm:%s239]
                %289 = vst [vmem:[%s247 + $0xa0] sm:%s239] %v288
                %v290 = vld [vmem:[%s246 + $0x150] sm:%s239]
                %291 = vst [vmem:[%s247 + $0xa8] sm:%s239] %v290
                %v292 = vld [vmem:[%s246 + $0x160] sm:%s239]
                %293 = vst [vmem:[%s247 + $0xb0] sm:%s239] %v292
                %v294 = vld [vmem:[%s246 + $0x170] sm:%s239]
                %295 = vst [vmem:[%s247 + $0xb8] sm:%s239] %v294
                %v296 = vld [vmem:[%s246 + $0x180] sm:%s239]
                %297 = vst [vmem:[%s247 + $0xc0] sm:%s239] %v296
                %v298 = vld [vmem:[%s246 + $0x190] sm:%s239]
                %299 = vst [vmem:[%s247 + $0xc8] sm:%s239] %v298
                %v300 = vld [vmem:[%s246 + $0x1a0] sm:%s239]
                %301 = vst [vmem:[%s247 + $0xd0] sm:%s239] %v300
                %v302 = vld [vmem:[%s246 + $0x1b0] sm:%s239]
                %303 = vst [vmem:[%s247 + $0xd8] sm:%s239] %v302
                %v304 = vld [vmem:[%s246 + $0x1c0] sm:%s239]
                %305 = vst [vmem:[%s247 + $0xe0] sm:%s239] %v304
                %v306 = vld [vmem:[%s246 + $0x1d0] sm:%s239]
                %307 = vst [vmem:[%s247 + $0xe8] sm:%s239] %v306
                %v308 = vld [vmem:[%s246 + $0x1e0] sm:%s239]
                %309 = vst [vmem:[%s247 + $0xf0] sm:%s239] %v308
                %v310 = vld [vmem:[%s246 + $0x1f0] sm:%s239]
                %311 = vst [vmem:[%s247 + $0xf8] sm:%s239] %v310
              $region53: #{gnn_forward.3} parent=47 // loop_footer
                %s245 = sadd.s32 1, %s241
              $region54: #{gnn_forward.3} parent=47 // loop_footer_branch
                %240 = sbr.rel target = $region50
              $region55: #{gnn_forward.3} parent=47 // loop_exit
                _
            $region48: #{gnn_forward.3} parent=39 // pred_fallthru
              _
          $region40: #{gnn_forward.3} parent=35 // pred_fallthru
            _
          %388 = vnop
        $region36: #{gnn_forward.3} parent=31 // pred_fallthru
          _
        // Predicated region
        $region71: #{gnn_forward.3} parent=31 // pred_check
          %p389 = pneg %p72
        $region72: #{gnn_forward.3} parent=31 // pred_check_branch
          %391 = sbr.rel (%p389) target = $region74
        $region73: #{gnn_forward.3} parent=31 // pred_region
          %s392 = smul.u32 32, %s20
          %p393 = scmp.lt.s32.totalorder %s392, 63
          %s394 = scalar_select %p393, %s392, 63
          %s395 = smul.addr %s394, 4
          %s396 = scalar_lea.vmem %s1, %s395
          %s397 = smul.u32 32, %s20
        $region74: #{gnn_forward.3} parent=31 // pred_fallthru
          _
      $region32: #{gnn_forward.3} parent=5 // pred_fallthru
        _
      %p398 = scmp.le.s32.totalorder 1, %s12
      %p399 = scmp.lt.s32.totalorder %s12, 5
      %p400 = pnand %p398, %p399
      %p401 = pneg %p400
      // Predicated region
      $region75: #{gnn_forward.3} parent=5 // pred_check
        _
      $region76: #{gnn_forward.3} parent=5 // pred_check_branch
        %403 = sbr.rel (%p400) target = $region78
      $region77: #{gnn_forward.3} parent=5 // pred_region
        %s404 = ssub.s32 %s12, 1
        %s405 = sand.u32 %s39, 1
        %s406 = sand.u32 %s39, 1
        %s407 = smul.addr %s406, 256
        %s408 = scalar_lea.vmem [#allocation3], %s407
        // Predicated region
        $region79: #{gnn_forward.3} parent=77 // pred_check
          %p409 = pneg %p52
        $region80: #{gnn_forward.3} parent=77 // pred_check_branch
          %411 = sbr.rel (%p409) target = $region82
        $region81: #{gnn_forward.3} parent=77 // pred_region
          _
        $region82: #{gnn_forward.3} parent=77 // pred_fallthru
          _
        %s412 = sand.u32 %s39, 1
        %s413 = sand.u32 %s39, 1
        %s414 = smul.addr %s413, 256
        %s415 = scalar_lea.vmem [#allocation3], %s414
        %p416 = pneg %p52
        %p417 = pneg %p49
        %s418 = smul.u32 32, %s22
        %p419 = scmp.lt.s32.totalorder %s418, 63
        %s420 = scalar_select %p419, %s418, 63
        %s421 = smul.addr %s420, 4
        %s422 = scalar_lea.vmem %s1, %s421
        %p423 = pneg %p78
        %p424 = pneg %p75
        %p425 = pneg %p99
        %p426 = pneg %p96
        %p427 = pneg %p120
        %p428 = pneg %p117
        %p429 = pneg %p141
        %p430 = pneg %p138
        %p431 = pneg %p162
        %p432 = pneg %p159
        %p433 = pneg %p188
        %p434 = pneg %p185
        %s435 = smul.u32 32, %s21
        %p436 = scmp.lt.s32.totalorder %s435, 63
        %s437 = scalar_select %p436, %s435, 63
        %s438 = smul.addr %s437, 8
        %s439 = scalar_lea.vmem %s6, %s438
        %s440 = smul.u32 32, %s21
        %s441 = smul.u32 2, %s22
        %s442 = smul.u32 32, %s22
        %p443 = scmp.lt.s32.totalorder %s442, 63
        %s444 = scalar_select %p443, %s442, 63
        %s445 = smul.addr %s444, 4
        %s446 = scalar_lea.vmem %s1, %s445
        %s447 = smul.u32 32, %s22
        %s448 = smul.u32 32, %s21
        %p449 = scmp.lt.s32.totalorder %s448, 63
        %s450 = scalar_select %p449, %s448, 63
        %s451 = smul.addr %s450, 8
        %s452 = scalar_lea.vmem %s6, %s451
        %s453 = smul.u32 32, %s21
        %p454 = scmp.eq.s32.totalorder %s22, 0
        // Predicated region
        $region83: #{gnn_forward.3} parent=77 // pred_check
          %p455 = pneg %p454
        $region84: #{gnn_forward.3} parent=77 // pred_check_branch
          %457 = sbr.rel (%p455) target = $region86
        $region85: #{gnn_forward.3} parent=77 // pred_region
          %458 = vst [vmem:[#allocation2] sm:$0xff] 0.0
          %459 = vst [vmem:[#allocation2 + $0x8] sm:$0xff] 0.0
          %460 = vst [vmem:[#allocation2 + $0x10] sm:$0xff] 0.0
          %461 = vst [vmem:[#allocation2 + $0x18] sm:$0xff] 0.0
          %462 = vst [vmem:[#allocation2 + $0x20] sm:$0xff] 0.0
          %463 = vst [vmem:[#allocation2 + $0x28] sm:$0xff] 0.0
          %464 = vst [vmem:[#allocation2 + $0x30] sm:$0xff] 0.0
          %465 = vst [vmem:[#allocation2 + $0x38] sm:$0xff] 0.0
          %466 = vst [vmem:[#allocation2 + $0x40] sm:$0xff] 0.0
          %467 = vst [vmem:[#allocation2 + $0x48] sm:$0xff] 0.0
          %468 = vst [vmem:[#allocation2 + $0x50] sm:$0xff] 0.0
          %469 = vst [vmem:[#allocation2 + $0x58] sm:$0xff] 0.0
          %470 = vst [vmem:[#allocation2 + $0x60] sm:$0xff] 0.0
          %471 = vst [vmem:[#allocation2 + $0x68] sm:$0xff] 0.0
          %472 = vst [vmem:[#allocation2 + $0x70] sm:$0xff] 0.0
          %473 = vst [vmem:[#allocation2 + $0x78] sm:$0xff] 0.0
          %474 = vst [vmem:[#allocation2 + $0x80] sm:$0xff] 0.0
          %475 = vst [vmem:[#allocation2 + $0x88] sm:$0xff] 0.0
          %476 = vst [vmem:[#allocation2 + $0x90] sm:$0xff] 0.0
          %477 = vst [vmem:[#allocation2 + $0x98] sm:$0xff] 0.0
          %478 = vst [vmem:[#allocation2 + $0xa0] sm:$0xff] 0.0
          %479 = vst [vmem:[#allocation2 + $0xa8] sm:$0xff] 0.0
          %480 = vst [vmem:[#allocation2 + $0xb0] sm:$0xff] 0.0
          %481 = vst [vmem:[#allocation2 + $0xb8] sm:$0xff] 0.0
          %482 = vst [vmem:[#allocation2 + $0xc0] sm:$0xff] 0.0
          %483 = vst [vmem:[#allocation2 + $0xc8] sm:$0xff] 0.0
          %484 = vst [vmem:[#allocation2 + $0xd0] sm:$0xff] 0.0
          %485 = vst [vmem:[#allocation2 + $0xd8] sm:$0xff] 0.0
          %486 = vst [vmem:[#allocation2 + $0xe0] sm:$0xff] 0.0
          %487 = vst [vmem:[#allocation2 + $0xe8] sm:$0xff] 0.0
          %488 = vst [vmem:[#allocation2 + $0xf0] sm:$0xff] 0.0
          %489 = vst [vmem:[#allocation2 + $0xf8] sm:$0xff] 0.0
        $region86: #{gnn_forward.3} parent=77 // pred_fallthru
          _
        %v490 = vld [vmem:[#allocation2] sm:$0xff]
        %v491 = vld [vmem:[#allocation2 + $0x8] sm:$0xff]
        %v492 = vld [vmem:[#allocation2 + $0x10] sm:$0xff]
        %v493 = vld [vmem:[#allocation2 + $0x18] sm:$0xff]
        %v494 = vld [vmem:[#allocation2 + $0x20] sm:$0xff]
        %v495 = vld [vmem:[#allocation2 + $0x28] sm:$0xff]
        %v496 = vld [vmem:[#allocation2 + $0x30] sm:$0xff]
        %v497 = vld [vmem:[#allocation2 + $0x38] sm:$0xff]
        %v498 = vld [vmem:[#allocation2 + $0x40] sm:$0xff]
        %v499 = vld [vmem:[#allocation2 + $0x48] sm:$0xff]
        %v500 = vld [vmem:[#allocation2 + $0x50] sm:$0xff]
        %v501 = vld [vmem:[#allocation2 + $0x58] sm:$0xff]
        %v502 = vld [vmem:[#allocation2 + $0x60] sm:$0xff]
        %v503 = vld [vmem:[#allocation2 + $0x68] sm:$0xff]
        %v504 = vld [vmem:[#allocation2 + $0x70] sm:$0xff]
        %v505 = vld [vmem:[#allocation2 + $0x78] sm:$0xff]
        %v506 = vld [vmem:[#allocation2 + $0x80] sm:$0xff]
        %v507 = vld [vmem:[#allocation2 + $0x88] sm:$0xff]
        %v508 = vld [vmem:[#allocation2 + $0x90] sm:$0xff]
        %v509 = vld [vmem:[#allocation2 + $0x98] sm:$0xff]
        %v510 = vld [vmem:[#allocation2 + $0xa0] sm:$0xff]
        %v511 = vld [vmem:[#allocation2 + $0xa8] sm:$0xff]
        %v512 = vld [vmem:[#allocation2 + $0xb0] sm:$0xff]
        %v513 = vld [vmem:[#allocation2 + $0xb8] sm:$0xff]
        %v514 = vld [vmem:[#allocation2 + $0xc0] sm:$0xff]
        %v515 = vld [vmem:[#allocation2 + $0xc8] sm:$0xff]
        %v516 = vld [vmem:[#allocation2 + $0xd0] sm:$0xff]
        %v517 = vld [vmem:[#allocation2 + $0xd8] sm:$0xff]
        %v518 = vld [vmem:[#allocation2 + $0xe0] sm:$0xff]
        %v519 = vld [vmem:[#allocation2 + $0xe8] sm:$0xff]
        %v520 = vld [vmem:[#allocation2 + $0xf0] sm:$0xff]
        %v521 = vld [vmem:[#allocation2 + $0xf8] sm:$0xff]
        %v522 = vld [vmem:[%s408] sm:$0xff]
        %v523 = vld [vmem:[%s408 + $0x8] sm:$0xff]
        %v524 = vld [vmem:[%s408 + $0x10] sm:$0xff]
        %v525 = vld [vmem:[%s408 + $0x18] sm:$0xff]
        %v526 = vld [vmem:[%s408 + $0x20] sm:$0xff]
        %v527 = vld [vmem:[%s408 + $0x28] sm:$0xff]
        %v528 = vld [vmem:[%s408 + $0x30] sm:$0xff]
        %v529 = vld [vmem:[%s408 + $0x38] sm:$0xff]
        %v530 = vld [vmem:[%s408 + $0x40] sm:$0xff]
        %v531 = vld [vmem:[%s408 + $0x48] sm:$0xff]
        %v532 = vld [vmem:[%s408 + $0x50] sm:$0xff]
        %v533 = vld [vmem:[%s408 + $0x58] sm:$0xff]
        %v534 = vld [vmem:[%s408 + $0x60] sm:$0xff]
        %v535 = vld [vmem:[%s408 + $0x68] sm:$0xff]
        %v536 = vld [vmem:[%s408 + $0x70] sm:$0xff]
        %v537 = vld [vmem:[%s408 + $0x78] sm:$0xff]
        %v538 = vld [vmem:[%s408 + $0x80] sm:$0xff]
        %v539 = vld [vmem:[%s408 + $0x88] sm:$0xff]
        %v540 = vld [vmem:[%s408 + $0x90] sm:$0xff]
        %v541 = vld [vmem:[%s408 + $0x98] sm:$0xff]
        %v542 = vld [vmem:[%s408 + $0xa0] sm:$0xff]
        %v543 = vld [vmem:[%s408 + $0xa8] sm:$0xff]
        %v544 = vld [vmem:[%s408 + $0xb0] sm:$0xff]
        %v545 = vld [vmem:[%s408 + $0xb8] sm:$0xff]
        %v546 = vld [vmem:[%s408 + $0xc0] sm:$0xff]
        %v547 = vld [vmem:[%s408 + $0xc8] sm:$0xff]
        %v548 = vld [vmem:[%s408 + $0xd0] sm:$0xff]
        %v549 = vld [vmem:[%s408 + $0xd8] sm:$0xff]
        %v550 = vld [vmem:[%s408 + $0xe0] sm:$0xff]
        %v551 = vld [vmem:[%s408 + $0xe8] sm:$0xff]
        %v552 = vld [vmem:[%s408 + $0xf0] sm:$0xff]
        %v553 = vld [vmem:[%s408 + $0xf8] sm:$0xff]
        %v554 = vld [vmem:[%s446] sm:$0xf]
        %v555 = vld [vmem:[%s446 + $0x4] sm:$0xf]
        %v556 = vld [vmem:[%s446 + $0x8] sm:$0xf]
        %v557 = vld [vmem:[%s446 + $0xc] sm:$0xf]
        %v558 = vld [vmem:[%s446 + $0x10] sm:$0xf]
        %v559 = vld [vmem:[%s446 + $0x14] sm:$0xf]
        %v560 = vld [vmem:[%s446 + $0x18] sm:$0xf]
        %v561 = vld [vmem:[%s446 + $0x1c] sm:$0xf]
        %v562 = vld [vmem:[%s446 + $0x20] sm:$0xf]
        %v563 = vld [vmem:[%s446 + $0x24] sm:$0xf]
        %v564 = vld [vmem:[%s446 + $0x28] sm:$0xf]
        %v565 = vld [vmem:[%s446 + $0x2c] sm:$0xf]
        %v566 = vld [vmem:[%s446 + $0x30] sm:$0xf]
        %v567 = vld [vmem:[%s446 + $0x34] sm:$0xf]
        %v568 = vld [vmem:[%s446 + $0x38] sm:$0xf]
        %v569 = vld [vmem:[%s446 + $0x3c] sm:$0xf]
        %v570 = vld [vmem:[%s446 + $0x40] sm:$0xf]
        %v571 = vld [vmem:[%s446 + $0x44] sm:$0xf]
        %v572 = vld [vmem:[%s446 + $0x48] sm:$0xf]
        %v573 = vld [vmem:[%s446 + $0x4c] sm:$0xf]
        %v574 = vld [vmem:[%s446 + $0x50] sm:$0xf]
        %v575 = vld [vmem:[%s446 + $0x54] sm:$0xf]
        %v576 = vld [vmem:[%s446 + $0x58] sm:$0xf]
        %v577 = vld [vmem:[%s446 + $0x5c] sm:$0xf]
        %v578 = vld [vmem:[%s446 + $0x60] sm:$0xf]
        %v579 = vld [vmem:[%s446 + $0x64] sm:$0xf]
        %v580 = vld [vmem:[%s446 + $0x68] sm:$0xf]
        %v581 = vld [vmem:[%s446 + $0x6c] sm:$0xf]
        %v582 = vld [vmem:[%s446 + $0x70] sm:$0xf]
        %v583 = vld [vmem:[%s446 + $0x74] sm:$0xf]
        %v584 = vld [vmem:[%s446 + $0x78] sm:$0xf]
        %v585 = vld [vmem:[%s446 + $0x7c] sm:$0xf]
        %v618 = vunpack.c.l.b16 %v522
        %v619 = vunpack.c.h.b16 %v522
        %v620 = vunpack.c.l.b16 %v523
        %v621 = vunpack.c.h.b16 %v523
        %v622 = vunpack.c.l.b16 %v524
        %v623 = vunpack.c.h.b16 %v524
        %v624 = vunpack.c.l.b16 %v525
        %v625 = vunpack.c.h.b16 %v525
        %v626 = vunpack.c.l.b16 %v526
        %v627 = vunpack.c.h.b16 %v526
        %v628 = vunpack.c.l.b16 %v527
        %v629 = vunpack.c.h.b16 %v527
        %v630 = vunpack.c.l.b16 %v528
        %v631 = vunpack.c.h.b16 %v528
        %v632 = vunpack.c.l.b16 %v529
        %v633 = vunpack.c.h.b16 %v529
        %v634 = vunpack.c.l.b16 %v530
        %v635 = vunpack.c.h.b16 %v530
        %v636 = vunpack.c.l.b16 %v531
        %v637 = vunpack.c.h.b16 %v531
        %v638 = vunpack.c.l.b16 %v532
        %v639 = vunpack.c.h.b16 %v532
        %v640 = vunpack.c.l.b16 %v533
        %v641 = vunpack.c.h.b16 %v533
        %v642 = vunpack.c.l.b16 %v534
        %v643 = vunpack.c.h.b16 %v534
        %v644 = vunpack.c.l.b16 %v535
        %v645 = vunpack.c.h.b16 %v535
        %v646 = vunpack.c.l.b16 %v536
        %v647 = vunpack.c.h.b16 %v536
        %v648 = vunpack.c.l.b16 %v537
        %v649 = vunpack.c.h.b16 %v537
        %v650 = vunpack.c.l.b16 %v538
        %v651 = vunpack.c.h.b16 %v538
        %v652 = vunpack.c.l.b16 %v539
        %v653 = vunpack.c.h.b16 %v539
        %v654 = vunpack.c.l.b16 %v540
        %v655 = vunpack.c.h.b16 %v540
        %v656 = vunpack.c.l.b16 %v541
        %v657 = vunpack.c.h.b16 %v541
        %v658 = vunpack.c.l.b16 %v542
        %v659 = vunpack.c.h.b16 %v542
        %v660 = vunpack.c.l.b16 %v543
        %v661 = vunpack.c.h.b16 %v543
        %v662 = vunpack.c.l.b16 %v544
        %v663 = vunpack.c.h.b16 %v544
        %v664 = vunpack.c.l.b16 %v545
        %v665 = vunpack.c.h.b16 %v545
        %v666 = vunpack.c.l.b16 %v546
        %v667 = vunpack.c.h.b16 %v546
        %v668 = vunpack.c.l.b16 %v547
        %v669 = vunpack.c.h.b16 %v547
        %v670 = vunpack.c.l.b16 %v548
        %v671 = vunpack.c.h.b16 %v548
        %v672 = vunpack.c.l.b16 %v549
        %v673 = vunpack.c.h.b16 %v549
        %v674 = vunpack.c.l.b16 %v550
        %v675 = vunpack.c.h.b16 %v550
        %v676 = vunpack.c.l.b16 %v551
        %v677 = vunpack.c.h.b16 %v551
        %v678 = vunpack.c.l.b16 %v552
        %v679 = vunpack.c.h.b16 %v552
        %v680 = vunpack.c.l.b16 %v553
        %v681 = vunpack.c.h.b16 %v553
        %v682 = vpack.c.b16 %v620, %v618
        %v683 = vpack.c.b16 %v621, %v619
        %v684 = vpack.c.b16 %v624, %v622
        %v685 = vpack.c.b16 %v625, %v623
        %v686 = vpack.c.b16 %v628, %v626
        %v687 = vpack.c.b16 %v629, %v627
        %v688 = vpack.c.b16 %v632, %v630
        %v689 = vpack.c.b16 %v633, %v631
        %v690 = vpack.c.b16 %v636, %v634
        %v691 = vpack.c.b16 %v637, %v635
        %v692 = vpack.c.b16 %v640, %v638
        %v693 = vpack.c.b16 %v641, %v639
        %v694 = vpack.c.b16 %v644, %v642
        %v695 = vpack.c.b16 %v645, %v643
        %v696 = vpack.c.b16 %v648, %v646
        %v697 = vpack.c.b16 %v649, %v647
        %v698 = vpack.c.b16 %v652, %v650
        %v699 = vpack.c.b16 %v653, %v651
        %v700 = vpack.c.b16 %v656, %v654
        %v701 = vpack.c.b16 %v657, %v655
        %v702 = vpack.c.b16 %v660, %v658
        %v703 = vpack.c.b16 %v661, %v659
        %v704 = vpack.c.b16 %v664, %v662
        %v705 = vpack.c.b16 %v665, %v663
        %v706 = vpack.c.b16 %v668, %v666
        %v707 = vpack.c.b16 %v669, %v667
        %v708 = vpack.c.b16 %v672, %v670
        %v709 = vpack.c.b16 %v673, %v671
        %v710 = vpack.c.b16 %v676, %v674
        %v711 = vpack.c.b16 %v677, %v675
        %v712 = vpack.c.b16 %v680, %v678
        %v713 = vpack.c.b16 %v681, %v679
        %v778 = vunpack.c.l.b16 %v554
        %v779 = vunpack.c.l.b16 %v555
        %v780 = vunpack.c.l.b16 %v556
        %v781 = vunpack.c.l.b16 %v557
        %v782 = vunpack.c.l.b16 %v558
        %v783 = vunpack.c.l.b16 %v559
        %v784 = vunpack.c.l.b16 %v560
        %v785 = vunpack.c.l.b16 %v561
        %v786 = vunpack.c.l.b16 %v562
        %v787 = vunpack.c.l.b16 %v563
        %v788 = vunpack.c.l.b16 %v564
        %v789 = vunpack.c.l.b16 %v565
        %v790 = vunpack.c.l.b16 %v566
        %v791 = vunpack.c.l.b16 %v567
        %v792 = vunpack.c.l.b16 %v568
        %v793 = vunpack.c.l.b16 %v569
        %v794 = vunpack.c.l.b16 %v570
        %v795 = vunpack.c.l.b16 %v571
        %v796 = vunpack.c.l.b16 %v572
        %v797 = vunpack.c.l.b16 %v573
        %v798 = vunpack.c.l.b16 %v574
        %v799 = vunpack.c.l.b16 %v575
        %v800 = vunpack.c.l.b16 %v576
        %v801 = vunpack.c.l.b16 %v577
        %v802 = vunpack.c.l.b16 %v578
        %v803 = vunpack.c.l.b16 %v579
        %v804 = vunpack.c.l.b16 %v580
        %v805 = vunpack.c.l.b16 %v581
        %v806 = vunpack.c.l.b16 %v582
        %v807 = vunpack.c.l.b16 %v583
        %v808 = vunpack.c.l.b16 %v584
        %v809 = vunpack.c.l.b16 %v585
        %v810 = vpack.c.b16 %v779, %v778
        %v811 = vpack.c.b16 %v781, %v780
        %v812 = vpack.c.b16 %v783, %v782
        %v813 = vpack.c.b16 %v785, %v784
        %v814 = vpack.c.b16 %v787, %v786
        %v815 = vpack.c.b16 %v789, %v788
        %v816 = vpack.c.b16 %v791, %v790
        %v817 = vpack.c.b16 %v793, %v792
        %v818 = vpack.c.b16 %v795, %v794
        %v819 = vpack.c.b16 %v797, %v796
        %v820 = vpack.c.b16 %v799, %v798
        %v821 = vpack.c.b16 %v801, %v800
        %v822 = vpack.c.b16 %v803, %v802
        %v823 = vpack.c.b16 %v805, %v804
        %v824 = vpack.c.b16 %v807, %v806
        %v825 = vpack.c.b16 %v809, %v808
        %842 = vmatpush.bf16.msra.mxu0 %v817
        %843 = vmatpush.bf16.msra.mxu0 %v816
        %844 = vmatpush.bf16.msra.mxu0 %v815
        %845 = vmatpush.bf16.msra.mxu0 %v814
        %846 = vmatpush.bf16.msra.mxu0 %v813
        %847 = vmatpush.bf16.msra.mxu0 %v812
        %848 = vmatpush.bf16.msra.mxu0 %v811
        %849 = vmatpush.bf16.msra.mxu0 %v810
        %850 = vmatmul.bf16.gmra.mxu0 %v682
        %v851 = vpop.f32.mrf.mxu0
        %v852 = vadd.f32 0.0, %v851
        %v853 = vpop.f32.mrf.mxu0
        %v854 = vadd.f32 0.0, %v853
        %855 = vmatmul.bf16.gmra.mxu0 %v684
        %v856 = vpop.f32.mrf.mxu0
        %v857 = vadd.f32 0.0, %v856
        %v858 = vpop.f32.mrf.mxu0
        %v859 = vadd.f32 0.0, %v858
        %860 = vmatmul.bf16.gmra.mxu0 %v686
        %v861 = vpop.f32.mrf.mxu0
        %v862 = vadd.f32 0.0, %v861
        %v863 = vpop.f32.mrf.mxu0
        %v864 = vadd.f32 0.0, %v863
        %865 = vmatmul.bf16.gmra.mxu0 %v688
        %v866 = vpop.f32.mrf.mxu0
        %v867 = vadd.f32 0.0, %v866
        %v868 = vpop.f32.mrf.mxu0
        %v869 = vadd.f32 0.0, %v868
        %870 = vmatmul.bf16.gmra.mxu0 %v690
        %v871 = vpop.f32.mrf.mxu0
        %v872 = vadd.f32 0.0, %v871
        %v873 = vpop.f32.mrf.mxu0
        %v874 = vadd.f32 0.0, %v873
        %875 = vmatmul.bf16.gmra.mxu0 %v692
        %v876 = vpop.f32.mrf.mxu0
        %v877 = vadd.f32 0.0, %v876
        %v878 = vpop.f32.mrf.mxu0
        %v879 = vadd.f32 0.0, %v878
        %880 = vmatmul.bf16.gmra.mxu0 %v694
        %v881 = vpop.f32.mrf.mxu0
        %v882 = vadd.f32 0.0, %v881
        %v883 = vpop.f32.mrf.mxu0
        %v884 = vadd.f32 0.0, %v883
        %885 = vmatmul.bf16.gmra.mxu0 %v696
        %v886 = vpop.f32.mrf.mxu0
        %v887 = vadd.f32 0.0, %v886
        %v888 = vpop.f32.mrf.mxu0
        %v889 = vadd.f32 0.0, %v888
        %890 = vmatmul.bf16.gmra.mxu0 %v698
        %v891 = vpop.f32.mrf.mxu0
        %v892 = vadd.f32 0.0, %v891
        %v893 = vpop.f32.mrf.mxu0
        %v894 = vadd.f32 0.0, %v893
        %895 = vmatmul.bf16.gmra.mxu0 %v700
        %v896 = vpop.f32.mrf.mxu0
        %v897 = vadd.f32 0.0, %v896
        %v898 = vpop.f32.mrf.mxu0
        %v899 = vadd.f32 0.0, %v898
        %900 = vmatmul.bf16.gmra.mxu0 %v702
        %v901 = vpop.f32.mrf.mxu0
        %v902 = vadd.f32 0.0, %v901
        %v903 = vpop.f32.mrf.mxu0
        %v904 = vadd.f32 0.0, %v903
        %905 = vmatmul.bf16.gmra.mxu0 %v704
        %v906 = vpop.f32.mrf.mxu0
        %v907 = vadd.f32 0.0, %v906
        %v908 = vpop.f32.mrf.mxu0
        %v909 = vadd.f32 0.0, %v908
        %910 = vmatmul.bf16.gmra.mxu0 %v706
        %v911 = vpop.f32.mrf.mxu0
        %v912 = vadd.f32 0.0, %v911
        %v913 = vpop.f32.mrf.mxu0
        %v914 = vadd.f32 0.0, %v913
        %915 = vmatmul.bf16.gmra.mxu0 %v708
        %v916 = vpop.f32.mrf.mxu0
        %v917 = vadd.f32 0.0, %v916
        %v918 = vpop.f32.mrf.mxu0
        %v919 = vadd.f32 0.0, %v918
        %920 = vmatmul.bf16.gmra.mxu0 %v710
        %v921 = vpop.f32.mrf.mxu0
        %v922 = vadd.f32 0.0, %v921
        %v923 = vpop.f32.mrf.mxu0
        %v924 = vadd.f32 0.0, %v923
        %925 = vmatmul.bf16.gmra.mxu0 %v712
        %v926 = vpop.f32.mrf.mxu0
        %v927 = vadd.f32 0.0, %v926
        %v928 = vpop.f32.mrf.mxu0
        %v929 = vadd.f32 0.0, %v928
        %930 = vdwg.mxu0
        %931 = vmatpush.bf16.msra.mxu0 %v825
        %932 = vmatpush.bf16.msra.mxu0 %v824
        %933 = vmatpush.bf16.msra.mxu0 %v823
        %934 = vmatpush.bf16.msra.mxu0 %v822
        %935 = vmatpush.bf16.msra.mxu0 %v821
        %936 = vmatpush.bf16.msra.mxu0 %v820
        %937 = vmatpush.bf16.msra.mxu0 %v819
        %938 = vmatpush.bf16.msra.mxu0 %v818
        %939 = vmatmul.bf16.gmra.mxu0 %v683
        %v940 = vpop.f32.mrf.mxu0
        %v941 = vadd.f32 %v852, %v940
        %v942 = vpop.f32.mrf.mxu0
        %v943 = vadd.f32 %v854, %v942
        %944 = vmatmul.bf16.gmra.mxu0 %v685
        %v945 = vpop.f32.mrf.mxu0
        %v946 = vadd.f32 %v857, %v945
        %v947 = vpop.f32.mrf.mxu0
        %v948 = vadd.f32 %v859, %v947
        %949 = vmatmul.bf16.gmra.mxu0 %v687
        %v950 = vpop.f32.mrf.mxu0
        %v951 = vadd.f32 %v862, %v950
        %v952 = vpop.f32.mrf.mxu0
        %v953 = vadd.f32 %v864, %v952
        %954 = vmatmul.bf16.gmra.mxu0 %v689
        %v955 = vpop.f32.mrf.mxu0
        %v956 = vadd.f32 %v867, %v955
        %v957 = vpop.f32.mrf.mxu0
        %v958 = vadd.f32 %v869, %v957
        %959 = vmatmul.bf16.gmra.mxu0 %v691
        %v960 = vpop.f32.mrf.mxu0
        %v961 = vadd.f32 %v872, %v960
        %v962 = vpop.f32.mrf.mxu0
        %v963 = vadd.f32 %v874, %v962
        %964 = vmatmul.bf16.gmra.mxu0 %v693
        %v965 = vpop.f32.mrf.mxu0
        %v966 = vadd.f32 %v877, %v965
        %v967 = vpop.f32.mrf.mxu0
        %v968 = vadd.f32 %v879, %v967
        %969 = vmatmul.bf16.gmra.mxu0 %v695
        %v970 = vpop.f32.mrf.mxu0
        %v971 = vadd.f32 %v882, %v970
        %v972 = vpop.f32.mrf.mxu0
        %v973 = vadd.f32 %v884, %v972
        %974 = vmatmul.bf16.gmra.mxu0 %v697
        %v975 = vpop.f32.mrf.mxu0
        %v976 = vadd.f32 %v887, %v975
        %v977 = vpop.f32.mrf.mxu0
        %v978 = vadd.f32 %v889, %v977
        %979 = vmatmul.bf16.gmra.mxu0 %v699
        %v980 = vpop.f32.mrf.mxu0
        %v981 = vadd.f32 %v892, %v980
        %v982 = vpop.f32.mrf.mxu0
        %v983 = vadd.f32 %v894, %v982
        %984 = vmatmul.bf16.gmra.mxu0 %v701
        %v985 = vpop.f32.mrf.mxu0
        %v986 = vadd.f32 %v897, %v985
        %v987 = vpop.f32.mrf.mxu0
        %v988 = vadd.f32 %v899, %v987
        %989 = vmatmul.bf16.gmra.mxu0 %v703
        %v990 = vpop.f32.mrf.mxu0
        %v991 = vadd.f32 %v902, %v990
        %v992 = vpop.f32.mrf.mxu0
        %v993 = vadd.f32 %v904, %v992
        %994 = vmatmul.bf16.gmra.mxu0 %v705
        %v995 = vpop.f32.mrf.mxu0
        %v996 = vadd.f32 %v907, %v995
        %v997 = vpop.f32.mrf.mxu0
        %v998 = vadd.f32 %v909, %v997
        %999 = vmatmul.bf16.gmra.mxu0 %v707
        %v1000 = vpop.f32.mrf.mxu0
        %v1001 = vadd.f32 %v912, %v1000
        %v1002 = vpop.f32.mrf.mxu0
        %v1003 = vadd.f32 %v914, %v1002
        %1004 = vmatmul.bf16.gmra.mxu0 %v709
        %v1005 = vpop.f32.mrf.mxu0
        %v1006 = vadd.f32 %v917, %v1005
        %v1007 = vpop.f32.mrf.mxu0
        %v1008 = vadd.f32 %v919, %v1007
        %1009 = vmatmul.bf16.gmra.mxu0 %v711
        %v1010 = vpop.f32.mrf.mxu0
        %v1011 = vadd.f32 %v922, %v1010
        %v1012 = vpop.f32.mrf.mxu0
        %v1013 = vadd.f32 %v924, %v1012
        %1014 = vmatmul.bf16.gmra.mxu0 %v713
        %v1015 = vpop.f32.mrf.mxu0
        %v1016 = vadd.f32 %v927, %v1015
        %v1017 = vpop.f32.mrf.mxu0
        %v1018 = vadd.f32 %v929, %v1017
        %1019 = vdwg.mxu0
        %v1020 = vadd.f32 %v490, %v941
        %v1021 = vadd.f32 %v491, %v943
        %v1022 = vadd.f32 %v492, %v946
        %v1023 = vadd.f32 %v493, %v948
        %v1024 = vadd.f32 %v494, %v951
        %v1025 = vadd.f32 %v495, %v953
        %v1026 = vadd.f32 %v496, %v956
        %v1027 = vadd.f32 %v497, %v958
        %v1028 = vadd.f32 %v498, %v961
        %v1029 = vadd.f32 %v499, %v963
        %v1030 = vadd.f32 %v500, %v966
        %v1031 = vadd.f32 %v501, %v968
        %v1032 = vadd.f32 %v502, %v971
        %v1033 = vadd.f32 %v503, %v973
        %v1034 = vadd.f32 %v504, %v976
        %v1035 = vadd.f32 %v505, %v978
        %v1036 = vadd.f32 %v506, %v981
        %v1037 = vadd.f32 %v507, %v983
        %v1038 = vadd.f32 %v508, %v986
        %v1039 = vadd.f32 %v509, %v988
        %v1040 = vadd.f32 %v510, %v991
        %v1041 = vadd.f32 %v511, %v993
        %v1042 = vadd.f32 %v512, %v996
        %v1043 = vadd.f32 %v513, %v998
        %v1044 = vadd.f32 %v514, %v1001
        %v1045 = vadd.f32 %v515, %v1003
        %v1046 = vadd.f32 %v516, %v1006
        %v1047 = vadd.f32 %v517, %v1008
        %v1048 = vadd.f32 %v518, %v1011
        %v1049 = vadd.f32 %v519, %v1013
        %v1050 = vadd.f32 %v520, %v1016
        %v1051 = vadd.f32 %v521, %v1018
        %1052 = vst [vmem:[#allocation2] sm:$0xff] %v1020
        %1053 = vst [vmem:[#allocation2 + $0x8] sm:$0xff] %v1021
        %1054 = vst [vmem:[#allocation2 + $0x10] sm:$0xff] %v1022
        %1055 = vst [vmem:[#allocation2 + $0x18] sm:$0xff] %v1023
        %1056 = vst [vmem:[#allocation2 + $0x20] sm:$0xff] %v1024
        %1057 = vst [vmem:[#allocation2 + $0x28] sm:$0xff] %v1025
        %1058 = vst [vmem:[#allocation2 + $0x30] sm:$0xff] %v1026
        %1059 = vst [vmem:[#allocation2 + $0x38] sm:$0xff] %v1027
        %1060 = vst [vmem:[#allocation2 + $0x40] sm:$0xff] %v1028
        %1061 = vst [vmem:[#allocation2 + $0x48] sm:$0xff] %v1029
        %1062 = vst [vmem:[#allocation2 + $0x50] sm:$0xff] %v1030
        %1063 = vst [vmem:[#allocation2 + $0x58] sm:$0xff] %v1031
        %1064 = vst [vmem:[#allocation2 + $0x60] sm:$0xff] %v1032
        %1065 = vst [vmem:[#allocation2 + $0x68] sm:$0xff] %v1033
        %1066 = vst [vmem:[#allocation2 + $0x70] sm:$0xff] %v1034
        %1067 = vst [vmem:[#allocation2 + $0x78] sm:$0xff] %v1035
        %1068 = vst [vmem:[#allocation2 + $0x80] sm:$0xff] %v1036
        %1069 = vst [vmem:[#allocation2 + $0x88] sm:$0xff] %v1037
        %1070 = vst [vmem:[#allocation2 + $0x90] sm:$0xff] %v1038
        %1071 = vst [vmem:[#allocation2 + $0x98] sm:$0xff] %v1039
        %1072 = vst [vmem:[#allocation2 + $0xa0] sm:$0xff] %v1040
        %1073 = vst [vmem:[#allocation2 + $0xa8] sm:$0xff] %v1041
        %1074 = vst [vmem:[#allocation2 + $0xb0] sm:$0xff] %v1042
        %1075 = vst [vmem:[#allocation2 + $0xb8] sm:$0xff] %v1043
        %1076 = vst [vmem:[#allocation2 + $0xc0] sm:$0xff] %v1044
        %1077 = vst [vmem:[#allocation2 + $0xc8] sm:$0xff] %v1045
        %1078 = vst [vmem:[#allocation2 + $0xd0] sm:$0xff] %v1046
        %1079 = vst [vmem:[#allocation2 + $0xd8] sm:$0xff] %v1047
        %1080 = vst [vmem:[#allocation2 + $0xe0] sm:$0xff] %v1048
        %1081 = vst [vmem:[#allocation2 + $0xe8] sm:$0xff] %v1049
        %1082 = vst [vmem:[#allocation2 + $0xf0] sm:$0xff] %v1050
        %1083 = vst [vmem:[#allocation2 + $0xf8] sm:$0xff] %v1051
        %p1084 = scmp.eq.s32.totalorder %s22, 1
        // Predicated region
        $region87: #{gnn_forward.3} parent=77 // pred_check
          %p1085 = pneg %p1084
        $region88: #{gnn_forward.3} parent=77 // pred_check_branch
          %1087 = sbr.rel (%p1085) target = $region90
        $region89: #{gnn_forward.3} parent=77 // pred_region
          %v1088 = vld [vmem:[#allocation2] sm:$0xff]
          %v1089 = vld [vmem:[#allocation2 + $0x8] sm:$0xff]
          %v1090 = vld [vmem:[#allocation2 + $0x10] sm:$0xff]
          %v1091 = vld [vmem:[#allocation2 + $0x18] sm:$0xff]
          %v1092 = vld [vmem:[#allocation2 + $0x20] sm:$0xff]
          %v1093 = vld [vmem:[#allocation2 + $0x28] sm:$0xff]
          %v1094 = vld [vmem:[#allocation2 + $0x30] sm:$0xff]
          %v1095 = vld [vmem:[#allocation2 + $0x38] sm:$0xff]
          %v1096 = vld [vmem:[#allocation2 + $0x40] sm:$0xff]
          %v1097 = vld [vmem:[#allocation2 + $0x48] sm:$0xff]
          %v1098 = vld [vmem:[#allocation2 + $0x50] sm:$0xff]
          %v1099 = vld [vmem:[#allocation2 + $0x58] sm:$0xff]
          %v1100 = vld [vmem:[#allocation2 + $0x60] sm:$0xff]
          %v1101 = vld [vmem:[#allocation2 + $0x68] sm:$0xff]
          %v1102 = vld [vmem:[#allocation2 + $0x70] sm:$0xff]
          %v1103 = vld [vmem:[#allocation2 + $0x78] sm:$0xff]
          %v1104 = vld [vmem:[#allocation2 + $0x80] sm:$0xff]
          %v1105 = vld [vmem:[#allocation2 + $0x88] sm:$0xff]
          %v1106 = vld [vmem:[#allocation2 + $0x90] sm:$0xff]
          %v1107 = vld [vmem:[#allocation2 + $0x98] sm:$0xff]
          %v1108 = vld [vmem:[#allocation2 + $0xa0] sm:$0xff]
          %v1109 = vld [vmem:[#allocation2 + $0xa8] sm:$0xff]
          %v1110 = vld [vmem:[#allocation2 + $0xb0] sm:$0xff]
          %v1111 = vld [vmem:[#allocation2 + $0xb8] sm:$0xff]
          %v1112 = vld [vmem:[#allocation2 + $0xc0] sm:$0xff]
          %v1113 = vld [vmem:[#allocation2 + $0xc8] sm:$0xff]
          %v1114 = vld [vmem:[#allocation2 + $0xd0] sm:$0xff]
          %v1115 = vld [vmem:[#allocation2 + $0xd8] sm:$0xff]
          %v1116 = vld [vmem:[#allocation2 + $0xe0] sm:$0xff]
          %v1117 = vld [vmem:[#allocation2 + $0xe8] sm:$0xff]
          %v1118 = vld [vmem:[#allocation2 + $0xf0] sm:$0xff]
          %v1119 = vld [vmem:[#allocation2 + $0xf8] sm:$0xff]
          %v1120 = vpack.c.bf16 %v1089, %v1088
          %v1121 = vpack.c.bf16 %v1091, %v1090
          %v1122 = vpack.c.bf16 %v1093, %v1092
          %v1123 = vpack.c.bf16 %v1095, %v1094
          %v1124 = vpack.c.bf16 %v1097, %v1096
          %v1125 = vpack.c.bf16 %v1099, %v1098
          %v1126 = vpack.c.bf16 %v1101, %v1100
          %v1127 = vpack.c.bf16 %v1103, %v1102
          %v1128 = vpack.c.bf16 %v1105, %v1104
          %v1129 = vpack.c.bf16 %v1107, %v1106
          %v1130 = vpack.c.bf16 %v1109, %v1108
          %v1131 = vpack.c.bf16 %v1111, %v1110
          %v1132 = vpack.c.bf16 %v1113, %v1112
          %v1133 = vpack.c.bf16 %v1115, %v1114
          %v1134 = vpack.c.bf16 %v1117, %v1116
          %v1135 = vpack.c.bf16 %v1119, %v1118
          %v1136 = vld [vmem:[%s2] sm:$0xf]
          %v1137 = vld [vmem:[%s2 + $0x4] sm:$0xf]
          %v1138 = vld [vmem:[%s2 + $0x8] sm:$0xf]
          %v1139 = vld [vmem:[%s2 + $0xc] sm:$0xf]
          %v1140 = vld [vmem:[%s2 + $0x10] sm:$0xf]
          %v1141 = vld [vmem:[%s2 + $0x14] sm:$0xf]
          %v1142 = vld [vmem:[%s2 + $0x18] sm:$0xf]
          %v1143 = vld [vmem:[%s2 + $0x1c] sm:$0xf]
          %v1144 = vld [vmem:[%s2 + $0x20] sm:$0xf]
          %v1145 = vld [vmem:[%s2 + $0x24] sm:$0xf]
          %v1146 = vld [vmem:[%s2 + $0x28] sm:$0xf]
          %v1147 = vld [vmem:[%s2 + $0x2c] sm:$0xf]
          %v1148 = vld [vmem:[%s2 + $0x30] sm:$0xf]
          %v1149 = vld [vmem:[%s2 + $0x34] sm:$0xf]
          %v1150 = vld [vmem:[%s2 + $0x38] sm:$0xf]
          %v1151 = vld [vmem:[%s2 + $0x3c] sm:$0xf]
          %v1152 = vld [vmem:[%s3] sm:$0x1]
          %v1154 = vperm.slane %v1152, 0
          %v1172 = vunpack.c.l.b16 %v1136
          %v1173 = vunpack.c.l.b16 %v1137
          %v1174 = vunpack.c.l.b16 %v1138
          %v1175 = vunpack.c.l.b16 %v1139
          %v1176 = vunpack.c.l.b16 %v1140
          %v1177 = vunpack.c.l.b16 %v1141
          %v1178 = vunpack.c.l.b16 %v1142
          %v1179 = vunpack.c.l.b16 %v1143
          %v1180 = vunpack.c.l.b16 %v1144
          %v1181 = vunpack.c.l.b16 %v1145
          %v1182 = vunpack.c.l.b16 %v1146
          %v1183 = vunpack.c.l.b16 %v1147
          %v1184 = vunpack.c.l.b16 %v1148
          %v1185 = vunpack.c.l.b16 %v1149
          %v1186 = vunpack.c.l.b16 %v1150
          %v1187 = vunpack.c.l.b16 %v1151
          %v1188 = vpack.c.b16 %v1173, %v1172
          %v1189 = vpack.c.b16 %v1175, %v1174
          %v1190 = vpack.c.b16 %v1177, %v1176
          %v1191 = vpack.c.b16 %v1179, %v1178
          %v1192 = vpack.c.b16 %v1181, %v1180
          %v1193 = vpack.c.b16 %v1183, %v1182
          %v1194 = vpack.c.b16 %v1185, %v1184
          %v1195 = vpack.c.b16 %v1187, %v1186
          %1204 = vmatpush.bf16.msra.mxu0 %v1195
          %1205 = vmatpush.bf16.msra.mxu0 %v1194
          %1206 = vmatpush.bf16.msra.mxu0 %v1193
          %1207 = vmatpush.bf16.msra.mxu0 %v1192
          %1208 = vmatpush.bf16.msra.mxu0 %v1191
          %1209 = vmatpush.bf16.msra.mxu0 %v1190
          %1210 = vmatpush.bf16.msra.mxu0 %v1189
          %1211 = vmatpush.bf16.msra.mxu0 %v1188
          %1212 = vmatmul.bf16.gmra.mxu0 %v1120
          %v1213 = vpop.f32.mrf.mxu0
          %v1214 = vadd.f32 %v1154, %v1213
          %v1215 = vpop.f32.mrf.mxu0
          %v1216 = vadd.f32 %v1154, %v1215
          %1217 = vmatmul.bf16.gmra.mxu0 %v1121
          %v1218 = vpop.f32.mrf.mxu0
          %v1219 = vadd.f32 %v1154, %v1218
          %v1220 = vpop.f32.mrf.mxu0
          %v1221 = vadd.f32 %v1154, %v1220
          %1222 = vmatmul.bf16.gmra.mxu0 %v1122
          %v1223 = vpop.f32.mrf.mxu0
          %v1224 = vadd.f32 %v1154, %v1223
          %v1225 = vpop.f32.mrf.mxu0
          %v1226 = vadd.f32 %v1154, %v1225
          %1227 = vmatmul.bf16.gmra.mxu0 %v1123
          %v1228 = vpop.f32.mrf.mxu0
          %v1229 = vadd.f32 %v1154, %v1228
          %v1230 = vpop.f32.mrf.mxu0
          %v1231 = vadd.f32 %v1154, %v1230
          %1232 = vmatmul.bf16.gmra.mxu0 %v1124
          %v1233 = vpop.f32.mrf.mxu0
          %v1234 = vadd.f32 %v1154, %v1233
          %v1235 = vpop.f32.mrf.mxu0
          %v1236 = vadd.f32 %v1154, %v1235
          %1237 = vmatmul.bf16.gmra.mxu0 %v1125
          %v1238 = vpop.f32.mrf.mxu0
          %v1239 = vadd.f32 %v1154, %v1238
          %v1240 = vpop.f32.mrf.mxu0
          %v1241 = vadd.f32 %v1154, %v1240
          %1242 = vmatmul.bf16.gmra.mxu0 %v1126
          %v1243 = vpop.f32.mrf.mxu0
          %v1244 = vadd.f32 %v1154, %v1243
          %v1245 = vpop.f32.mrf.mxu0
          %v1246 = vadd.f32 %v1154, %v1245
          %1247 = vmatmul.bf16.gmra.mxu0 %v1127
          %v1248 = vpop.f32.mrf.mxu0
          %v1249 = vadd.f32 %v1154, %v1248
          %v1250 = vpop.f32.mrf.mxu0
          %v1251 = vadd.f32 %v1154, %v1250
          %1252 = vmatmul.bf16.gmra.mxu0 %v1128
          %v1253 = vpop.f32.mrf.mxu0
          %v1254 = vadd.f32 %v1154, %v1253
          %v1255 = vpop.f32.mrf.mxu0
          %v1256 = vadd.f32 %v1154, %v1255
          %1257 = vmatmul.bf16.gmra.mxu0 %v1129
          %v1258 = vpop.f32.mrf.mxu0
          %v1259 = vadd.f32 %v1154, %v1258
          %v1260 = vpop.f32.mrf.mxu0
          %v1261 = vadd.f32 %v1154, %v1260
          %1262 = vmatmul.bf16.gmra.mxu0 %v1130
          %v1263 = vpop.f32.mrf.mxu0
          %v1264 = vadd.f32 %v1154, %v1263
          %v1265 = vpop.f32.mrf.mxu0
          %v1266 = vadd.f32 %v1154, %v1265
          %1267 = vmatmul.bf16.gmra.mxu0 %v1131
          %v1268 = vpop.f32.mrf.mxu0
          %v1269 = vadd.f32 %v1154, %v1268
          %v1270 = vpop.f32.mrf.mxu0
          %v1271 = vadd.f32 %v1154, %v1270
          %1272 = vmatmul.bf16.gmra.mxu0 %v1132
          %v1273 = vpop.f32.mrf.mxu0
          %v1274 = vadd.f32 %v1154, %v1273
          %v1275 = vpop.f32.mrf.mxu0
          %v1276 = vadd.f32 %v1154, %v1275
          %1277 = vmatmul.bf16.gmra.mxu0 %v1133
          %v1278 = vpop.f32.mrf.mxu0
          %v1279 = vadd.f32 %v1154, %v1278
          %v1280 = vpop.f32.mrf.mxu0
          %v1281 = vadd.f32 %v1154, %v1280
          %1282 = vmatmul.bf16.gmra.mxu0 %v1134
          %v1283 = vpop.f32.mrf.mxu0
          %v1284 = vadd.f32 %v1154, %v1283
          %v1285 = vpop.f32.mrf.mxu0
          %v1286 = vadd.f32 %v1154, %v1285
          %1287 = vmatmul.bf16.gmra.mxu0 %v1135
          %v1288 = vpop.f32.mrf.mxu0
          %v1289 = vadd.f32 %v1154, %v1288
          %v1290 = vpop.f32.mrf.mxu0
          %v1291 = vadd.f32 %v1154, %v1290
          %1292 = vdwg.mxu0
          %v1293 = vmax.f32 %v1214, 0.0
          %v1294 = vmax.f32 %v1216, 0.0
          %v1295 = vmax.f32 %v1219, 0.0
          %v1296 = vmax.f32 %v1221, 0.0
          %v1297 = vmax.f32 %v1224, 0.0
          %v1298 = vmax.f32 %v1226, 0.0
          %v1299 = vmax.f32 %v1229, 0.0
          %v1300 = vmax.f32 %v1231, 0.0
          %v1301 = vmax.f32 %v1234, 0.0
          %v1302 = vmax.f32 %v1236, 0.0
          %v1303 = vmax.f32 %v1239, 0.0
          %v1304 = vmax.f32 %v1241, 0.0
          %v1305 = vmax.f32 %v1244, 0.0
          %v1306 = vmax.f32 %v1246, 0.0
          %v1307 = vmax.f32 %v1249, 0.0
          %v1308 = vmax.f32 %v1251, 0.0
          %v1309 = vmax.f32 %v1254, 0.0
          %v1310 = vmax.f32 %v1256, 0.0
          %v1311 = vmax.f32 %v1259, 0.0
          %v1312 = vmax.f32 %v1261, 0.0
          %v1313 = vmax.f32 %v1264, 0.0
          %v1314 = vmax.f32 %v1266, 0.0
          %v1315 = vmax.f32 %v1269, 0.0
          %v1316 = vmax.f32 %v1271, 0.0
          %v1317 = vmax.f32 %v1274, 0.0
          %v1318 = vmax.f32 %v1276, 0.0
          %v1319 = vmax.f32 %v1279, 0.0
          %v1320 = vmax.f32 %v1281, 0.0
          %v1321 = vmax.f32 %v1284, 0.0
          %v1322 = vmax.f32 %v1286, 0.0
          %v1323 = vmax.f32 %v1289, 0.0
          %v1324 = vmax.f32 %v1291, 0.0
          %v1325 = vpack.c.bf16 %v1294, %v1293
          %v1326 = vpack.c.bf16 %v1296, %v1295
          %v1327 = vpack.c.bf16 %v1298, %v1297
          %v1328 = vpack.c.bf16 %v1300, %v1299
          %v1329 = vpack.c.bf16 %v1302, %v1301
          %v1330 = vpack.c.bf16 %v1304, %v1303
          %v1331 = vpack.c.bf16 %v1306, %v1305
          %v1332 = vpack.c.bf16 %v1308, %v1307
          %v1333 = vpack.c.bf16 %v1310, %v1309
          %v1334 = vpack.c.bf16 %v1312, %v1311
          %v1335 = vpack.c.bf16 %v1314, %v1313
          %v1336 = vpack.c.bf16 %v1316, %v1315
          %v1337 = vpack.c.bf16 %v1318, %v1317
          %v1338 = vpack.c.bf16 %v1320, %v1319
          %v1339 = vpack.c.bf16 %v1322, %v1321
          %v1340 = vpack.c.bf16 %v1324, %v1323
          %v1341 = vld [vmem:[%s4] sm:$0xf]
          %v1342 = vld [vmem:[%s4 + $0x4] sm:$0xf]
          %v1343 = vld [vmem:[%s4 + $0x8] sm:$0xf]
          %v1344 = vld [vmem:[%s4 + $0xc] sm:$0xf]
          %v1345 = vld [vmem:[%s4 + $0x10] sm:$0xf]
          %v1346 = vld [vmem:[%s4 + $0x14] sm:$0xf]
          %v1347 = vld [vmem:[%s4 + $0x18] sm:$0xf]
          %v1348 = vld [vmem:[%s4 + $0x1c] sm:$0xf]
          %v1349 = vld [vmem:[%s4 + $0x20] sm:$0xf]
          %v1350 = vld [vmem:[%s4 + $0x24] sm:$0xf]
          %v1351 = vld [vmem:[%s4 + $0x28] sm:$0xf]
          %v1352 = vld [vmem:[%s4 + $0x2c] sm:$0xf]
          %v1353 = vld [vmem:[%s4 + $0x30] sm:$0xf]
          %v1354 = vld [vmem:[%s4 + $0x34] sm:$0xf]
          %v1355 = vld [vmem:[%s4 + $0x38] sm:$0xf]
          %v1356 = vld [vmem:[%s4 + $0x3c] sm:$0xf]
          %v1357 = vld [vmem:[%s5] sm:$0x1]
          %v1359 = vperm.slane %v1357, 0
          %v1377 = vunpack.c.l.b16 %v1341
          %v1378 = vunpack.c.l.b16 %v1342
          %v1379 = vunpack.c.l.b16 %v1343
          %v1380 = vunpack.c.l.b16 %v1344
          %v1381 = vunpack.c.l.b16 %v1345
          %v1382 = vunpack.c.l.b16 %v1346
          %v1383 = vunpack.c.l.b16 %v1347
          %v1384 = vunpack.c.l.b16 %v1348
          %v1385 = vunpack.c.l.b16 %v1349
          %v1386 = vunpack.c.l.b16 %v1350
          %v1387 = vunpack.c.l.b16 %v1351
          %v1388 = vunpack.c.l.b16 %v1352
          %v1389 = vunpack.c.l.b16 %v1353
          %v1390 = vunpack.c.l.b16 %v1354
          %v1391 = vunpack.c.l.b16 %v1355
          %v1392 = vunpack.c.l.b16 %v1356
          %v1393 = vpack.c.b16 %v1378, %v1377
          %v1394 = vpack.c.b16 %v1380, %v1379
          %v1395 = vpack.c.b16 %v1382, %v1381
          %v1396 = vpack.c.b16 %v1384, %v1383
          %v1397 = vpack.c.b16 %v1386, %v1385
          %v1398 = vpack.c.b16 %v1388, %v1387
          %v1399 = vpack.c.b16 %v1390, %v1389
          %v1400 = vpack.c.b16 %v1392, %v1391
          %1409 = vmatpush.bf16.msra.mxu0 %v1400
          %1410 = vmatpush.bf16.msra.mxu0 %v1399
          %1411 = vmatpush.bf16.msra.mxu0 %v1398
          %1412 = vmatpush.bf16.msra.mxu0 %v1397
          %1413 = vmatpush.bf16.msra.mxu0 %v1396
          %1414 = vmatpush.bf16.msra.mxu0 %v1395
          %1415 = vmatpush.bf16.msra.mxu0 %v1394
          %1416 = vmatpush.bf16.msra.mxu0 %v1393
          %1417 = vmatmul.bf16.gmra.mxu0 %v1325
          %v1418 = vpop.f32.mrf.mxu0
          %v1419 = vadd.f32 %v1359, %v1418
          %v1420 = vpop.f32.mrf.mxu0
          %v1421 = vadd.f32 %v1359, %v1420
          %1422 = vmatmul.bf16.gmra.mxu0 %v1326
          %v1423 = vpop.f32.mrf.mxu0
          %v1424 = vadd.f32 %v1359, %v1423
          %v1425 = vpop.f32.mrf.mxu0
          %v1426 = vadd.f32 %v1359, %v1425
          %1427 = vmatmul.bf16.gmra.mxu0 %v1327
          %v1428 = vpop.f32.mrf.mxu0
          %v1429 = vadd.f32 %v1359, %v1428
          %v1430 = vpop.f32.mrf.mxu0
          %v1431 = vadd.f32 %v1359, %v1430
          %1432 = vmatmul.bf16.gmra.mxu0 %v1328
          %v1433 = vpop.f32.mrf.mxu0
          %v1434 = vadd.f32 %v1359, %v1433
          %v1435 = vpop.f32.mrf.mxu0
          %v1436 = vadd.f32 %v1359, %v1435
          %1437 = vmatmul.bf16.gmra.mxu0 %v1329
          %v1438 = vpop.f32.mrf.mxu0
          %v1439 = vadd.f32 %v1359, %v1438
          %v1440 = vpop.f32.mrf.mxu0
          %v1441 = vadd.f32 %v1359, %v1440
          %1442 = vmatmul.bf16.gmra.mxu0 %v1330
          %v1443 = vpop.f32.mrf.mxu0
          %v1444 = vadd.f32 %v1359, %v1443
          %v1445 = vpop.f32.mrf.mxu0
          %v1446 = vadd.f32 %v1359, %v1445
          %1447 = vmatmul.bf16.gmra.mxu0 %v1331
          %v1448 = vpop.f32.mrf.mxu0
          %v1449 = vadd.f32 %v1359, %v1448
          %v1450 = vpop.f32.mrf.mxu0
          %v1451 = vadd.f32 %v1359, %v1450
          %1452 = vmatmul.bf16.gmra.mxu0 %v1332
          %v1453 = vpop.f32.mrf.mxu0
          %v1454 = vadd.f32 %v1359, %v1453
          %v1455 = vpop.f32.mrf.mxu0
          %v1456 = vadd.f32 %v1359, %v1455
          %1457 = vmatmul.bf16.gmra.mxu0 %v1333
          %v1458 = vpop.f32.mrf.mxu0
          %v1459 = vadd.f32 %v1359, %v1458
          %v1460 = vpop.f32.mrf.mxu0
          %v1461 = vadd.f32 %v1359, %v1460
          %1462 = vmatmul.bf16.gmra.mxu0 %v1334
          %v1463 = vpop.f32.mrf.mxu0
          %v1464 = vadd.f32 %v1359, %v1463
          %v1465 = vpop.f32.mrf.mxu0
          %v1466 = vadd.f32 %v1359, %v1465
          %1467 = vmatmul.bf16.gmra.mxu0 %v1335
          %v1468 = vpop.f32.mrf.mxu0
          %v1469 = vadd.f32 %v1359, %v1468
          %v1470 = vpop.f32.mrf.mxu0
          %v1471 = vadd.f32 %v1359, %v1470
          %1472 = vmatmul.bf16.gmra.mxu0 %v1336
          %v1473 = vpop.f32.mrf.mxu0
          %v1474 = vadd.f32 %v1359, %v1473
          %v1475 = vpop.f32.mrf.mxu0
          %v1476 = vadd.f32 %v1359, %v1475
          %1477 = vmatmul.bf16.gmra.mxu0 %v1337
          %v1478 = vpop.f32.mrf.mxu0
          %v1479 = vadd.f32 %v1359, %v1478
          %v1480 = vpop.f32.mrf.mxu0
          %v1481 = vadd.f32 %v1359, %v1480
          %1482 = vmatmul.bf16.gmra.mxu0 %v1338
          %v1483 = vpop.f32.mrf.mxu0
          %v1484 = vadd.f32 %v1359, %v1483
          %v1485 = vpop.f32.mrf.mxu0
          %v1486 = vadd.f32 %v1359, %v1485
          %1487 = vmatmul.bf16.gmra.mxu0 %v1339
          %v1488 = vpop.f32.mrf.mxu0
          %v1489 = vadd.f32 %v1359, %v1488
          %v1490 = vpop.f32.mrf.mxu0
          %v1491 = vadd.f32 %v1359, %v1490
          %1492 = vmatmul.bf16.gmra.mxu0 %v1340
          %v1493 = vpop.f32.mrf.mxu0
          %v1494 = vadd.f32 %v1359, %v1493
          %v1495 = vpop.f32.mrf.mxu0
          %v1496 = vadd.f32 %v1359, %v1495
          %1497 = vdwg.mxu0
          %1498 = vst [vmem:[%s452] sm:$0xff] %v1419
          %1499 = vst [vmem:[%s452 + $0x8] sm:$0xff] %v1421
          %1500 = vst [vmem:[%s452 + $0x10] sm:$0xff] %v1424
          %1501 = vst [vmem:[%s452 + $0x18] sm:$0xff] %v1426
          %1502 = vst [vmem:[%s452 + $0x20] sm:$0xff] %v1429
          %1503 = vst [vmem:[%s452 + $0x28] sm:$0xff] %v1431
          %1504 = vst [vmem:[%s452 + $0x30] sm:$0xff] %v1434
          %1505 = vst [vmem:[%s452 + $0x38] sm:$0xff] %v1436
          %1506 = vst [vmem:[%s452 + $0x40] sm:$0xff] %v1439
          %1507 = vst [vmem:[%s452 + $0x48] sm:$0xff] %v1441
          %1508 = vst [vmem:[%s452 + $0x50] sm:$0xff] %v1444
          %1509 = vst [vmem:[%s452 + $0x58] sm:$0xff] %v1446
          %1510 = vst [vmem:[%s452 + $0x60] sm:$0xff] %v1449
          %1511 = vst [vmem:[%s452 + $0x68] sm:$0xff] %v1451
          %1512 = vst [vmem:[%s452 + $0x70] sm:$0xff] %v1454
          %1513 = vst [vmem:[%s452 + $0x78] sm:$0xff] %v1456
          %1514 = vst [vmem:[%s452 + $0x80] sm:$0xff] %v1459
          %1515 = vst [vmem:[%s452 + $0x88] sm:$0xff] %v1461
          %1516 = vst [vmem:[%s452 + $0x90] sm:$0xff] %v1464
          %1517 = vst [vmem:[%s452 + $0x98] sm:$0xff] %v1466
          %1518 = vst [vmem:[%s452 + $0xa0] sm:$0xff] %v1469
          %1519 = vst [vmem:[%s452 + $0xa8] sm:$0xff] %v1471
          %1520 = vst [vmem:[%s452 + $0xb0] sm:$0xff] %v1474
          %1521 = vst [vmem:[%s452 + $0xb8] sm:$0xff] %v1476
          %1522 = vst [vmem:[%s452 + $0xc0] sm:$0xff] %v1479
          %1523 = vst [vmem:[%s452 + $0xc8] sm:$0xff] %v1481
          %1524 = vst [vmem:[%s452 + $0xd0] sm:$0xff] %v1484
          %1525 = vst [vmem:[%s452 + $0xd8] sm:$0xff] %v1486
          %1526 = vst [vmem:[%s452 + $0xe0] sm:$0xff] %v1489
          %1527 = vst [vmem:[%s452 + $0xe8] sm:$0xff] %v1491
          %1528 = vst [vmem:[%s452 + $0xf0] sm:$0xff] %v1494
          %1529 = vst [vmem:[%s452 + $0xf8] sm:$0xff] %v1496
        $region90: #{gnn_forward.3} parent=77 // pred_fallthru
          _
        %s1530 = smul.u32 32, %s21
        %p1531 = scmp.lt.s32.totalorder %s1530, 63
        %s1532 = scalar_select %p1531, %s1530, 63
        %s1533 = smul.addr %s1532, 8
        %s1534 = scalar_lea.vmem %s6, %s1533
        // Predicated region
        $region91: #{gnn_forward.3} parent=77 // pred_check
          %p1535 = pneg %p185
        $region92: #{gnn_forward.3} parent=77 // pred_check_branch
          %1537 = sbr.rel (%p1535) target = $region94
        $region93: #{gnn_forward.3} parent=77 // pred_region
          %s1538 = smul.u32 32, %s21
        $region94: #{gnn_forward.3} parent=77 // pred_fallthru
          _
      $region78: #{gnn_forward.3} parent=5 // pred_fallthru
        _
      %p1539 = scmp.le.s32.totalorder 2, %s12
      // Predicated region
      $region95: #{gnn_forward.3} parent=5 // pred_check
        %p1540 = pneg %p1539
      $region96: #{gnn_forward.3} parent=5 // pred_check_branch
        %1542 = sbr.rel (%p1540) target = $region98
      $region97: #{gnn_forward.3} parent=5 // pred_region
        %s1543 = ssub.s32 %s12, 2
        // Predicated region
        $region99: #{gnn_forward.3} parent=97 // pred_check
          %p1544 = pneg %p191
        $region100: #{gnn_forward.3} parent=97 // pred_check_branch
          %1546 = sbr.rel (%p1544) target = $region102
        $region101: #{gnn_forward.3} parent=97 // pred_region
          %s1547 = smul.u32 32, %s23
          %p1548 = scmp.lt.s32.totalorder %s1547, 63
          %s1549 = scalar_select %p1548, %s1547, 63
          %s1550 = smul.addr %s1549, 8
          %s1551 = scalar_lea.vmem %s6, %s1550
        $region102: #{gnn_forward.3} parent=97 // pred_fallthru
          _
      $region98: #{gnn_forward.3} parent=5 // pred_fallthru
        _
    $region6: #{gnn_forward.3} parent=1 // loop_footer
      %s16 = sadd.s32 1, %s12
    $region7: #{gnn_forward.3} parent=1 // loop_footer_branch
      %11 = sbr.rel target = $region3
    $region8: #{gnn_forward.3} parent=1 // loop_exit
      _

</llo_original>
